<compile_context>
chip_gen: v7x
topology: tpu7x:2x2x1
jax: 0.10.0
libtpu: 0.0.40
codegen_flags: <defaults>
</compile_context>

<pallas_src>
import functools

import jax
import jax.numpy as jnp
from jax.experimental import pallas as pl
from jax.experimental.pallas import tpu as pltpu

INPUT_SIZE = int(768 * 0.9)   # 691
HIDDEN = 768
N_CLASSES = 4

K_PAD = 768       # padded input-feature dim (691 -> 768), lane aligned
OUT_PAD = 128     # padded class dim (4 -> 128), lane-dense output stores


def _round_up(x, m):
    return (x + m - 1) // m * m


def _mlp_kernel(z_ref, w1_ref, b1_ref, w2_ref, b2_ref, w3_ref, b3_ref, o_ref):
    # Layer 1: Linear(768pad -> 768) + ReLU.  z is already in the compute dtype
    # (bf16 by default), accumulation is f32 on the MXU.
    h1 = jnp.dot(z_ref[...], w1_ref[...], preferred_element_type=jnp.float32)
    h1 = jnp.maximum(h1 + b1_ref[...], 0.0)
    # Layer 2: Linear(768 -> 768) + ReLU
    h2 = jnp.dot(h1.astype(w2_ref.dtype), w2_ref[...],
                 preferred_element_type=jnp.float32)
    h2 = jnp.maximum(h2 + b2_ref[...], 0.0)
    # Layer 3: Linear(768 -> 128pad), no activation (cols 4..127 are zero)
    out = jnp.dot(h2.astype(w3_ref.dtype), w3_ref[...],
                  preferred_element_type=jnp.float32)
    o_ref[...] = (out + b3_ref[...]).astype(o_ref.dtype)


def _pad_params(params, weight_dtype):
    """Pad ragged dims (691->768 on K, 4->128 on classes). Biases stay f32."""
    w1 = jnp.zeros((K_PAD, HIDDEN), weight_dtype)
    w1 = w1.at[:INPUT_SIZE, :].set(params["w1"].astype(weight_dtype))
    w2 = params["w2"].astype(weight_dtype)
    w3 = jnp.zeros((HIDDEN, OUT_PAD), weight_dtype)
    w3 = w3.at[:, :N_CLASSES].set(params["w3"].astype(weight_dtype))
    b1 = params["b1"].astype(jnp.float32)
    b2 = params["b2"].astype(jnp.float32)
    b3 = jnp.zeros((1, OUT_PAD), jnp.float32)
    b3 = b3.at[:, :N_CLASSES].set(params["b3"].astype(jnp.float32))
    return w1, b1, w2, b2, w3, b3


@functools.partial(jax.jit, static_argnames=("batch_tile", "weight_dtype"))
def discriminator_forward(z, params, *, batch_tile=512,
                          weight_dtype=jnp.bfloat16):
    """3-layer MLP discriminator as one Pallas kernel.

    z: (B, 691) float32
    params: w1 (691,768), b1 (1,768), w2 (768,768), b2 (1,768),
            w3 (768,4), b3 (1,4)   (weights stored as PyTorch W.T, i.e. (in,out))
    weight_dtype: jnp.bfloat16 (default, MXU-native; casts BOTH operands of each
                  matmul to bf16 with f32 accumulation) or jnp.float32 (exact).
    """
    B, F = z.shape
    assert F == INPUT_SIZE
    assert batch_tile % 8 == 0 and batch_tile > 0

    # Batch padded only to a multiple of 8 (cheap, fused with the bf16 cast).
    B_pad = _round_up(B, 8)
    if B_pad >= 16:
        # Cap tm so the grid has >= 2 parallel steps (both v7x TensorCores work).
        tm = min(batch_tile, _round_up(pl.cdiv(B_pad, 2), 8))
    else:
        tm = B_pad
    grid = (pl.cdiv(B_pad, tm),)   # ragged last block handled by Pallas masking

    # One fused pad+cast pass over z: rows -> multiple of 8, K 691 -> 768 zeros,
    # streamed in the compute dtype so the per-step z DMA is halved for bf16.
    z_p = jnp.zeros((B_pad, K_PAD), weight_dtype)
    z_p = z_p.at[:B, :INPUT_SIZE].set(z.astype(weight_dtype))

    w1, b1, w2, b2, w3, b3 = _pad_params(params, weight_dtype)

    in_specs = [
        pl.BlockSpec((tm, K_PAD), lambda i: (i, 0)),        # z tile (pipelined)
        pl.BlockSpec((K_PAD, HIDDEN), lambda i: (0, 0)),    # w1 (grid-invariant)
        pl.BlockSpec((1, HIDDEN), lambda i: (0, 0)),        # b1
        pl.BlockSpec((HIDDEN, HIDDEN), lambda i: (0, 0)),   # w2
        pl.BlockSpec((1, HIDDEN), lambda i: (0, 0)),        # b2
        pl.BlockSpec((HIDDEN, OUT_PAD), lambda i: (0, 0)),  # w3 (classes 4->128)
        pl.BlockSpec((1, OUT_PAD), lambda i: (0, 0)),       # b3
    ]
    out_specs = pl.BlockSpec((tm, OUT_PAD), lambda i: (i, 0))

    out = pl.pallas_call(
        _mlp_kernel,
        out_shape=jax.ShapeDtypeStruct((B_pad, OUT_PAD), jnp.float32),
        grid=grid,
        in_specs=in_specs,
        out_specs=out_specs,
        compiler_params=pltpu.CompilerParams(
            dimension_semantics=("parallel",),
            # Comfortably fits tm<=1024 bf16/f32 on all gens, under v7x's 64 MiB.
            vmem_limit_bytes=48 * 1024 * 1024,
        ),
    )(z_p, w1, b1, w2, b2, w3, b3)

    return out[:B, :N_CLASSES]


def init_params(key):
    """Deterministic synthetic parameter init (shapes match the PyTorch module)."""
    k1, k2, k3, k4, k5, k6 = jax.random.split(key, 6)
    scale1 = 1.0 / jnp.sqrt(INPUT_SIZE)
    scale2 = 1.0 / jnp.sqrt(HIDDEN)
    return {
        # stored as (in, out) == W_pytorch.T
        "w1": jax.random.uniform(k1, (INPUT_SIZE, HIDDEN), jnp.float32, -scale1, scale1),
        "b1": jax.random.uniform(k2, (1, HIDDEN), jnp.float32, -scale1, scale1),
        "w2": jax.random.uniform(k3, (HIDDEN, HIDDEN), jnp.float32, -scale2, scale2),
        "b2": jax.random.uniform(k4, (1, HIDDEN), jnp.float32, -scale2, scale2),
        "w3": jax.random.uniform(k5, (HIDDEN, N_CLASSES), jnp.float32, -scale2, scale2),
        "b3": jax.random.uniform(k6, (1, N_CLASSES), jnp.float32, -scale2, scale2),
    }


def reference_forward(z, p):
    h1 = jnp.maximum(z @ p["w1"] + p["b1"], 0.0)
    h2 = jnp.maximum(h1 @ p["w2"] + p["b2"], 0.0)
    return h2 @ p["w3"] + p["b3"]


if __name__ == "__main__":
    key = jax.random.PRNGKey(0)
    k_param, k_z1, k_z2, k_z3, k_z4 = jax.random.split(key, 5)
    params = init_params(k_param)

    # 1) Small batch, default bf16 fast path (single grid step).
    B = 8
    z = jax.random.normal(k_z1, (B, INPUT_SIZE), dtype=jnp.float32)
    out = jax.block_until_ready(discriminator_forward(z, params))
    ref = reference_forward(z, params)
    assert out.shape == (B, N_CLASSES), out.shape
    assert jnp.allclose(out, ref, atol=5e-2, rtol=5e-2), (
        float(jnp.max(jnp.abs(out - ref))))

    # 2) Multi-step grid, exact f32 path (B=44 padded to 48, tile 16 -> 3 steps).
    B2 = 44
    z2 = jax.random.normal(k_z2, (B2, INPUT_SIZE), dtype=jnp.float32)
    out2 = jax.block_until_ready(
        discriminator_forward(z2, params, batch_tile=16, weight_dtype=jnp.float32))
    ref2 = reference_forward(z2, params)
    assert out2.shape == (B2, N_CLASSES), out2.shape
    assert jnp.allclose(out2, ref2, atol=1e-4, rtol=1e-4), (
        float(jnp.max(jnp.abs(out2 - ref2))))

    # 3) Ragged final block (B=20 -> 24 rows, tile 16 -> grid 2, last block OOB
    #    rows masked on store), exact f32 path.
    B3 = 20
    z3 = jax.random.normal(k_z3, (B3, INPUT_SIZE), dtype=jnp.float32)
    out3 = jax.block_until_ready(
        discriminator_forward(z3, params, batch_tile=16, weight_dtype=jnp.float32))
    ref3 = reference_forward(z3, params)
    assert out3.shape == (B3, N_CLASSES), out3.shape
    assert jnp.allclose(out3, ref3, atol=1e-4, rtol=1e-4), (
        float(jnp.max(jnp.abs(out3 - ref3))))

    # 4) Larger batch, bf16 default, multi-step grid with ragged last block.
    B4 = 300
    z4 = jax.random.normal(k_z4, (B4, INPUT_SIZE), dtype=jnp.float32)
    out4 = jax.block_until_ready(
        discriminator_forward(z4, params, batch_tile=128))
    ref4 = reference_forward(z4, params)
    assert out4.shape == (B4, N_CLASSES), out4.shape
    assert jnp.allclose(out4, ref4, atol=5e-2, rtol=5e-2), (
        float(jnp.max(jnp.abs(out4 - ref4))))

    print("KERNEL_OK")
</pallas_src>

<mosaic_0001>
module attributes {stable_mosaic.version = 11 : i64} {
  func.func @_mlp_kernel(%arg0: i32, %arg1: memref<8x768xbf16, #tpu.memory_space<vmem>>, %arg2: memref<768x768xbf16, #tpu.memory_space<vmem>>, %arg3: memref<1x768xf32, #tpu.memory_space<vmem>>, %arg4: memref<768x768xbf16, #tpu.memory_space<vmem>>, %arg5: memref<1x768xf32, #tpu.memory_space<vmem>>, %arg6: memref<768x128xbf16, #tpu.memory_space<vmem>>, %arg7: memref<1x128xf32, #tpu.memory_space<vmem>>, %arg8: memref<8x128xf32, #tpu.memory_space<vmem>>) attributes {dimension_semantics = [#tpu.dimension_semantics<parallel>], iteration_bounds = array<i64: 1>, scalar_prefetch = 0 : i64, scratch_operands = 0 : i64, tpu.core_type = #tpu.core_type<tc>, window_params = [{transform_indices = @transform_0, window_bounds = array<i64: 8, 768>}, {pipeline_mode = #tpu.pipeline_mode<synchronous>, transform_indices = @transform_1, window_bounds = array<i64: 768, 768>}, {pipeline_mode = #tpu.pipeline_mode<synchronous>, transform_indices = @transform_2, window_bounds = array<i64: 1, 768>}, {pipeline_mode = #tpu.pipeline_mode<synchronous>, transform_indices = @transform_3, window_bounds = array<i64: 768, 768>}, {pipeline_mode = #tpu.pipeline_mode<synchronous>, transform_indices = @transform_4, window_bounds = array<i64: 1, 768>}, {pipeline_mode = #tpu.pipeline_mode<synchronous>, transform_indices = @transform_5, window_bounds = array<i64: 768, 128>}, {pipeline_mode = #tpu.pipeline_mode<synchronous>, transform_indices = @transform_6, window_bounds = array<i64: 1, 128>}, {transform_indices = @transform_7, window_bounds = array<i64: 8, 128>}]} {
    %c0 = arith.constant 0 : index
    %c0_0 = arith.constant 0 : index
    %0 = vector.load %arg1[%c0, %c0_0] : memref<8x768xbf16, #tpu.memory_space<vmem>>, vector<8x768xbf16>
    %c0_1 = arith.constant 0 : index
    %c0_2 = arith.constant 0 : index
    %1 = vector.load %arg2[%c0_1, %c0_2] : memref<768x768xbf16, #tpu.memory_space<vmem>>, vector<768x768xbf16>
    %cst = arith.constant dense<0.000000e+00> : vector<8x768xf32>
    %2 = tpu.matmul %0, %1, %cst {dimension_numbers = #tpu.dot_dimension_numbers<[1], [0], [0], [1], [0, 0, 1, 1], [], []>} : vector<8x768xbf16>, vector<768x768xbf16>, vector<8x768xf32> -> vector<8x768xf32>
    %c0_3 = arith.constant 0 : index
    %c0_4 = arith.constant 0 : index
    %3 = vector.load %arg3[%c0_3, %c0_4] : memref<1x768xf32, #tpu.memory_space<vmem>>, vector<1x768xf32>
    %4 = vector.broadcast %3 : vector<1x768xf32> to vector<8x768xf32>
    %5 = arith.addf %2, %4 : vector<8x768xf32>
    %cst_5 = arith.constant 0.000000e+00 : f32
    %6 = vector.broadcast %cst_5 : f32 to vector<8x768xf32>
    %7 = arith.maximumf %5, %6 : vector<8x768xf32>
    %8 = arith.truncf %7 : vector<8x768xf32> to vector<8x768xbf16>
    %c0_6 = arith.constant 0 : index
    %c0_7 = arith.constant 0 : index
    %9 = vector.load %arg4[%c0_6, %c0_7] : memref<768x768xbf16, #tpu.memory_space<vmem>>, vector<768x768xbf16>
    %cst_8 = arith.constant dense<0.000000e+00> : vector<8x768xf32>
    %10 = tpu.matmul %8, %9, %cst_8 {dimension_numbers = #tpu.dot_dimension_numbers<[1], [0], [0], [1], [0, 0, 1, 1], [], []>} : vector<8x768xbf16>, vector<768x768xbf16>, vector<8x768xf32> -> vector<8x768xf32>
    %c0_9 = arith.constant 0 : index
    %c0_10 = arith.constant 0 : index
    %11 = vector.load %arg5[%c0_9, %c0_10] : memref<1x768xf32, #tpu.memory_space<vmem>>, vector<1x768xf32>
    %12 = vector.broadcast %11 : vector<1x768xf32> to vector<8x768xf32>
    %13 = arith.addf %10, %12 : vector<8x768xf32>
    %cst_11 = arith.constant 0.000000e+00 : f32
    %14 = vector.broadcast %cst_11 : f32 to vector<8x768xf32>
    %15 = arith.maximumf %13, %14 : vector<8x768xf32>
    %16 = arith.truncf %15 : vector<8x768xf32> to vector<8x768xbf16>
    %c0_12 = arith.constant 0 : index
    %c0_13 = arith.constant 0 : index
    %17 = vector.load %arg6[%c0_12, %c0_13] : memref<768x128xbf16, #tpu.memory_space<vmem>>, vector<768x128xbf16>
    %cst_14 = arith.constant dense<0.000000e+00> : vector<8x128xf32>
    %18 = tpu.matmul %16, %17, %cst_14 {dimension_numbers = #tpu.dot_dimension_numbers<[1], [0], [0], [1], [0, 0, 1, 1], [], []>} : vector<8x768xbf16>, vector<768x128xbf16>, vector<8x128xf32> -> vector<8x128xf32>
    %c0_15 = arith.constant 0 : index
    %c0_16 = arith.constant 0 : index
    %19 = vector.load %arg7[%c0_15, %c0_16] : memref<1x128xf32, #tpu.memory_space<vmem>>, vector<1x128xf32>
    %20 = vector.broadcast %19 : vector<1x128xf32> to vector<8x128xf32>
    %21 = arith.addf %18, %20 : vector<8x128xf32>
    %c0_17 = arith.constant 0 : index
    %c0_18 = arith.constant 0 : index
    %22 = vector.load %arg8[%c0_17, %c0_18] : memref<8x128xf32, #tpu.memory_space<vmem>>, vector<8x128xf32>
    tpu.vector_store %arg8[%c0_17, %c0_18], %21 {strides = array<i32>} : memref<8x128xf32, #tpu.memory_space<vmem>>, vector<8x128xf32>,
    return
  }
  func.func @transform_0(%arg0: i32) -> (i32, i32) {
    %c0_i32 = arith.constant 0 : i32
    %c0_i32_0 = arith.constant 0 : i32
    return %arg0, %c0_i32 : i32, i32
  }
  func.func @transform_1(%arg0: i32) -> (i32, i32) {
    %c0_i32 = arith.constant 0 : i32
    %c0_i32_0 = arith.constant 0 : i32
    %c0_i32_1 = arith.constant 0 : i32
    return %c0_i32, %c0_i32_0 : i32, i32
  }
  func.func @transform_2(%arg0: i32) -> (i32, i32) {
    %c0_i32 = arith.constant 0 : i32
    %c0_i32_0 = arith.constant 0 : i32
    %c0_i32_1 = arith.constant 0 : i32
    return %c0_i32, %c0_i32_0 : i32, i32
  }
  func.func @transform_3(%arg0: i32) -> (i32, i32) {
    %c0_i32 = arith.constant 0 : i32
    %c0_i32_0 = arith.constant 0 : i32
    %c0_i32_1 = arith.constant 0 : i32
    return %c0_i32, %c0_i32_0 : i32, i32
  }
  func.func @transform_4(%arg0: i32) -> (i32, i32) {
    %c0_i32 = arith.constant 0 : i32
    %c0_i32_0 = arith.constant 0 : i32
    %c0_i32_1 = arith.constant 0 : i32
    return %c0_i32, %c0_i32_0 : i32, i32
  }
  func.func @transform_5(%arg0: i32) -> (i32, i32) {
    %c0_i32 = arith.constant 0 : i32
    %c0_i32_0 = arith.constant 0 : i32
    %c0_i32_1 = arith.constant 0 : i32
    return %c0_i32, %c0_i32_0 : i32, i32
  }
  func.func @transform_6(%arg0: i32) -> (i32, i32) {
    %c0_i32 = arith.constant 0 : i32
    %c0_i32_0 = arith.constant 0 : i32
    %c0_i32_1 = arith.constant 0 : i32
    return %c0_i32, %c0_i32_0 : i32, i32
  }
  func.func @transform_7(%arg0: i32) -> (i32, i32) {
    %c0_i32 = arith.constant 0 : i32
    %c0_i32_0 = arith.constant 0 : i32
    return %arg0, %c0_i32 : i32, i32
  }
}

</mosaic_0001>

<llo_original>
// kernel: discriminator_forward.1
$region0: #{discriminator_forward.1}
  #allocation0 [shape = 'u32[]', space=smem, size = 0x4, offset = 0x4, fixed_abs, tag = 'smem constant byte address 0x4 - core index']
  #allocation1 [shape = 'u32[144,128]{1,0:T(1,128)}', space=vmem, size = 0x12000, scoped, tag = 'internal scratch']
  %s0 = inlined_call_operand.vmem [shape: bf16[8,768], index: 0, kind: input, shape index: {}]
  %s1 = inlined_call_operand.vmem [shape: bf16[768,768], index: 1, kind: input, shape index: {}]
  %s2 = inlined_call_operand.vmem [shape: f32[1,768], index: 2, kind: input, shape index: {}]
  %s3 = inlined_call_operand.vmem [shape: bf16[768,768], index: 3, kind: input, shape index: {}]
  %s4 = inlined_call_operand.vmem [shape: f32[1,768], index: 4, kind: input, shape index: {}]
  %s5 = inlined_call_operand.vmem [shape: bf16[768,128], index: 5, kind: input, shape index: {}]
  %s6 = inlined_call_operand.vmem [shape: f32[1,128], index: 6, kind: input, shape index: {}]
  %s7 = inlined_call_operand.vmem [shape: f32[8,128], index: 7, kind: output, shape index: {}]
  %s8 = sld [smem:[#allocation0]]
  $region38: #{discriminator_forward.1} parent=0
    _
  %s10 = ssub.s32 1, %s8
  %s11 = scalar_select 0, %s10, %s8
  // Predicated region
  $region2: #{discriminator_forward.1} parent=0 // pred_check
    _
  $region3: #{discriminator_forward.1} parent=0 // pred_check_branch
    %13 = sbr.rel (0) target = $region5
  $region4: #{discriminator_forward.1} parent=0 // pred_region
    _
  $region5: #{discriminator_forward.1} parent=0 // pred_fallthru
    _
  // Predicated region
  $region6: #{discriminator_forward.1} parent=0 // pred_check
    _
  $region7: #{discriminator_forward.1} parent=0 // pred_check_branch
    %15 = sbr.rel (0) target = $region9
  $region8: #{discriminator_forward.1} parent=0 // pred_region
    _
  $region9: #{discriminator_forward.1} parent=0 // pred_fallthru
    _
  // Predicated region
  $region10: #{discriminator_forward.1} parent=0 // pred_check
    _
  $region11: #{discriminator_forward.1} parent=0 // pred_check_branch
    %17 = sbr.rel (0) target = $region13
  $region12: #{discriminator_forward.1} parent=0 // pred_region
    _
  $region13: #{discriminator_forward.1} parent=0 // pred_fallthru
    _
  // Predicated region
  $region14: #{discriminator_forward.1} parent=0 // pred_check
    _
  $region15: #{discriminator_forward.1} parent=0 // pred_check_branch
    %19 = sbr.rel (0) target = $region17
  $region16: #{discriminator_forward.1} parent=0 // pred_region
    _
  $region17: #{discriminator_forward.1} parent=0 // pred_fallthru
    _
  // Predicated region
  $region18: #{discriminator_forward.1} parent=0 // pred_check
    _
  $region19: #{discriminator_forward.1} parent=0 // pred_check_branch
    %21 = sbr.rel (0) target = $region21
  $region20: #{discriminator_forward.1} parent=0 // pred_region
    _
  $region21: #{discriminator_forward.1} parent=0 // pred_fallthru
    _
  // Predicated region
  $region22: #{discriminator_forward.1} parent=0 // pred_check
    _
  $region23: #{discriminator_forward.1} parent=0 // pred_check_branch
    %23 = sbr.rel (0) target = $region25
  $region24: #{discriminator_forward.1} parent=0 // pred_region
    _
  $region25: #{discriminator_forward.1} parent=0 // pred_fallthru
    _
  // Predicated region
  $region26: #{discriminator_forward.1} parent=0 // pred_check
    _
  $region27: #{discriminator_forward.1} parent=0 // pred_check_branch
    %25 = sbr.rel (0) target = $region29
  $region28: #{discriminator_forward.1} parent=0 // pred_region
    _
  $region29: #{discriminator_forward.1} parent=0 // pred_fallthru
    _
  %v27 = vld [vmem:[%s0] sm:$0xff]
  %v28 = vld [vmem:[%s0 + $0x8] sm:$0xff]
  %v29 = vld [vmem:[%s0 + $0x10] sm:$0xff]
  %v30 = vld [vmem:[%s1] sm:$0xff]
  %v31 = vld [vmem:[%s1 + $0x8] sm:$0xff]
  %v32 = vld [vmem:[%s1 + $0x10] sm:$0xff]
  %v33 = vld [vmem:[%s1 + $0x18] sm:$0xff]
  %v34 = vld [vmem:[%s1 + $0x20] sm:$0xff]
  %v35 = vld [vmem:[%s1 + $0x28] sm:$0xff]
  %v36 = vld [vmem:[%s1 + $0x30] sm:$0xff]
  %v37 = vld [vmem:[%s1 + $0x38] sm:$0xff]
  %v38 = vld [vmem:[%s1 + $0x40] sm:$0xff]
  %v39 = vld [vmem:[%s1 + $0x48] sm:$0xff]
  %v40 = vld [vmem:[%s1 + $0x50] sm:$0xff]
  %v41 = vld [vmem:[%s1 + $0x58] sm:$0xff]
  %v42 = vld [vmem:[%s1 + $0x60] sm:$0xff]
  %v43 = vld [vmem:[%s1 + $0x68] sm:$0xff]
  %v44 = vld [vmem:[%s1 + $0x70] sm:$0xff]
  %v45 = vld [vmem:[%s1 + $0x78] sm:$0xff]
  %v46 = vld [vmem:[%s1 + $0x80] sm:$0xff]
  %v47 = vld [vmem:[%s1 + $0x88] sm:$0xff]
  %v48 = vld [vmem:[%s1 + $0x90] sm:$0xff]
  %v49 = vld [vmem:[%s1 + $0x98] sm:$0xff]
  %v50 = vld [vmem:[%s1 + $0xa0] sm:$0xff]
  %v51 = vld [vmem:[%s1 + $0xa8] sm:$0xff]
  %v52 = vld [vmem:[%s1 + $0xb0] sm:$0xff]
  %v53 = vld [vmem:[%s1 + $0xb8] sm:$0xff]
  %v54 = vld [vmem:[%s1 + $0xc0] sm:$0xff]
  %v55 = vld [vmem:[%s1 + $0xc8] sm:$0xff]
  %v56 = vld [vmem:[%s1 + $0xd0] sm:$0xff]
  %v57 = vld [vmem:[%s1 + $0xd8] sm:$0xff]
  %v58 = vld [vmem:[%s1 + $0xe0] sm:$0xff]
  %v59 = vld [vmem:[%s1 + $0xe8] sm:$0xff]
  %v60 = vld [vmem:[%s1 + $0xf0] sm:$0xff]
  %v61 = vld [vmem:[%s1 + $0xf8] sm:$0xff]
  %v62 = vld [vmem:[%s1 + $0x100] sm:$0xff]
  %v63 = vld [vmem:[%s1 + $0x108] sm:$0xff]
  %v64 = vld [vmem:[%s1 + $0x110] sm:$0xff]
  %v65 = vld [vmem:[%s1 + $0x118] sm:$0xff]
  %v66 = vld [vmem:[%s1 + $0x120] sm:$0xff]
  %v67 = vld [vmem:[%s1 + $0x128] sm:$0xff]
  %v68 = vld [vmem:[%s1 + $0x130] sm:$0xff]
  %v69 = vld [vmem:[%s1 + $0x138] sm:$0xff]
  %v70 = vld [vmem:[%s1 + $0x140] sm:$0xff]
  %v71 = vld [vmem:[%s1 + $0x148] sm:$0xff]
  %v72 = vld [vmem:[%s1 + $0x150] sm:$0xff]
  %v73 = vld [vmem:[%s1 + $0x158] sm:$0xff]
  %v74 = vld [vmem:[%s1 + $0x160] sm:$0xff]
  %v75 = vld [vmem:[%s1 + $0x168] sm:$0xff]
  %v76 = vld [vmem:[%s1 + $0x170] sm:$0xff]
  %v77 = vld [vmem:[%s1 + $0x178] sm:$0xff]
  %v78 = vld [vmem:[%s1 + $0x180] sm:$0xff]
  %v79 = vld [vmem:[%s1 + $0x188] sm:$0xff]
  %v80 = vld [vmem:[%s1 + $0x190] sm:$0xff]
  %v81 = vld [vmem:[%s1 + $0x198] sm:$0xff]
  %v82 = vld [vmem:[%s1 + $0x1a0] sm:$0xff]
  %v83 = vld [vmem:[%s1 + $0x1a8] sm:$0xff]
  %v84 = vld [vmem:[%s1 + $0x1b0] sm:$0xff]
  %v85 = vld [vmem:[%s1 + $0x1b8] sm:$0xff]
  %v86 = vld [vmem:[%s1 + $0x1c0] sm:$0xff]
  %v87 = vld [vmem:[%s1 + $0x1c8] sm:$0xff]
  %v88 = vld [vmem:[%s1 + $0x1d0] sm:$0xff]
  %v89 = vld [vmem:[%s1 + $0x1d8] sm:$0xff]
  %v90 = vld [vmem:[%s1 + $0x1e0] sm:$0xff]
  %v91 = vld [vmem:[%s1 + $0x1e8] sm:$0xff]
  %v92 = vld [vmem:[%s1 + $0x1f0] sm:$0xff]
  %v93 = vld [vmem:[%s1 + $0x1f8] sm:$0xff]
  %v94 = vld [vmem:[%s1 + $0x200] sm:$0xff]
  %v95 = vld [vmem:[%s1 + $0x208] sm:$0xff]
  %v96 = vld [vmem:[%s1 + $0x210] sm:$0xff]
  %v97 = vld [vmem:[%s1 + $0x218] sm:$0xff]
  %v98 = vld [vmem:[%s1 + $0x220] sm:$0xff]
  %v99 = vld [vmem:[%s1 + $0x228] sm:$0xff]
  %v100 = vld [vmem:[%s1 + $0x230] sm:$0xff]
  %v101 = vld [vmem:[%s1 + $0x238] sm:$0xff]
  %v102 = vld [vmem:[%s1 + $0x240] sm:$0xff]
  %v103 = vld [vmem:[%s1 + $0x248] sm:$0xff]
  %v104 = vld [vmem:[%s1 + $0x250] sm:$0xff]
  %v105 = vld [vmem:[%s1 + $0x258] sm:$0xff]
  %v106 = vld [vmem:[%s1 + $0x260] sm:$0xff]
  %v107 = vld [vmem:[%s1 + $0x268] sm:$0xff]
  %v108 = vld [vmem:[%s1 + $0x270] sm:$0xff]
  %v109 = vld [vmem:[%s1 + $0x278] sm:$0xff]
  %v110 = vld [vmem:[%s1 + $0x280] sm:$0xff]
  %v111 = vld [vmem:[%s1 + $0x288] sm:$0xff]
  %v112 = vld [vmem:[%s1 + $0x290] sm:$0xff]
  %v113 = vld [vmem:[%s1 + $0x298] sm:$0xff]
  %v114 = vld [vmem:[%s1 + $0x2a0] sm:$0xff]
  %v115 = vld [vmem:[%s1 + $0x2a8] sm:$0xff]
  %v116 = vld [vmem:[%s1 + $0x2b0] sm:$0xff]
  %v117 = vld [vmem:[%s1 + $0x2b8] sm:$0xff]
  %v118 = vld [vmem:[%s1 + $0x2c0] sm:$0xff]
  %v119 = vld [vmem:[%s1 + $0x2c8] sm:$0xff]
  %v120 = vld [vmem:[%s1 + $0x2d0] sm:$0xff]
  %v121 = vld [vmem:[%s1 + $0x2d8] sm:$0xff]
  %v122 = vld [vmem:[%s1 + $0x2e0] sm:$0xff]
  %v123 = vld [vmem:[%s1 + $0x2e8] sm:$0xff]
  %v124 = vld [vmem:[%s1 + $0x2f0] sm:$0xff]
  %v125 = vld [vmem:[%s1 + $0x2f8] sm:$0xff]
  %v126 = vld [vmem:[%s1 + $0x300] sm:$0xff]
  %v127 = vld [vmem:[%s1 + $0x308] sm:$0xff]
  %v128 = vld [vmem:[%s1 + $0x310] sm:$0xff]
  %v129 = vld [vmem:[%s1 + $0x318] sm:$0xff]
  %v130 = vld [vmem:[%s1 + $0x320] sm:$0xff]
  %v131 = vld [vmem:[%s1 + $0x328] sm:$0xff]
  %v132 = vld [vmem:[%s1 + $0x330] sm:$0xff]
  %v133 = vld [vmem:[%s1 + $0x338] sm:$0xff]
  %v134 = vld [vmem:[%s1 + $0x340] sm:$0xff]
  %v135 = vld [vmem:[%s1 + $0x348] sm:$0xff]
  %v136 = vld [vmem:[%s1 + $0x350] sm:$0xff]
  %v137 = vld [vmem:[%s1 + $0x358] sm:$0xff]
  %v138 = vld [vmem:[%s1 + $0x360] sm:$0xff]
  %v139 = vld [vmem:[%s1 + $0x368] sm:$0xff]
  %v140 = vld [vmem:[%s1 + $0x370] sm:$0xff]
  %v141 = vld [vmem:[%s1 + $0x378] sm:$0xff]
  %v142 = vld [vmem:[%s1 + $0x380] sm:$0xff]
  %v143 = vld [vmem:[%s1 + $0x388] sm:$0xff]
  %v144 = vld [vmem:[%s1 + $0x390] sm:$0xff]
  %v145 = vld [vmem:[%s1 + $0x398] sm:$0xff]
  %v146 = vld [vmem:[%s1 + $0x3a0] sm:$0xff]
  %v147 = vld [vmem:[%s1 + $0x3a8] sm:$0xff]
  %v148 = vld [vmem:[%s1 + $0x3b0] sm:$0xff]
  %v149 = vld [vmem:[%s1 + $0x3b8] sm:$0xff]
  %v150 = vld [vmem:[%s1 + $0x3c0] sm:$0xff]
  %v151 = vld [vmem:[%s1 + $0x3c8] sm:$0xff]
  %v152 = vld [vmem:[%s1 + $0x3d0] sm:$0xff]
  %v153 = vld [vmem:[%s1 + $0x3d8] sm:$0xff]
  %v154 = vld [vmem:[%s1 + $0x3e0] sm:$0xff]
  %v155 = vld [vmem:[%s1 + $0x3e8] sm:$0xff]
  %v156 = vld [vmem:[%s1 + $0x3f0] sm:$0xff]
  %v157 = vld [vmem:[%s1 + $0x3f8] sm:$0xff]
  %v158 = vld [vmem:[%s1 + $0x400] sm:$0xff]
  %v159 = vld [vmem:[%s1 + $0x408] sm:$0xff]
  %v160 = vld [vmem:[%s1 + $0x410] sm:$0xff]
  %v161 = vld [vmem:[%s1 + $0x418] sm:$0xff]
  %v162 = vld [vmem:[%s1 + $0x420] sm:$0xff]
  %v163 = vld [vmem:[%s1 + $0x428] sm:$0xff]
  %v164 = vld [vmem:[%s1 + $0x430] sm:$0xff]
  %v165 = vld [vmem:[%s1 + $0x438] sm:$0xff]
  %v166 = vld [vmem:[%s1 + $0x440] sm:$0xff]
  %v167 = vld [vmem:[%s1 + $0x448] sm:$0xff]
  %v168 = vld [vmem:[%s1 + $0x450] sm:$0xff]
  %v169 = vld [vmem:[%s1 + $0x458] sm:$0xff]
  %v170 = vld [vmem:[%s1 + $0x460] sm:$0xff]
  %v171 = vld [vmem:[%s1 + $0x468] sm:$0xff]
  %v172 = vld [vmem:[%s1 + $0x470] sm:$0xff]
  %v173 = vld [vmem:[%s1 + $0x478] sm:$0xff]
  %v174 = vld [vmem:[%s1 + $0x480] sm:$0xff]
  %v175 = vld [vmem:[%s1 + $0x488] sm:$0xff]
  %v176 = vld [vmem:[%s1 + $0x490] sm:$0xff]
  %v177 = vld [vmem:[%s1 + $0x498] sm:$0xff]
  %v178 = vld [vmem:[%s1 + $0x4a0] sm:$0xff]
  %v179 = vld [vmem:[%s1 + $0x4a8] sm:$0xff]
  %v180 = vld [vmem:[%s1 + $0x4b0] sm:$0xff]
  %v181 = vld [vmem:[%s1 + $0x4b8] sm:$0xff]
  %v182 = vld [vmem:[%s1 + $0x4c0] sm:$0xff]
  %v183 = vld [vmem:[%s1 + $0x4c8] sm:$0xff]
  %v184 = vld [vmem:[%s1 + $0x4d0] sm:$0xff]
  %v185 = vld [vmem:[%s1 + $0x4d8] sm:$0xff]
  %v186 = vld [vmem:[%s1 + $0x4e0] sm:$0xff]
  %v187 = vld [vmem:[%s1 + $0x4e8] sm:$0xff]
  %v188 = vld [vmem:[%s1 + $0x4f0] sm:$0xff]
  %v189 = vld [vmem:[%s1 + $0x4f8] sm:$0xff]
  %v190 = vld [vmem:[%s1 + $0x500] sm:$0xff]
  %v191 = vld [vmem:[%s1 + $0x508] sm:$0xff]
  %v192 = vld [vmem:[%s1 + $0x510] sm:$0xff]
  %v193 = vld [vmem:[%s1 + $0x518] sm:$0xff]
  %v194 = vld [vmem:[%s1 + $0x520] sm:$0xff]
  %v195 = vld [vmem:[%s1 + $0x528] sm:$0xff]
  %v196 = vld [vmem:[%s1 + $0x530] sm:$0xff]
  %v197 = vld [vmem:[%s1 + $0x538] sm:$0xff]
  %v198 = vld [vmem:[%s1 + $0x540] sm:$0xff]
  %v199 = vld [vmem:[%s1 + $0x548] sm:$0xff]
  %v200 = vld [vmem:[%s1 + $0x550] sm:$0xff]
  %v201 = vld [vmem:[%s1 + $0x558] sm:$0xff]
  %v202 = vld [vmem:[%s1 + $0x560] sm:$0xff]
  %v203 = vld [vmem:[%s1 + $0x568] sm:$0xff]
  %v204 = vld [vmem:[%s1 + $0x570] sm:$0xff]
  %v205 = vld [vmem:[%s1 + $0x578] sm:$0xff]
  %v206 = vld [vmem:[%s1 + $0x580] sm:$0xff]
  %v207 = vld [vmem:[%s1 + $0x588] sm:$0xff]
  %v208 = vld [vmem:[%s1 + $0x590] sm:$0xff]
  %v209 = vld [vmem:[%s1 + $0x598] sm:$0xff]
  %v210 = vld [vmem:[%s1 + $0x5a0] sm:$0xff]
  %v211 = vld [vmem:[%s1 + $0x5a8] sm:$0xff]
  %v212 = vld [vmem:[%s1 + $0x5b0] sm:$0xff]
  %v213 = vld [vmem:[%s1 + $0x5b8] sm:$0xff]
  %v214 = vld [vmem:[%s1 + $0x5c0] sm:$0xff]
  %v215 = vld [vmem:[%s1 + $0x5c8] sm:$0xff]
  %v216 = vld [vmem:[%s1 + $0x5d0] sm:$0xff]
  %v217 = vld [vmem:[%s1 + $0x5d8] sm:$0xff]
  %v218 = vld [vmem:[%s1 + $0x5e0] sm:$0xff]
  %v219 = vld [vmem:[%s1 + $0x5e8] sm:$0xff]
  %v220 = vld [vmem:[%s1 + $0x5f0] sm:$0xff]
  %v221 = vld [vmem:[%s1 + $0x5f8] sm:$0xff]
  %v222 = vld [vmem:[%s1 + $0x600] sm:$0xff]
  %v223 = vld [vmem:[%s1 + $0x608] sm:$0xff]
  %v224 = vld [vmem:[%s1 + $0x610] sm:$0xff]
  %v225 = vld [vmem:[%s1 + $0x618] sm:$0xff]
  %v226 = vld [vmem:[%s1 + $0x620] sm:$0xff]
  %v227 = vld [vmem:[%s1 + $0x628] sm:$0xff]
  %v228 = vld [vmem:[%s1 + $0x630] sm:$0xff]
  %v229 = vld [vmem:[%s1 + $0x638] sm:$0xff]
  %v230 = vld [vmem:[%s1 + $0x640] sm:$0xff]
  %v231 = vld [vmem:[%s1 + $0x648] sm:$0xff]
  %v232 = vld [vmem:[%s1 + $0x650] sm:$0xff]
  %v233 = vld [vmem:[%s1 + $0x658] sm:$0xff]
  %v234 = vld [vmem:[%s1 + $0x660] sm:$0xff]
  %v235 = vld [vmem:[%s1 + $0x668] sm:$0xff]
  %v236 = vld [vmem:[%s1 + $0x670] sm:$0xff]
  %v237 = vld [vmem:[%s1 + $0x678] sm:$0xff]
  %v238 = vld [vmem:[%s1 + $0x680] sm:$0xff]
  %v239 = vld [vmem:[%s1 + $0x688] sm:$0xff]
  %v240 = vld [vmem:[%s1 + $0x690] sm:$0xff]
  %v241 = vld [vmem:[%s1 + $0x698] sm:$0xff]
  %v242 = vld [vmem:[%s1 + $0x6a0] sm:$0xff]
  %v243 = vld [vmem:[%s1 + $0x6a8] sm:$0xff]
  %v244 = vld [vmem:[%s1 + $0x6b0] sm:$0xff]
  %v245 = vld [vmem:[%s1 + $0x6b8] sm:$0xff]
  %v246 = vld [vmem:[%s1 + $0x6c0] sm:$0xff]
  %v247 = vld [vmem:[%s1 + $0x6c8] sm:$0xff]
  %v248 = vld [vmem:[%s1 + $0x6d0] sm:$0xff]
  %v249 = vld [vmem:[%s1 + $0x6d8] sm:$0xff]
  %v250 = vld [vmem:[%s1 + $0x6e0] sm:$0xff]
  %v251 = vld [vmem:[%s1 + $0x6e8] sm:$0xff]
  %v252 = vld [vmem:[%s1 + $0x6f0] sm:$0xff]
  %v253 = vld [vmem:[%s1 + $0x6f8] sm:$0xff]
  %v254 = vld [vmem:[%s1 + $0x700] sm:$0xff]
  %v255 = vld [vmem:[%s1 + $0x708] sm:$0xff]
  %v256 = vld [vmem:[%s1 + $0x710] sm:$0xff]
  %v257 = vld [vmem:[%s1 + $0x718] sm:$0xff]
  %v258 = vld [vmem:[%s1 + $0x720] sm:$0xff]
  %v259 = vld [vmem:[%s1 + $0x728] sm:$0xff]
  %v260 = vld [vmem:[%s1 + $0x730] sm:$0xff]
  %v261 = vld [vmem:[%s1 + $0x738] sm:$0xff]
  %v262 = vld [vmem:[%s1 + $0x740] sm:$0xff]
  %v263 = vld [vmem:[%s1 + $0x748] sm:$0xff]
  %v264 = vld [vmem:[%s1 + $0x750] sm:$0xff]
  %v265 = vld [vmem:[%s1 + $0x758] sm:$0xff]
  %v266 = vld [vmem:[%s1 + $0x760] sm:$0xff]
  %v267 = vld [vmem:[%s1 + $0x768] sm:$0xff]
  %v268 = vld [vmem:[%s1 + $0x770] sm:$0xff]
  %v269 = vld [vmem:[%s1 + $0x778] sm:$0xff]
  %v270 = vld [vmem:[%s1 + $0x780] sm:$0xff]
  %v271 = vld [vmem:[%s1 + $0x788] sm:$0xff]
  %v272 = vld [vmem:[%s1 + $0x790] sm:$0xff]
  %v273 = vld [vmem:[%s1 + $0x798] sm:$0xff]
  %v274 = vld [vmem:[%s1 + $0x7a0] sm:$0xff]
  %v275 = vld [vmem:[%s1 + $0x7a8] sm:$0xff]
  %v276 = vld [vmem:[%s1 + $0x7b0] sm:$0xff]
  %v277 = vld [vmem:[%s1 + $0x7b8] sm:$0xff]
  %v278 = vld [vmem:[%s1 + $0x7c0] sm:$0xff]
  %v279 = vld [vmem:[%s1 + $0x7c8] sm:$0xff]
  %v280 = vld [vmem:[%s1 + $0x7d0] sm:$0xff]
  %v281 = vld [vmem:[%s1 + $0x7d8] sm:$0xff]
  %v282 = vld [vmem:[%s1 + $0x7e0] sm:$0xff]
  %v283 = vld [vmem:[%s1 + $0x7e8] sm:$0xff]
  %v284 = vld [vmem:[%s1 + $0x7f0] sm:$0xff]
  %v285 = vld [vmem:[%s1 + $0x7f8] sm:$0xff]
  %v286 = vld [vmem:[%s1 + $0x800] sm:$0xff]
  %v287 = vld [vmem:[%s1 + $0x808] sm:$0xff]
  %v288 = vld [vmem:[%s1 + $0x810] sm:$0xff]
  %v289 = vld [vmem:[%s1 + $0x818] sm:$0xff]
  %v290 = vld [vmem:[%s1 + $0x820] sm:$0xff]
  %v291 = vld [vmem:[%s1 + $0x828] sm:$0xff]
  %v292 = vld [vmem:[%s1 + $0x830] sm:$0xff]
  %v293 = vld [vmem:[%s1 + $0x838] sm:$0xff]
  %v294 = vld [vmem:[%s1 + $0x840] sm:$0xff]
  %v295 = vld [vmem:[%s1 + $0x848] sm:$0xff]
  %v296 = vld [vmem:[%s1 + $0x850] sm:$0xff]
  %v297 = vld [vmem:[%s1 + $0x858] sm:$0xff]
  %v298 = vld [vmem:[%s1 + $0x860] sm:$0xff]
  %v299 = vld [vmem:[%s1 + $0x868] sm:$0xff]
  %v300 = vld [vmem:[%s1 + $0x870] sm:$0xff]
  %v301 = vld [vmem:[%s1 + $0x878] sm:$0xff]
  %v302 = vld [vmem:[%s1 + $0x880] sm:$0xff]
  %v303 = vld [vmem:[%s1 + $0x888] sm:$0xff]
  %v304 = vld [vmem:[%s1 + $0x890] sm:$0xff]
  %v305 = vld [vmem:[%s1 + $0x898] sm:$0xff]
  %v306 = vld [vmem:[%s1 + $0x8a0] sm:$0xff]
  %v307 = vld [vmem:[%s1 + $0x8a8] sm:$0xff]
  %v308 = vld [vmem:[%s1 + $0x8b0] sm:$0xff]
  %v309 = vld [vmem:[%s1 + $0x8b8] sm:$0xff]
  %v310 = vld [vmem:[%s1 + $0x8c0] sm:$0xff]
  %v311 = vld [vmem:[%s1 + $0x8c8] sm:$0xff]
  %v312 = vld [vmem:[%s1 + $0x8d0] sm:$0xff]
  %v313 = vld [vmem:[%s1 + $0x8d8] sm:$0xff]
  %v314 = vld [vmem:[%s1 + $0x8e0] sm:$0xff]
  %v315 = vld [vmem:[%s1 + $0x8e8] sm:$0xff]
  %v316 = vld [vmem:[%s1 + $0x8f0] sm:$0xff]
  %v317 = vld [vmem:[%s1 + $0x8f8] sm:$0xff]
  %v318 = vld [vmem:[%s2] sm:$0x3f]
  %v320 = vlaneseq
  %v321 = vshrl.u32 %v320, 7
  %v322 = vsub.s32 0, %v321
  %v323 = vrot.slane %v318, %v322
  %v324 = vlaneseq
  %v325 = vshrl.u32 %v324, 7
  %v326 = vsub.s32 1, %v325
  %v327 = vrot.slane %v318, %v326
  %v328 = vlaneseq
  %v329 = vshrl.u32 %v328, 7
  %v330 = vsub.s32 2, %v329
  %v331 = vrot.slane %v318, %v330
  %v332 = vlaneseq
  %v333 = vshrl.u32 %v332, 7
  %v334 = vsub.s32 3, %v333
  %v335 = vrot.slane %v318, %v334
  %v336 = vlaneseq
  %v337 = vshrl.u32 %v336, 7
  %v338 = vsub.s32 4, %v337
  %v339 = vrot.slane %v318, %v338
  %v340 = vlaneseq
  %v341 = vshrl.u32 %v340, 7
  %v342 = vsub.s32 5, %v341
  %v343 = vrot.slane %v318, %v342
  %v353 = vunpack.c.l.b16 %v27
  %v354 = vunpack.c.h.b16 %v27
  %v355 = vunpack.c.l.b16 %v28
  %v356 = vunpack.c.h.b16 %v28
  %v357 = vunpack.c.l.b16 %v29
  %v358 = vunpack.c.h.b16 %v29
  %v359 = vpack.c.b16 %v353, %v353
  %v360 = vpack.c.b16 %v354, %v354
  %v361 = vpack.c.b16 %v355, %v355
  %v362 = vpack.c.b16 %v356, %v356
  %v363 = vpack.c.b16 %v357, %v357
  %v364 = vpack.c.b16 %v358, %v358
  %v659 = vunpack.c.l.b16 %v30
  %v660 = vunpack.c.h.b16 %v30
  %v661 = vunpack.c.l.b16 %v31
  %v662 = vunpack.c.h.b16 %v31
  %v663 = vunpack.c.l.b16 %v32
  %v664 = vunpack.c.h.b16 %v32
  %v665 = vunpack.c.l.b16 %v33
  %v666 = vunpack.c.h.b16 %v33
  %v667 = vunpack.c.l.b16 %v34
  %v668 = vunpack.c.h.b16 %v34
  %v669 = vunpack.c.l.b16 %v35
  %v670 = vunpack.c.h.b16 %v35
  %v671 = vunpack.c.l.b16 %v36
  %v672 = vunpack.c.h.b16 %v36
  %v673 = vunpack.c.l.b16 %v37
  %v674 = vunpack.c.h.b16 %v37
  %v675 = vunpack.c.l.b16 %v38
  %v676 = vunpack.c.h.b16 %v38
  %v677 = vunpack.c.l.b16 %v39
  %v678 = vunpack.c.h.b16 %v39
  %v679 = vunpack.c.l.b16 %v40
  %v680 = vunpack.c.h.b16 %v40
  %v681 = vunpack.c.l.b16 %v41
  %v682 = vunpack.c.h.b16 %v41
  %v683 = vunpack.c.l.b16 %v42
  %v684 = vunpack.c.h.b16 %v42
  %v685 = vunpack.c.l.b16 %v43
  %v686 = vunpack.c.h.b16 %v43
  %v687 = vunpack.c.l.b16 %v44
  %v688 = vunpack.c.h.b16 %v44
  %v689 = vunpack.c.l.b16 %v45
  %v690 = vunpack.c.h.b16 %v45
  %v691 = vunpack.c.l.b16 %v46
  %v692 = vunpack.c.h.b16 %v46
  %v693 = vunpack.c.l.b16 %v47
  %v694 = vunpack.c.h.b16 %v47
  %v695 = vunpack.c.l.b16 %v48
  %v696 = vunpack.c.h.b16 %v48
  %v697 = vunpack.c.l.b16 %v49
  %v698 = vunpack.c.h.b16 %v49
  %v699 = vunpack.c.l.b16 %v50
  %v700 = vunpack.c.h.b16 %v50
  %v701 = vunpack.c.l.b16 %v51
  %v702 = vunpack.c.h.b16 %v51
  %v703 = vunpack.c.l.b16 %v52
  %v704 = vunpack.c.h.b16 %v52
  %v705 = vunpack.c.l.b16 %v53
  %v706 = vunpack.c.h.b16 %v53
  %v707 = vunpack.c.l.b16 %v54
  %v708 = vunpack.c.h.b16 %v54
  %v709 = vunpack.c.l.b16 %v55
  %v710 = vunpack.c.h.b16 %v55
  %v711 = vunpack.c.l.b16 %v56
  %v712 = vunpack.c.h.b16 %v56
  %v713 = vunpack.c.l.b16 %v57
  %v714 = vunpack.c.h.b16 %v57
  %v715 = vunpack.c.l.b16 %v58
  %v716 = vunpack.c.h.b16 %v58
  %v717 = vunpack.c.l.b16 %v59
  %v718 = vunpack.c.h.b16 %v59
  %v719 = vunpack.c.l.b16 %v60
  %v720 = vunpack.c.h.b16 %v60
  %v721 = vunpack.c.l.b16 %v61
  %v722 = vunpack.c.h.b16 %v61
  %v723 = vunpack.c.l.b16 %v62
  %v724 = vunpack.c.h.b16 %v62
  %v725 = vunpack.c.l.b16 %v63
  %v726 = vunpack.c.h.b16 %v63
  %v727 = vunpack.c.l.b16 %v64
  %v728 = vunpack.c.h.b16 %v64
  %v729 = vunpack.c.l.b16 %v65
  %v730 = vunpack.c.h.b16 %v65
  %v731 = vunpack.c.l.b16 %v66
  %v732 = vunpack.c.h.b16 %v66
  %v733 = vunpack.c.l.b16 %v67
  %v734 = vunpack.c.h.b16 %v67
  %v735 = vunpack.c.l.b16 %v68
  %v736 = vunpack.c.h.b16 %v68
  %v737 = vunpack.c.l.b16 %v69
  %v738 = vunpack.c.h.b16 %v69
  %v739 = vunpack.c.l.b16 %v70
  %v740 = vunpack.c.h.b16 %v70
  %v741 = vunpack.c.l.b16 %v71
  %v742 = vunpack.c.h.b16 %v71
  %v743 = vunpack.c.l.b16 %v72
  %v744 = vunpack.c.h.b16 %v72
  %v745 = vunpack.c.l.b16 %v73
  %v746 = vunpack.c.h.b16 %v73
  %v747 = vunpack.c.l.b16 %v74
  %v748 = vunpack.c.h.b16 %v74
  %v749 = vunpack.c.l.b16 %v75
  %v750 = vunpack.c.h.b16 %v75
  %v751 = vunpack.c.l.b16 %v76
  %v752 = vunpack.c.h.b16 %v76
  %v753 = vunpack.c.l.b16 %v77
  %v754 = vunpack.c.h.b16 %v77
  %v755 = vunpack.c.l.b16 %v78
  %v756 = vunpack.c.h.b16 %v78
  %v757 = vunpack.c.l.b16 %v79
  %v758 = vunpack.c.h.b16 %v79
  %v759 = vunpack.c.l.b16 %v80
  %v760 = vunpack.c.h.b16 %v80
  %v761 = vunpack.c.l.b16 %v81
  %v762 = vunpack.c.h.b16 %v81
  %v763 = vunpack.c.l.b16 %v82
  %v764 = vunpack.c.h.b16 %v82
  %v765 = vunpack.c.l.b16 %v83
  %v766 = vunpack.c.h.b16 %v83
  %v767 = vunpack.c.l.b16 %v84
  %v768 = vunpack.c.h.b16 %v84
  %v769 = vunpack.c.l.b16 %v85
  %v770 = vunpack.c.h.b16 %v85
  %v771 = vunpack.c.l.b16 %v86
  %v772 = vunpack.c.h.b16 %v86
  %v773 = vunpack.c.l.b16 %v87
  %v774 = vunpack.c.h.b16 %v87
  %v775 = vunpack.c.l.b16 %v88
  %v776 = vunpack.c.h.b16 %v88
  %v777 = vunpack.c.l.b16 %v89
  %v778 = vunpack.c.h.b16 %v89
  %v779 = vunpack.c.l.b16 %v90
  %v780 = vunpack.c.h.b16 %v90
  %v781 = vunpack.c.l.b16 %v91
  %v782 = vunpack.c.h.b16 %v91
  %v783 = vunpack.c.l.b16 %v92
  %v784 = vunpack.c.h.b16 %v92
  %v785 = vunpack.c.l.b16 %v93
  %v786 = vunpack.c.h.b16 %v93
  %v787 = vunpack.c.l.b16 %v94
  %v788 = vunpack.c.h.b16 %v94
  %v789 = vunpack.c.l.b16 %v95
  %v790 = vunpack.c.h.b16 %v95
  %v791 = vunpack.c.l.b16 %v96
  %v792 = vunpack.c.h.b16 %v96
  %v793 = vunpack.c.l.b16 %v97
  %v794 = vunpack.c.h.b16 %v97
  %v795 = vunpack.c.l.b16 %v98
  %v796 = vunpack.c.h.b16 %v98
  %v797 = vunpack.c.l.b16 %v99
  %v798 = vunpack.c.h.b16 %v99
  %v799 = vunpack.c.l.b16 %v100
  %v800 = vunpack.c.h.b16 %v100
  %v801 = vunpack.c.l.b16 %v101
  %v802 = vunpack.c.h.b16 %v101
  %v803 = vunpack.c.l.b16 %v102
  %v804 = vunpack.c.h.b16 %v102
  %v805 = vunpack.c.l.b16 %v103
  %v806 = vunpack.c.h.b16 %v103
  %v807 = vunpack.c.l.b16 %v104
  %v808 = vunpack.c.h.b16 %v104
  %v809 = vunpack.c.l.b16 %v105
  %v810 = vunpack.c.h.b16 %v105
  %v811 = vunpack.c.l.b16 %v106
  %v812 = vunpack.c.h.b16 %v106
  %v813 = vunpack.c.l.b16 %v107
  %v814 = vunpack.c.h.b16 %v107
  %v815 = vunpack.c.l.b16 %v108
  %v816 = vunpack.c.h.b16 %v108
  %v817 = vunpack.c.l.b16 %v109
  %v818 = vunpack.c.h.b16 %v109
  %v819 = vunpack.c.l.b16 %v110
  %v820 = vunpack.c.h.b16 %v110
  %v821 = vunpack.c.l.b16 %v111
  %v822 = vunpack.c.h.b16 %v111
  %v823 = vunpack.c.l.b16 %v112
  %v824 = vunpack.c.h.b16 %v112
  %v825 = vunpack.c.l.b16 %v113
  %v826 = vunpack.c.h.b16 %v113
  %v827 = vunpack.c.l.b16 %v114
  %v828 = vunpack.c.h.b16 %v114
  %v829 = vunpack.c.l.b16 %v115
  %v830 = vunpack.c.h.b16 %v115
  %v831 = vunpack.c.l.b16 %v116
  %v832 = vunpack.c.h.b16 %v116
  %v833 = vunpack.c.l.b16 %v117
  %v834 = vunpack.c.h.b16 %v117
  %v835 = vunpack.c.l.b16 %v118
  %v836 = vunpack.c.h.b16 %v118
  %v837 = vunpack.c.l.b16 %v119
  %v838 = vunpack.c.h.b16 %v119
  %v839 = vunpack.c.l.b16 %v120
  %v840 = vunpack.c.h.b16 %v120
  %v841 = vunpack.c.l.b16 %v121
  %v842 = vunpack.c.h.b16 %v121
  %v843 = vunpack.c.l.b16 %v122
  %v844 = vunpack.c.h.b16 %v122
  %v845 = vunpack.c.l.b16 %v123
  %v846 = vunpack.c.h.b16 %v123
  %v847 = vunpack.c.l.b16 %v124
  %v848 = vunpack.c.h.b16 %v124
  %v849 = vunpack.c.l.b16 %v125
  %v850 = vunpack.c.h.b16 %v125
  %v851 = vunpack.c.l.b16 %v126
  %v852 = vunpack.c.h.b16 %v126
  %v853 = vunpack.c.l.b16 %v127
  %v854 = vunpack.c.h.b16 %v127
  %v855 = vunpack.c.l.b16 %v128
  %v856 = vunpack.c.h.b16 %v128
  %v857 = vunpack.c.l.b16 %v129
  %v858 = vunpack.c.h.b16 %v129
  %v859 = vunpack.c.l.b16 %v130
  %v860 = vunpack.c.h.b16 %v130
  %v861 = vunpack.c.l.b16 %v131
  %v862 = vunpack.c.h.b16 %v131
  %v863 = vunpack.c.l.b16 %v132
  %v864 = vunpack.c.h.b16 %v132
  %v865 = vunpack.c.l.b16 %v133
  %v866 = vunpack.c.h.b16 %v133
  %v867 = vunpack.c.l.b16 %v134
  %v868 = vunpack.c.h.b16 %v134
  %v869 = vunpack.c.l.b16 %v135
  %v870 = vunpack.c.h.b16 %v135
  %v871 = vunpack.c.l.b16 %v136
  %v872 = vunpack.c.h.b16 %v136
  %v873 = vunpack.c.l.b16 %v137
  %v874 = vunpack.c.h.b16 %v137
  %v875 = vunpack.c.l.b16 %v138
  %v876 = vunpack.c.h.b16 %v138
  %v877 = vunpack.c.l.b16 %v139
  %v878 = vunpack.c.h.b16 %v139
  %v879 = vunpack.c.l.b16 %v140
  %v880 = vunpack.c.h.b16 %v140
  %v881 = vunpack.c.l.b16 %v141
  %v882 = vunpack.c.h.b16 %v141
  %v883 = vunpack.c.l.b16 %v142
  %v884 = vunpack.c.h.b16 %v142
  %v885 = vunpack.c.l.b16 %v143
  %v886 = vunpack.c.h.b16 %v143
  %v887 = vunpack.c.l.b16 %v144
  %v888 = vunpack.c.h.b16 %v144
  %v889 = vunpack.c.l.b16 %v145
  %v890 = vunpack.c.h.b16 %v145
  %v891 = vunpack.c.l.b16 %v146
  %v892 = vunpack.c.h.b16 %v146
  %v893 = vunpack.c.l.b16 %v147
  %v894 = vunpack.c.h.b16 %v147
  %v895 = vunpack.c.l.b16 %v148
  %v896 = vunpack.c.h.b16 %v148
  %v897 = vunpack.c.l.b16 %v149
  %v898 = vunpack.c.h.b16 %v149
  %v899 = vunpack.c.l.b16 %v150
  %v900 = vunpack.c.h.b16 %v150
  %v901 = vunpack.c.l.b16 %v151
  %v902 = vunpack.c.h.b16 %v151
  %v903 = vunpack.c.l.b16 %v152
  %v904 = vunpack.c.h.b16 %v152
  %v905 = vunpack.c.l.b16 %v153
  %v906 = vunpack.c.h.b16 %v153
  %v907 = vunpack.c.l.b16 %v154
  %v908 = vunpack.c.h.b16 %v154
  %v909 = vunpack.c.l.b16 %v155
  %v910 = vunpack.c.h.b16 %v155
  %v911 = vunpack.c.l.b16 %v156
  %v912 = vunpack.c.h.b16 %v156
  %v913 = vunpack.c.l.b16 %v157
  %v914 = vunpack.c.h.b16 %v157
  %v915 = vunpack.c.l.b16 %v158
  %v916 = vunpack.c.h.b16 %v158
  %v917 = vunpack.c.l.b16 %v159
  %v918 = vunpack.c.h.b16 %v159
  %v919 = vunpack.c.l.b16 %v160
  %v920 = vunpack.c.h.b16 %v160
  %v921 = vunpack.c.l.b16 %v161
  %v922 = vunpack.c.h.b16 %v161
  %v923 = vunpack.c.l.b16 %v162
  %v924 = vunpack.c.h.b16 %v162
  %v925 = vunpack.c.l.b16 %v163
  %v926 = vunpack.c.h.b16 %v163
  %v927 = vunpack.c.l.b16 %v164
  %v928 = vunpack.c.h.b16 %v164
  %v929 = vunpack.c.l.b16 %v165
  %v930 = vunpack.c.h.b16 %v165
  %v931 = vunpack.c.l.b16 %v166
  %v932 = vunpack.c.h.b16 %v166
  %v933 = vunpack.c.l.b16 %v167
  %v934 = vunpack.c.h.b16 %v167
  %v935 = vunpack.c.l.b16 %v168
  %v936 = vunpack.c.h.b16 %v168
  %v937 = vunpack.c.l.b16 %v169
  %v938 = vunpack.c.h.b16 %v169
  %v939 = vunpack.c.l.b16 %v170
  %v940 = vunpack.c.h.b16 %v170
  %v941 = vunpack.c.l.b16 %v171
  %v942 = vunpack.c.h.b16 %v171
  %v943 = vunpack.c.l.b16 %v172
  %v944 = vunpack.c.h.b16 %v172
  %v945 = vunpack.c.l.b16 %v173
  %v946 = vunpack.c.h.b16 %v173
  %v947 = vunpack.c.l.b16 %v174
  %v948 = vunpack.c.h.b16 %v174
  %v949 = vunpack.c.l.b16 %v175
  %v950 = vunpack.c.h.b16 %v175
  %v951 = vunpack.c.l.b16 %v176
  %v952 = vunpack.c.h.b16 %v176
  %v953 = vunpack.c.l.b16 %v177
  %v954 = vunpack.c.h.b16 %v177
  %v955 = vunpack.c.l.b16 %v178
  %v956 = vunpack.c.h.b16 %v178
  %v957 = vunpack.c.l.b16 %v179
  %v958 = vunpack.c.h.b16 %v179
  %v959 = vunpack.c.l.b16 %v180
  %v960 = vunpack.c.h.b16 %v180
  %v961 = vunpack.c.l.b16 %v181
  %v962 = vunpack.c.h.b16 %v181
  %v963 = vunpack.c.l.b16 %v182
  %v964 = vunpack.c.h.b16 %v182
  %v965 = vunpack.c.l.b16 %v183
  %v966 = vunpack.c.h.b16 %v183
  %v967 = vunpack.c.l.b16 %v184
  %v968 = vunpack.c.h.b16 %v184
  %v969 = vunpack.c.l.b16 %v185
  %v970 = vunpack.c.h.b16 %v185
  %v971 = vunpack.c.l.b16 %v186
  %v972 = vunpack.c.h.b16 %v186
  %v973 = vunpack.c.l.b16 %v187
  %v974 = vunpack.c.h.b16 %v187
  %v975 = vunpack.c.l.b16 %v188
  %v976 = vunpack.c.h.b16 %v188
  %v977 = vunpack.c.l.b16 %v189
  %v978 = vunpack.c.h.b16 %v189
  %v979 = vunpack.c.l.b16 %v190
  %v980 = vunpack.c.h.b16 %v190
  %v981 = vunpack.c.l.b16 %v191
  %v982 = vunpack.c.h.b16 %v191
  %v983 = vunpack.c.l.b16 %v192
  %v984 = vunpack.c.h.b16 %v192
  %v985 = vunpack.c.l.b16 %v193
  %v986 = vunpack.c.h.b16 %v193
  %v987 = vunpack.c.l.b16 %v194
  %v988 = vunpack.c.h.b16 %v194
  %v989 = vunpack.c.l.b16 %v195
  %v990 = vunpack.c.h.b16 %v195
  %v991 = vunpack.c.l.b16 %v196
  %v992 = vunpack.c.h.b16 %v196
  %v993 = vunpack.c.l.b16 %v197
  %v994 = vunpack.c.h.b16 %v197
  %v995 = vunpack.c.l.b16 %v198
  %v996 = vunpack.c.h.b16 %v198
  %v997 = vunpack.c.l.b16 %v199
  %v998 = vunpack.c.h.b16 %v199
  %v999 = vunpack.c.l.b16 %v200
  %v1000 = vunpack.c.h.b16 %v200
  %v1001 = vunpack.c.l.b16 %v201
  %v1002 = vunpack.c.h.b16 %v201
  %v1003 = vunpack.c.l.b16 %v202
  %v1004 = vunpack.c.h.b16 %v202
  %v1005 = vunpack.c.l.b16 %v203
  %v1006 = vunpack.c.h.b16 %v203
  %v1007 = vunpack.c.l.b16 %v204
  %v1008 = vunpack.c.h.b16 %v204
  %v1009 = vunpack.c.l.b16 %v205
  %v1010 = vunpack.c.h.b16 %v205
  %v1011 = vunpack.c.l.b16 %v206
  %v1012 = vunpack.c.h.b16 %v206
  %v1013 = vunpack.c.l.b16 %v207
  %v1014 = vunpack.c.h.b16 %v207
  %v1015 = vunpack.c.l.b16 %v208
  %v1016 = vunpack.c.h.b16 %v208
  %v1017 = vunpack.c.l.b16 %v209
  %v1018 = vunpack.c.h.b16 %v209
  %v1019 = vunpack.c.l.b16 %v210
  %v1020 = vunpack.c.h.b16 %v210
  %v1021 = vunpack.c.l.b16 %v211
  %v1022 = vunpack.c.h.b16 %v211
  %v1023 = vunpack.c.l.b16 %v212
  %v1024 = vunpack.c.h.b16 %v212
  %v1025 = vunpack.c.l.b16 %v213
  %v1026 = vunpack.c.h.b16 %v213
  %v1027 = vunpack.c.l.b16 %v214
  %v1028 = vunpack.c.h.b16 %v214
  %v1029 = vunpack.c.l.b16 %v215
  %v1030 = vunpack.c.h.b16 %v215
  %v1031 = vunpack.c.l.b16 %v216
  %v1032 = vunpack.c.h.b16 %v216
  %v1033 = vunpack.c.l.b16 %v217
  %v1034 = vunpack.c.h.b16 %v217
  %v1035 = vunpack.c.l.b16 %v218
  %v1036 = vunpack.c.h.b16 %v218
  %v1037 = vunpack.c.l.b16 %v219
  %v1038 = vunpack.c.h.b16 %v219
  %v1039 = vunpack.c.l.b16 %v220
  %v1040 = vunpack.c.h.b16 %v220
  %v1041 = vunpack.c.l.b16 %v221
  %v1042 = vunpack.c.h.b16 %v221
  %v1043 = vunpack.c.l.b16 %v222
  %v1044 = vunpack.c.h.b16 %v222
  %v1045 = vunpack.c.l.b16 %v223
  %v1046 = vunpack.c.h.b16 %v223
  %v1047 = vunpack.c.l.b16 %v224
  %v1048 = vunpack.c.h.b16 %v224
  %v1049 = vunpack.c.l.b16 %v225
  %v1050 = vunpack.c.h.b16 %v225
  %v1051 = vunpack.c.l.b16 %v226
  %v1052 = vunpack.c.h.b16 %v226
  %v1053 = vunpack.c.l.b16 %v227
  %v1054 = vunpack.c.h.b16 %v227
  %v1055 = vunpack.c.l.b16 %v228
  %v1056 = vunpack.c.h.b16 %v228
  %v1057 = vunpack.c.l.b16 %v229
  %v1058 = vunpack.c.h.b16 %v229
  %v1059 = vunpack.c.l.b16 %v230
  %v1060 = vunpack.c.h.b16 %v230
  %v1061 = vunpack.c.l.b16 %v231
  %v1062 = vunpack.c.h.b16 %v231
  %v1063 = vunpack.c.l.b16 %v232
  %v1064 = vunpack.c.h.b16 %v232
  %v1065 = vunpack.c.l.b16 %v233
  %v1066 = vunpack.c.h.b16 %v233
  %v1067 = vunpack.c.l.b16 %v234
  %v1068 = vunpack.c.h.b16 %v234
  %v1069 = vunpack.c.l.b16 %v235
  %v1070 = vunpack.c.h.b16 %v235
  %v1071 = vunpack.c.l.b16 %v236
  %v1072 = vunpack.c.h.b16 %v236
  %v1073 = vunpack.c.l.b16 %v237
  %v1074 = vunpack.c.h.b16 %v237
  %v1075 = vunpack.c.l.b16 %v238
  %v1076 = vunpack.c.h.b16 %v238
  %v1077 = vunpack.c.l.b16 %v239
  %v1078 = vunpack.c.h.b16 %v239
  %v1079 = vunpack.c.l.b16 %v240
  %v1080 = vunpack.c.h.b16 %v240
  %v1081 = vunpack.c.l.b16 %v241
  %v1082 = vunpack.c.h.b16 %v241
  %v1083 = vunpack.c.l.b16 %v242
  %v1084 = vunpack.c.h.b16 %v242
  %v1085 = vunpack.c.l.b16 %v243
  %v1086 = vunpack.c.h.b16 %v243
  %v1087 = vunpack.c.l.b16 %v244
  %v1088 = vunpack.c.h.b16 %v244
  %v1089 = vunpack.c.l.b16 %v245
  %v1090 = vunpack.c.h.b16 %v245
  %v1091 = vunpack.c.l.b16 %v246
  %v1092 = vunpack.c.h.b16 %v246
  %v1093 = vunpack.c.l.b16 %v247
  %v1094 = vunpack.c.h.b16 %v247
  %v1095 = vunpack.c.l.b16 %v248
  %v1096 = vunpack.c.h.b16 %v248
  %v1097 = vunpack.c.l.b16 %v249
  %v1098 = vunpack.c.h.b16 %v249
  %v1099 = vunpack.c.l.b16 %v250
  %v1100 = vunpack.c.h.b16 %v250
  %v1101 = vunpack.c.l.b16 %v251
  %v1102 = vunpack.c.h.b16 %v251
  %v1103 = vunpack.c.l.b16 %v252
  %v1104 = vunpack.c.h.b16 %v252
  %v1105 = vunpack.c.l.b16 %v253
  %v1106 = vunpack.c.h.b16 %v253
  %v1107 = vunpack.c.l.b16 %v254
  %v1108 = vunpack.c.h.b16 %v254
  %v1109 = vunpack.c.l.b16 %v255
  %v1110 = vunpack.c.h.b16 %v255
  %v1111 = vunpack.c.l.b16 %v256
  %v1112 = vunpack.c.h.b16 %v256
  %v1113 = vunpack.c.l.b16 %v257
  %v1114 = vunpack.c.h.b16 %v257
  %v1115 = vunpack.c.l.b16 %v258
  %v1116 = vunpack.c.h.b16 %v258
  %v1117 = vunpack.c.l.b16 %v259
  %v1118 = vunpack.c.h.b16 %v259
  %v1119 = vunpack.c.l.b16 %v260
  %v1120 = vunpack.c.h.b16 %v260
  %v1121 = vunpack.c.l.b16 %v261
  %v1122 = vunpack.c.h.b16 %v261
  %v1123 = vunpack.c.l.b16 %v262
  %v1124 = vunpack.c.h.b16 %v262
  %v1125 = vunpack.c.l.b16 %v263
  %v1126 = vunpack.c.h.b16 %v263
  %v1127 = vunpack.c.l.b16 %v264
  %v1128 = vunpack.c.h.b16 %v264
  %v1129 = vunpack.c.l.b16 %v265
  %v1130 = vunpack.c.h.b16 %v265
  %v1131 = vunpack.c.l.b16 %v266
  %v1132 = vunpack.c.h.b16 %v266
  %v1133 = vunpack.c.l.b16 %v267
  %v1134 = vunpack.c.h.b16 %v267
  %v1135 = vunpack.c.l.b16 %v268
  %v1136 = vunpack.c.h.b16 %v268
  %v1137 = vunpack.c.l.b16 %v269
  %v1138 = vunpack.c.h.b16 %v269
  %v1139 = vunpack.c.l.b16 %v270
  %v1140 = vunpack.c.h.b16 %v270
  %v1141 = vunpack.c.l.b16 %v271
  %v1142 = vunpack.c.h.b16 %v271
  %v1143 = vunpack.c.l.b16 %v272
  %v1144 = vunpack.c.h.b16 %v272
  %v1145 = vunpack.c.l.b16 %v273
  %v1146 = vunpack.c.h.b16 %v273
  %v1147 = vunpack.c.l.b16 %v274
  %v1148 = vunpack.c.h.b16 %v274
  %v1149 = vunpack.c.l.b16 %v275
  %v1150 = vunpack.c.h.b16 %v275
  %v1151 = vunpack.c.l.b16 %v276
  %v1152 = vunpack.c.h.b16 %v276
  %v1153 = vunpack.c.l.b16 %v277
  %v1154 = vunpack.c.h.b16 %v277
  %v1155 = vunpack.c.l.b16 %v278
  %v1156 = vunpack.c.h.b16 %v278
  %v1157 = vunpack.c.l.b16 %v279
  %v1158 = vunpack.c.h.b16 %v279
  %v1159 = vunpack.c.l.b16 %v280
  %v1160 = vunpack.c.h.b16 %v280
  %v1161 = vunpack.c.l.b16 %v281
  %v1162 = vunpack.c.h.b16 %v281
  %v1163 = vunpack.c.l.b16 %v282
  %v1164 = vunpack.c.h.b16 %v282
  %v1165 = vunpack.c.l.b16 %v283
  %v1166 = vunpack.c.h.b16 %v283
  %v1167 = vunpack.c.l.b16 %v284
  %v1168 = vunpack.c.h.b16 %v284
  %v1169 = vunpack.c.l.b16 %v285
  %v1170 = vunpack.c.h.b16 %v285
  %v1171 = vunpack.c.l.b16 %v286
  %v1172 = vunpack.c.h.b16 %v286
  %v1173 = vunpack.c.l.b16 %v287
  %v1174 = vunpack.c.h.b16 %v287
  %v1175 = vunpack.c.l.b16 %v288
  %v1176 = vunpack.c.h.b16 %v288
  %v1177 = vunpack.c.l.b16 %v289
  %v1178 = vunpack.c.h.b16 %v289
  %v1179 = vunpack.c.l.b16 %v290
  %v1180 = vunpack.c.h.b16 %v290
  %v1181 = vunpack.c.l.b16 %v291
  %v1182 = vunpack.c.h.b16 %v291
  %v1183 = vunpack.c.l.b16 %v292
  %v1184 = vunpack.c.h.b16 %v292
  %v1185 = vunpack.c.l.b16 %v293
  %v1186 = vunpack.c.h.b16 %v293
  %v1187 = vunpack.c.l.b16 %v294
  %v1188 = vunpack.c.h.b16 %v294
  %v1189 = vunpack.c.l.b16 %v295
  %v1190 = vunpack.c.h.b16 %v295
  %v1191 = vunpack.c.l.b16 %v296
  %v1192 = vunpack.c.h.b16 %v296
  %v1193 = vunpack.c.l.b16 %v297
  %v1194 = vunpack.c.h.b16 %v297
  %v1195 = vunpack.c.l.b16 %v298
  %v1196 = vunpack.c.h.b16 %v298
  %v1197 = vunpack.c.l.b16 %v299
  %v1198 = vunpack.c.h.b16 %v299
  %v1199 = vunpack.c.l.b16 %v300
  %v1200 = vunpack.c.h.b16 %v300
  %v1201 = vunpack.c.l.b16 %v301
  %v1202 = vunpack.c.h.b16 %v301
  %v1203 = vunpack.c.l.b16 %v302
  %v1204 = vunpack.c.h.b16 %v302
  %v1205 = vunpack.c.l.b16 %v303
  %v1206 = vunpack.c.h.b16 %v303
  %v1207 = vunpack.c.l.b16 %v304
  %v1208 = vunpack.c.h.b16 %v304
  %v1209 = vunpack.c.l.b16 %v305
  %v1210 = vunpack.c.h.b16 %v305
  %v1211 = vunpack.c.l.b16 %v306
  %v1212 = vunpack.c.h.b16 %v306
  %v1213 = vunpack.c.l.b16 %v307
  %v1214 = vunpack.c.h.b16 %v307
  %v1215 = vunpack.c.l.b16 %v308
  %v1216 = vunpack.c.h.b16 %v308
  %v1217 = vunpack.c.l.b16 %v309
  %v1218 = vunpack.c.h.b16 %v309
  %v1219 = vunpack.c.l.b16 %v310
  %v1220 = vunpack.c.h.b16 %v310
  %v1221 = vunpack.c.l.b16 %v311
  %v1222 = vunpack.c.h.b16 %v311
  %v1223 = vunpack.c.l.b16 %v312
  %v1224 = vunpack.c.h.b16 %v312
  %v1225 = vunpack.c.l.b16 %v313
  %v1226 = vunpack.c.h.b16 %v313
  %v1227 = vunpack.c.l.b16 %v314
  %v1228 = vunpack.c.h.b16 %v314
  %v1229 = vunpack.c.l.b16 %v315
  %v1230 = vunpack.c.h.b16 %v315
  %v1231 = vunpack.c.l.b16 %v316
  %v1232 = vunpack.c.h.b16 %v316
  %v1233 = vunpack.c.l.b16 %v317
  %v1234 = vunpack.c.h.b16 %v317
  %v1235 = vpack.c.b16 %v665, %v659
  %v1236 = vpack.c.b16 %v666, %v660
  %v1237 = vpack.c.b16 %v667, %v661
  %v1238 = vpack.c.b16 %v668, %v662
  %v1239 = vpack.c.b16 %v669, %v663
  %v1240 = vpack.c.b16 %v670, %v664
  %v1241 = vpack.c.b16 %v677, %v671
  %v1242 = vpack.c.b16 %v678, %v672
  %v1243 = vpack.c.b16 %v679, %v673
  %v1244 = vpack.c.b16 %v680, %v674
  %v1245 = vpack.c.b16 %v681, %v675
  %v1246 = vpack.c.b16 %v682, %v676
  %v1247 = vpack.c.b16 %v689, %v683
  %v1248 = vpack.c.b16 %v690, %v684
  %v1249 = vpack.c.b16 %v691, %v685
  %v1250 = vpack.c.b16 %v692, %v686
  %v1251 = vpack.c.b16 %v693, %v687
  %v1252 = vpack.c.b16 %v694, %v688
  %v1253 = vpack.c.b16 %v701, %v695
  %v1254 = vpack.c.b16 %v702, %v696
  %v1255 = vpack.c.b16 %v703, %v697
  %v1256 = vpack.c.b16 %v704, %v698
  %v1257 = vpack.c.b16 %v705, %v699
  %v1258 = vpack.c.b16 %v706, %v700
  %v1259 = vpack.c.b16 %v713, %v707
  %v1260 = vpack.c.b16 %v714, %v708
  %v1261 = vpack.c.b16 %v715, %v709
  %v1262 = vpack.c.b16 %v716, %v710
  %v1263 = vpack.c.b16 %v717, %v711
  %v1264 = vpack.c.b16 %v718, %v712
  %v1265 = vpack.c.b16 %v725, %v719
  %v1266 = vpack.c.b16 %v726, %v720
  %v1267 = vpack.c.b16 %v727, %v721
  %v1268 = vpack.c.b16 %v728, %v722
  %v1269 = vpack.c.b16 %v729, %v723
  %v1270 = vpack.c.b16 %v730, %v724
  %v1271 = vpack.c.b16 %v737, %v731
  %v1272 = vpack.c.b16 %v738, %v732
  %v1273 = vpack.c.b16 %v739, %v733
  %v1274 = vpack.c.b16 %v740, %v734
  %v1275 = vpack.c.b16 %v741, %v735
  %v1276 = vpack.c.b16 %v742, %v736
  %v1277 = vpack.c.b16 %v749, %v743
  %v1278 = vpack.c.b16 %v750, %v744
  %v1279 = vpack.c.b16 %v751, %v745
  %v1280 = vpack.c.b16 %v752, %v746
  %v1281 = vpack.c.b16 %v753, %v747
  %v1282 = vpack.c.b16 %v754, %v748
  %v1283 = vpack.c.b16 %v761, %v755
  %v1284 = vpack.c.b16 %v762, %v756
  %v1285 = vpack.c.b16 %v763, %v757
  %v1286 = vpack.c.b16 %v764, %v758
  %v1287 = vpack.c.b16 %v765, %v759
  %v1288 = vpack.c.b16 %v766, %v760
  %v1289 = vpack.c.b16 %v773, %v767
  %v1290 = vpack.c.b16 %v774, %v768
  %v1291 = vpack.c.b16 %v775, %v769
  %v1292 = vpack.c.b16 %v776, %v770
  %v1293 = vpack.c.b16 %v777, %v771
  %v1294 = vpack.c.b16 %v778, %v772
  %v1295 = vpack.c.b16 %v785, %v779
  %v1296 = vpack.c.b16 %v786, %v780
  %v1297 = vpack.c.b16 %v787, %v781
  %v1298 = vpack.c.b16 %v788, %v782
  %v1299 = vpack.c.b16 %v789, %v783
  %v1300 = vpack.c.b16 %v790, %v784
  %v1301 = vpack.c.b16 %v797, %v791
  %v1302 = vpack.c.b16 %v798, %v792
  %v1303 = vpack.c.b16 %v799, %v793
  %v1304 = vpack.c.b16 %v800, %v794
  %v1305 = vpack.c.b16 %v801, %v795
  %v1306 = vpack.c.b16 %v802, %v796
  %v1307 = vpack.c.b16 %v809, %v803
  %v1308 = vpack.c.b16 %v810, %v804
  %v1309 = vpack.c.b16 %v811, %v805
  %v1310 = vpack.c.b16 %v812, %v806
  %v1311 = vpack.c.b16 %v813, %v807
  %v1312 = vpack.c.b16 %v814, %v808
  %v1313 = vpack.c.b16 %v821, %v815
  %v1314 = vpack.c.b16 %v822, %v816
  %v1315 = vpack.c.b16 %v823, %v817
  %v1316 = vpack.c.b16 %v824, %v818
  %v1317 = vpack.c.b16 %v825, %v819
  %v1318 = vpack.c.b16 %v826, %v820
  %v1319 = vpack.c.b16 %v833, %v827
  %v1320 = vpack.c.b16 %v834, %v828
  %v1321 = vpack.c.b16 %v835, %v829
  %v1322 = vpack.c.b16 %v836, %v830
  %v1323 = vpack.c.b16 %v837, %v831
  %v1324 = vpack.c.b16 %v838, %v832
  %v1325 = vpack.c.b16 %v845, %v839
  %v1326 = vpack.c.b16 %v846, %v840
  %v1327 = vpack.c.b16 %v847, %v841
  %v1328 = vpack.c.b16 %v848, %v842
  %v1329 = vpack.c.b16 %v849, %v843
  %v1330 = vpack.c.b16 %v850, %v844
  %v1331 = vpack.c.b16 %v857, %v851
  %v1332 = vpack.c.b16 %v858, %v852
  %v1333 = vpack.c.b16 %v859, %v853
  %v1334 = vpack.c.b16 %v860, %v854
  %v1335 = vpack.c.b16 %v861, %v855
  %v1336 = vpack.c.b16 %v862, %v856
  %v1337 = vpack.c.b16 %v869, %v863
  %v1338 = vpack.c.b16 %v870, %v864
  %v1339 = vpack.c.b16 %v871, %v865
  %v1340 = vpack.c.b16 %v872, %v866
  %v1341 = vpack.c.b16 %v873, %v867
  %v1342 = vpack.c.b16 %v874, %v868
  %v1343 = vpack.c.b16 %v881, %v875
  %v1344 = vpack.c.b16 %v882, %v876
  %v1345 = vpack.c.b16 %v883, %v877
  %v1346 = vpack.c.b16 %v884, %v878
  %v1347 = vpack.c.b16 %v885, %v879
  %v1348 = vpack.c.b16 %v886, %v880
  %v1349 = vpack.c.b16 %v893, %v887
  %v1350 = vpack.c.b16 %v894, %v888
  %v1351 = vpack.c.b16 %v895, %v889
  %v1352 = vpack.c.b16 %v896, %v890
  %v1353 = vpack.c.b16 %v897, %v891
  %v1354 = vpack.c.b16 %v898, %v892
  %v1355 = vpack.c.b16 %v905, %v899
  %v1356 = vpack.c.b16 %v906, %v900
  %v1357 = vpack.c.b16 %v907, %v901
  %v1358 = vpack.c.b16 %v908, %v902
  %v1359 = vpack.c.b16 %v909, %v903
  %v1360 = vpack.c.b16 %v910, %v904
  %v1361 = vpack.c.b16 %v917, %v911
  %v1362 = vpack.c.b16 %v918, %v912
  %v1363 = vpack.c.b16 %v919, %v913
  %v1364 = vpack.c.b16 %v920, %v914
  %v1365 = vpack.c.b16 %v921, %v915
  %v1366 = vpack.c.b16 %v922, %v916
  %v1367 = vpack.c.b16 %v929, %v923
  %v1368 = vpack.c.b16 %v930, %v924
  %v1369 = vpack.c.b16 %v931, %v925
  %v1370 = vpack.c.b16 %v932, %v926
  %v1371 = vpack.c.b16 %v933, %v927
  %v1372 = vpack.c.b16 %v934, %v928
  %v1373 = vpack.c.b16 %v941, %v935
  %v1374 = vpack.c.b16 %v942, %v936
  %v1375 = vpack.c.b16 %v943, %v937
  %v1376 = vpack.c.b16 %v944, %v938
  %v1377 = vpack.c.b16 %v945, %v939
  %v1378 = vpack.c.b16 %v946, %v940
  %v1379 = vpack.c.b16 %v953, %v947
  %v1380 = vpack.c.b16 %v954, %v948
  %v1381 = vpack.c.b16 %v955, %v949
  %v1382 = vpack.c.b16 %v956, %v950
  %v1383 = vpack.c.b16 %v957, %v951
  %v1384 = vpack.c.b16 %v958, %v952
  %v1385 = vpack.c.b16 %v965, %v959
  %v1386 = vpack.c.b16 %v966, %v960
  %v1387 = vpack.c.b16 %v967, %v961
  %v1388 = vpack.c.b16 %v968, %v962
  %v1389 = vpack.c.b16 %v969, %v963
  %v1390 = vpack.c.b16 %v970, %v964
  %v1391 = vpack.c.b16 %v977, %v971
  %v1392 = vpack.c.b16 %v978, %v972
  %v1393 = vpack.c.b16 %v979, %v973
  %v1394 = vpack.c.b16 %v980, %v974
  %v1395 = vpack.c.b16 %v981, %v975
  %v1396 = vpack.c.b16 %v982, %v976
  %v1397 = vpack.c.b16 %v989, %v983
  %v1398 = vpack.c.b16 %v990, %v984
  %v1399 = vpack.c.b16 %v991, %v985
  %v1400 = vpack.c.b16 %v992, %v986
  %v1401 = vpack.c.b16 %v993, %v987
  %v1402 = vpack.c.b16 %v994, %v988
  %v1403 = vpack.c.b16 %v1001, %v995
  %v1404 = vpack.c.b16 %v1002, %v996
  %v1405 = vpack.c.b16 %v1003, %v997
  %v1406 = vpack.c.b16 %v1004, %v998
  %v1407 = vpack.c.b16 %v1005, %v999
  %v1408 = vpack.c.b16 %v1006, %v1000
  %v1409 = vpack.c.b16 %v1013, %v1007
  %v1410 = vpack.c.b16 %v1014, %v1008
  %v1411 = vpack.c.b16 %v1015, %v1009
  %v1412 = vpack.c.b16 %v1016, %v1010
  %v1413 = vpack.c.b16 %v1017, %v1011
  %v1414 = vpack.c.b16 %v1018, %v1012
  %v1415 = vpack.c.b16 %v1025, %v1019
  %v1416 = vpack.c.b16 %v1026, %v1020
  %v1417 = vpack.c.b16 %v1027, %v1021
  %v1418 = vpack.c.b16 %v1028, %v1022
  %v1419 = vpack.c.b16 %v1029, %v1023
  %v1420 = vpack.c.b16 %v1030, %v1024
  %v1421 = vpack.c.b16 %v1037, %v1031
  %v1422 = vpack.c.b16 %v1038, %v1032
  %v1423 = vpack.c.b16 %v1039, %v1033
  %v1424 = vpack.c.b16 %v1040, %v1034
  %v1425 = vpack.c.b16 %v1041, %v1035
  %v1426 = vpack.c.b16 %v1042, %v1036
  %v1427 = vpack.c.b16 %v1049, %v1043
  %v1428 = vpack.c.b16 %v1050, %v1044
  %v1429 = vpack.c.b16 %v1051, %v1045
  %v1430 = vpack.c.b16 %v1052, %v1046
  %v1431 = vpack.c.b16 %v1053, %v1047
  %v1432 = vpack.c.b16 %v1054, %v1048
  %v1433 = vpack.c.b16 %v1061, %v1055
  %v1434 = vpack.c.b16 %v1062, %v1056
  %v1435 = vpack.c.b16 %v1063, %v1057
  %v1436 = vpack.c.b16 %v1064, %v1058
  %v1437 = vpack.c.b16 %v1065, %v1059
  %v1438 = vpack.c.b16 %v1066, %v1060
  %v1439 = vpack.c.b16 %v1073, %v1067
  %v1440 = vpack.c.b16 %v1074, %v1068
  %v1441 = vpack.c.b16 %v1075, %v1069
  %v1442 = vpack.c.b16 %v1076, %v1070
  %v1443 = vpack.c.b16 %v1077, %v1071
  %v1444 = vpack.c.b16 %v1078, %v1072
  %v1445 = vpack.c.b16 %v1085, %v1079
  %v1446 = vpack.c.b16 %v1086, %v1080
  %v1447 = vpack.c.b16 %v1087, %v1081
  %v1448 = vpack.c.b16 %v1088, %v1082
  %v1449 = vpack.c.b16 %v1089, %v1083
  %v1450 = vpack.c.b16 %v1090, %v1084
  %v1451 = vpack.c.b16 %v1097, %v1091
  %v1452 = vpack.c.b16 %v1098, %v1092
  %v1453 = vpack.c.b16 %v1099, %v1093
  %v1454 = vpack.c.b16 %v1100, %v1094
  %v1455 = vpack.c.b16 %v1101, %v1095
  %v1456 = vpack.c.b16 %v1102, %v1096
  %v1457 = vpack.c.b16 %v1109, %v1103
  %v1458 = vpack.c.b16 %v1110, %v1104
  %v1459 = vpack.c.b16 %v1111, %v1105
  %v1460 = vpack.c.b16 %v1112, %v1106
  %v1461 = vpack.c.b16 %v1113, %v1107
  %v1462 = vpack.c.b16 %v1114, %v1108
  %v1463 = vpack.c.b16 %v1121, %v1115
  %v1464 = vpack.c.b16 %v1122, %v1116
  %v1465 = vpack.c.b16 %v1123, %v1117
  %v1466 = vpack.c.b16 %v1124, %v1118
  %v1467 = vpack.c.b16 %v1125, %v1119
  %v1468 = vpack.c.b16 %v1126, %v1120
  %v1469 = vpack.c.b16 %v1133, %v1127
  %v1470 = vpack.c.b16 %v1134, %v1128
  %v1471 = vpack.c.b16 %v1135, %v1129
  %v1472 = vpack.c.b16 %v1136, %v1130
  %v1473 = vpack.c.b16 %v1137, %v1131
  %v1474 = vpack.c.b16 %v1138, %v1132
  %v1475 = vpack.c.b16 %v1145, %v1139
  %v1476 = vpack.c.b16 %v1146, %v1140
  %v1477 = vpack.c.b16 %v1147, %v1141
  %v1478 = vpack.c.b16 %v1148, %v1142
  %v1479 = vpack.c.b16 %v1149, %v1143
  %v1480 = vpack.c.b16 %v1150, %v1144
  %v1481 = vpack.c.b16 %v1157, %v1151
  %v1482 = vpack.c.b16 %v1158, %v1152
  %v1483 = vpack.c.b16 %v1159, %v1153
  %v1484 = vpack.c.b16 %v1160, %v1154
  %v1485 = vpack.c.b16 %v1161, %v1155
  %v1486 = vpack.c.b16 %v1162, %v1156
  %v1487 = vpack.c.b16 %v1169, %v1163
  %v1488 = vpack.c.b16 %v1170, %v1164
  %v1489 = vpack.c.b16 %v1171, %v1165
  %v1490 = vpack.c.b16 %v1172, %v1166
  %v1491 = vpack.c.b16 %v1173, %v1167
  %v1492 = vpack.c.b16 %v1174, %v1168
  %v1493 = vpack.c.b16 %v1181, %v1175
  %v1494 = vpack.c.b16 %v1182, %v1176
  %v1495 = vpack.c.b16 %v1183, %v1177
  %v1496 = vpack.c.b16 %v1184, %v1178
  %v1497 = vpack.c.b16 %v1185, %v1179
  %v1498 = vpack.c.b16 %v1186, %v1180
  %v1499 = vpack.c.b16 %v1193, %v1187
  %v1500 = vpack.c.b16 %v1194, %v1188
  %v1501 = vpack.c.b16 %v1195, %v1189
  %v1502 = vpack.c.b16 %v1196, %v1190
  %v1503 = vpack.c.b16 %v1197, %v1191
  %v1504 = vpack.c.b16 %v1198, %v1192
  %v1505 = vpack.c.b16 %v1205, %v1199
  %v1506 = vpack.c.b16 %v1206, %v1200
  %v1507 = vpack.c.b16 %v1207, %v1201
  %v1508 = vpack.c.b16 %v1208, %v1202
  %v1509 = vpack.c.b16 %v1209, %v1203
  %v1510 = vpack.c.b16 %v1210, %v1204
  %v1511 = vpack.c.b16 %v1217, %v1211
  %v1512 = vpack.c.b16 %v1218, %v1212
  %v1513 = vpack.c.b16 %v1219, %v1213
  %v1514 = vpack.c.b16 %v1220, %v1214
  %v1515 = vpack.c.b16 %v1221, %v1215
  %v1516 = vpack.c.b16 %v1222, %v1216
  %v1517 = vpack.c.b16 %v1229, %v1223
  %v1518 = vpack.c.b16 %v1230, %v1224
  %v1519 = vpack.c.b16 %v1231, %v1225
  %v1520 = vpack.c.b16 %v1232, %v1226
  %v1521 = vpack.c.b16 %v1233, %v1227
  %v1522 = vpack.c.b16 %v1234, %v1228
  %1811 = vmatprep.subr.bf16.mxu0 %v1236
  %1812 = vmatpush1.bf16.msra.mxu0 %v1235
  %1813 = vmatprep.subr.bf16.mxu0 %v1242
  %1814 = vmatpush1.bf16.msra.mxu0 %v1241
  %1815 = vmatprep.subr.bf16.mxu0 %v1248
  %1816 = vmatpush1.bf16.msra.mxu0 %v1247
  %1817 = vmatprep.subr.bf16.mxu0 %v1254
  %1818 = vmatpush1.bf16.msra.mxu0 %v1253
  %1819 = vmatprep.subr.bf16.mxu0 %v1260
  %1820 = vmatpush1.bf16.msra.mxu0 %v1259
  %1821 = vmatprep.subr.bf16.mxu0 %v1266
  %1822 = vmatpush1.bf16.msra.mxu0 %v1265
  %1823 = vmatprep.subr.bf16.mxu0 %v1272
  %1824 = vmatpush1.bf16.msra.mxu0 %v1271
  %1825 = vmatprep.subr.bf16.mxu0 %v1278
  %1826 = vmatpush1.bf16.msra.mxu0 %v1277
  %1827 = vmatprep.subr.bf16.mxu0 %v1284
  %1828 = vmatpush1.bf16.msra.mxu0 %v1283
  %1829 = vmatprep.subr.bf16.mxu0 %v1290
  %1830 = vmatpush1.bf16.msra.mxu0 %v1289
  %1831 = vmatprep.subr.bf16.mxu0 %v1296
  %1832 = vmatpush1.bf16.msra.mxu0 %v1295
  %1833 = vmatprep.subr.bf16.mxu0 %v1302
  %1834 = vmatpush1.bf16.msra.mxu0 %v1301
  %1835 = vmatprep.subr.bf16.mxu0 %v1308
  %1836 = vmatpush1.bf16.msra.mxu0 %v1307
  %1837 = vmatprep.subr.bf16.mxu0 %v1314
  %1838 = vmatpush1.bf16.msra.mxu0 %v1313
  %1839 = vmatprep.subr.bf16.mxu0 %v1320
  %1840 = vmatpush1.bf16.msra.mxu0 %v1319
  %1841 = vmatprep.subr.bf16.mxu0 %v1326
  %1842 = vmatpush1.bf16.msra.mxu0 %v1325
  %1843 = vmatprep.mubr.bf16.mxu0 %v360
  %1844 = vmatmul.mubr.bf16.gmra.mrb[0].mxu0 %v359
  %v1845 = vpop.f32.mrb[0].mxu0
  %v1846 = vadd.f32 %v323, %v1845
  %v1847 = vpop.f32.mrb[0].mxu0
  %v1848 = vadd.f32 %v327, %v1847
  %v1849 = vpop.f32.mrb[0].mxu0
  %v1850 = vpop.f32.mrb[0].mxu0
  %1851 = vdwg.mxu0
  %1852 = vmatprep.subr.bf16.mxu0 %v1332
  %1853 = vmatpush1.bf16.msra.mxu0 %v1331
  %1854 = vmatprep.subr.bf16.mxu0 %v1338
  %1855 = vmatpush1.bf16.msra.mxu0 %v1337
  %1856 = vmatprep.subr.bf16.mxu0 %v1344
  %1857 = vmatpush1.bf16.msra.mxu0 %v1343
  %1858 = vmatprep.subr.bf16.mxu0 %v1350
  %1859 = vmatpush1.bf16.msra.mxu0 %v1349
  %1860 = vmatprep.subr.bf16.mxu0 %v1356
  %1861 = vmatpush1.bf16.msra.mxu0 %v1355
  %1862 = vmatprep.subr.bf16.mxu0 %v1362
  %1863 = vmatpush1.bf16.msra.mxu0 %v1361
  %1864 = vmatprep.subr.bf16.mxu0 %v1368
  %1865 = vmatpush1.bf16.msra.mxu0 %v1367
  %1866 = vmatprep.subr.bf16.mxu0 %v1374
  %1867 = vmatpush1.bf16.msra.mxu0 %v1373
  %1868 = vmatprep.subr.bf16.mxu0 %v1380
  %1869 = vmatpush1.bf16.msra.mxu0 %v1379
  %1870 = vmatprep.subr.bf16.mxu0 %v1386
  %1871 = vmatpush1.bf16.msra.mxu0 %v1385
  %1872 = vmatprep.subr.bf16.mxu0 %v1392
  %1873 = vmatpush1.bf16.msra.mxu0 %v1391
  %1874 = vmatprep.subr.bf16.mxu0 %v1398
  %1875 = vmatpush1.bf16.msra.mxu0 %v1397
  %1876 = vmatprep.subr.bf16.mxu0 %v1404
  %1877 = vmatpush1.bf16.msra.mxu0 %v1403
  %1878 = vmatprep.subr.bf16.mxu0 %v1410
  %1879 = vmatpush1.bf16.msra.mxu0 %v1409
  %1880 = vmatprep.subr.bf16.mxu0 %v1416
  %1881 = vmatpush1.bf16.msra.mxu0 %v1415
  %1882 = vmatprep.subr.bf16.mxu0 %v1422
  %1883 = vmatpush1.bf16.msra.mxu0 %v1421
  %1884 = vmatprep.mubr.bf16.mxu0 %v362
  %1885 = vmatmul.mubr.bf16.gmra.mrb[0].mxu0 %v361
  %v1886 = vpop.f32.mrb[0].mxu0
  %v1887 = vadd.f32 %v1846, %v1886
  %v1888 = vpop.f32.mrb[0].mxu0
  %v1889 = vadd.f32 %v1848, %v1888
  %v1890 = vpop.f32.mrb[0].mxu0
  %v1891 = vpop.f32.mrb[0].mxu0
  %1892 = vdwg.mxu0
  %1893 = vmatprep.subr.bf16.mxu0 %v1428
  %1894 = vmatpush1.bf16.msra.mxu0 %v1427
  %1895 = vmatprep.subr.bf16.mxu0 %v1434
  %1896 = vmatpush1.bf16.msra.mxu0 %v1433
  %1897 = vmatprep.subr.bf16.mxu0 %v1440
  %1898 = vmatpush1.bf16.msra.mxu0 %v1439
  %1899 = vmatprep.subr.bf16.mxu0 %v1446
  %1900 = vmatpush1.bf16.msra.mxu0 %v1445
  %1901 = vmatprep.subr.bf16.mxu0 %v1452
  %1902 = vmatpush1.bf16.msra.mxu0 %v1451
  %1903 = vmatprep.subr.bf16.mxu0 %v1458
  %1904 = vmatpush1.bf16.msra.mxu0 %v1457
  %1905 = vmatprep.subr.bf16.mxu0 %v1464
  %1906 = vmatpush1.bf16.msra.mxu0 %v1463
  %1907 = vmatprep.subr.bf16.mxu0 %v1470
  %1908 = vmatpush1.bf16.msra.mxu0 %v1469
  %1909 = vmatprep.subr.bf16.mxu0 %v1476
  %1910 = vmatpush1.bf16.msra.mxu0 %v1475
  %1911 = vmatprep.subr.bf16.mxu0 %v1482
  %1912 = vmatpush1.bf16.msra.mxu0 %v1481
  %1913 = vmatprep.subr.bf16.mxu0 %v1488
  %1914 = vmatpush1.bf16.msra.mxu0 %v1487
  %1915 = vmatprep.subr.bf16.mxu0 %v1494
  %1916 = vmatpush1.bf16.msra.mxu0 %v1493
  %1917 = vmatprep.subr.bf16.mxu0 %v1500
  %1918 = vmatpush1.bf16.msra.mxu0 %v1499
  %1919 = vmatprep.subr.bf16.mxu0 %v1506
  %1920 = vmatpush1.bf16.msra.mxu0 %v1505
  %1921 = vmatprep.subr.bf16.mxu0 %v1512
  %1922 = vmatpush1.bf16.msra.mxu0 %v1511
  %1923 = vmatprep.subr.bf16.mxu0 %v1518
  %1924 = vmatpush1.bf16.msra.mxu0 %v1517
  %1925 = vmatprep.mubr.bf16.mxu0 %v364
  %1926 = vmatmul.mubr.bf16.gmra.mrb[0].mxu0 %v363
  %v1927 = vpop.f32.mrb[0].mxu0
  %v1928 = vadd.f32 %v1887, %v1927
  %v1929 = vpop.f32.mrb[0].mxu0
  %v1930 = vadd.f32 %v1889, %v1929
  %v1931 = vpop.f32.mrb[0].mxu0
  %v1932 = vpop.f32.mrb[0].mxu0
  %1933 = vdwg.mxu0
  %1934 = vmatprep.subr.bf16.mxu0 %v1238
  %1935 = vmatpush1.bf16.msra.mxu0 %v1237
  %1936 = vmatprep.subr.bf16.mxu0 %v1244
  %1937 = vmatpush1.bf16.msra.mxu0 %v1243
  %1938 = vmatprep.subr.bf16.mxu0 %v1250
  %1939 = vmatpush1.bf16.msra.mxu0 %v1249
  %1940 = vmatprep.subr.bf16.mxu0 %v1256
  %1941 = vmatpush1.bf16.msra.mxu0 %v1255
  %1942 = vmatprep.subr.bf16.mxu0 %v1262
  %1943 = vmatpush1.bf16.msra.mxu0 %v1261
  %1944 = vmatprep.subr.bf16.mxu0 %v1268
  %1945 = vmatpush1.bf16.msra.mxu0 %v1267
  %1946 = vmatprep.subr.bf16.mxu0 %v1274
  %1947 = vmatpush1.bf16.msra.mxu0 %v1273
  %1948 = vmatprep.subr.bf16.mxu0 %v1280
  %1949 = vmatpush1.bf16.msra.mxu0 %v1279
  %1950 = vmatprep.subr.bf16.mxu0 %v1286
  %1951 = vmatpush1.bf16.msra.mxu0 %v1285
  %1952 = vmatprep.subr.bf16.mxu0 %v1292
  %1953 = vmatpush1.bf16.msra.mxu0 %v1291
  %1954 = vmatprep.subr.bf16.mxu0 %v1298
  %1955 = vmatpush1.bf16.msra.mxu0 %v1297
  %1956 = vmatprep.subr.bf16.mxu0 %v1304
  %1957 = vmatpush1.bf16.msra.mxu0 %v1303
  %1958 = vmatprep.subr.bf16.mxu0 %v1310
  %1959 = vmatpush1.bf16.msra.mxu0 %v1309
  %1960 = vmatprep.subr.bf16.mxu0 %v1316
  %1961 = vmatpush1.bf16.msra.mxu0 %v1315
  %1962 = vmatprep.subr.bf16.mxu0 %v1322
  %1963 = vmatpush1.bf16.msra.mxu0 %v1321
  %1964 = vmatprep.subr.bf16.mxu0 %v1328
  %1965 = vmatpush1.bf16.msra.mxu0 %v1327
  %1966 = vmatprep.mubr.bf16.mxu0 %v360
  %1967 = vmatmul.mubr.bf16.gmra.mrb[0].mxu0 %v359
  %v1968 = vpop.f32.mrb[0].mxu0
  %v1969 = vadd.f32 %v331, %v1968
  %v1970 = vpop.f32.mrb[0].mxu0
  %v1971 = vadd.f32 %v335, %v1970
  %v1972 = vpop.f32.mrb[0].mxu0
  %v1973 = vpop.f32.mrb[0].mxu0
  %1974 = vdwg.mxu0
  %1975 = vmatprep.subr.bf16.mxu0 %v1334
  %1976 = vmatpush1.bf16.msra.mxu0 %v1333
  %1977 = vmatprep.subr.bf16.mxu0 %v1340
  %1978 = vmatpush1.bf16.msra.mxu0 %v1339
  %1979 = vmatprep.subr.bf16.mxu0 %v1346
  %1980 = vmatpush1.bf16.msra.mxu0 %v1345
  %1981 = vmatprep.subr.bf16.mxu0 %v1352
  %1982 = vmatpush1.bf16.msra.mxu0 %v1351
  %1983 = vmatprep.subr.bf16.mxu0 %v1358
  %1984 = vmatpush1.bf16.msra.mxu0 %v1357
  %1985 = vmatprep.subr.bf16.mxu0 %v1364
  %1986 = vmatpush1.bf16.msra.mxu0 %v1363
  %1987 = vmatprep.subr.bf16.mxu0 %v1370
  %1988 = vmatpush1.bf16.msra.mxu0 %v1369
  %1989 = vmatprep.subr.bf16.mxu0 %v1376
  %1990 = vmatpush1.bf16.msra.mxu0 %v1375
  %1991 = vmatprep.subr.bf16.mxu0 %v1382
  %1992 = vmatpush1.bf16.msra.mxu0 %v1381
  %1993 = vmatprep.subr.bf16.mxu0 %v1388
  %1994 = vmatpush1.bf16.msra.mxu0 %v1387
  %1995 = vmatprep.subr.bf16.mxu0 %v1394
  %1996 = vmatpush1.bf16.msra.mxu0 %v1393
  %1997 = vmatprep.subr.bf16.mxu0 %v1400
  %1998 = vmatpush1.bf16.msra.mxu0 %v1399
  %1999 = vmatprep.subr.bf16.mxu0 %v1406
  %2000 = vmatpush1.bf16.msra.mxu0 %v1405
  %2001 = vmatprep.subr.bf16.mxu0 %v1412
  %2002 = vmatpush1.bf16.msra.mxu0 %v1411
  %2003 = vmatprep.subr.bf16.mxu0 %v1418
  %2004 = vmatpush1.bf16.msra.mxu0 %v1417
  %2005 = vmatprep.subr.bf16.mxu0 %v1424
  %2006 = vmatpush1.bf16.msra.mxu0 %v1423
  %2007 = vmatprep.mubr.bf16.mxu0 %v362
  %2008 = vmatmul.mubr.bf16.gmra.mrb[0].mxu0 %v361
  %v2009 = vpop.f32.mrb[0].mxu0
  %v2010 = vadd.f32 %v1969, %v2009
  %v2011 = vpop.f32.mrb[0].mxu0
  %v2012 = vadd.f32 %v1971, %v2011
  %v2013 = vpop.f32.mrb[0].mxu0
  %v2014 = vpop.f32.mrb[0].mxu0
  %2015 = vdwg.mxu0
  %2016 = vmatprep.subr.bf16.mxu0 %v1430
  %2017 = vmatpush1.bf16.msra.mxu0 %v1429
  %2018 = vmatprep.subr.bf16.mxu0 %v1436
  %2019 = vmatpush1.bf16.msra.mxu0 %v1435
  %2020 = vmatprep.subr.bf16.mxu0 %v1442
  %2021 = vmatpush1.bf16.msra.mxu0 %v1441
  %2022 = vmatprep.subr.bf16.mxu0 %v1448
  %2023 = vmatpush1.bf16.msra.mxu0 %v1447
  %2024 = vmatprep.subr.bf16.mxu0 %v1454
  %2025 = vmatpush1.bf16.msra.mxu0 %v1453
  %2026 = vmatprep.subr.bf16.mxu0 %v1460
  %2027 = vmatpush1.bf16.msra.mxu0 %v1459
  %2028 = vmatprep.subr.bf16.mxu0 %v1466
  %2029 = vmatpush1.bf16.msra.mxu0 %v1465
  %2030 = vmatprep.subr.bf16.mxu0 %v1472
  %2031 = vmatpush1.bf16.msra.mxu0 %v1471
  %2032 = vmatprep.subr.bf16.mxu0 %v1478
  %2033 = vmatpush1.bf16.msra.mxu0 %v1477
  %2034 = vmatprep.subr.bf16.mxu0 %v1484
  %2035 = vmatpush1.bf16.msra.mxu0 %v1483
  %2036 = vmatprep.subr.bf16.mxu0 %v1490
  %2037 = vmatpush1.bf16.msra.mxu0 %v1489
  %2038 = vmatprep.subr.bf16.mxu0 %v1496
  %2039 = vmatpush1.bf16.msra.mxu0 %v1495
  %2040 = vmatprep.subr.bf16.mxu0 %v1502
  %2041 = vmatpush1.bf16.msra.mxu0 %v1501
  %2042 = vmatprep.subr.bf16.mxu0 %v1508
  %2043 = vmatpush1.bf16.msra.mxu0 %v1507
  %2044 = vmatprep.subr.bf16.mxu0 %v1514
  %2045 = vmatpush1.bf16.msra.mxu0 %v1513
  %2046 = vmatprep.subr.bf16.mxu0 %v1520
  %2047 = vmatpush1.bf16.msra.mxu0 %v1519
  %2048 = vmatprep.mubr.bf16.mxu0 %v364
  %2049 = vmatmul.mubr.bf16.gmra.mrb[0].mxu0 %v363
  %v2050 = vpop.f32.mrb[0].mxu0
  %v2051 = vadd.f32 %v2010, %v2050
  %v2052 = vpop.f32.mrb[0].mxu0
  %v2053 = vadd.f32 %v2012, %v2052
  %v2054 = vpop.f32.mrb[0].mxu0
  %v2055 = vpop.f32.mrb[0].mxu0
  %2056 = vdwg.mxu0
  %2057 = vmatprep.subr.bf16.mxu0 %v1240
  %2058 = vmatpush1.bf16.msra.mxu0 %v1239
  %2059 = vmatprep.subr.bf16.mxu0 %v1246
  %2060 = vmatpush1.bf16.msra.mxu0 %v1245
  %2061 = vmatprep.subr.bf16.mxu0 %v1252
  %2062 = vmatpush1.bf16.msra.mxu0 %v1251
  %2063 = vmatprep.subr.bf16.mxu0 %v1258
  %2064 = vmatpush1.bf16.msra.mxu0 %v1257
  %2065 = vmatprep.subr.bf16.mxu0 %v1264
  %2066 = vmatpush1.bf16.msra.mxu0 %v1263
  %2067 = vmatprep.subr.bf16.mxu0 %v1270
  %2068 = vmatpush1.bf16.msra.mxu0 %v1269
  %2069 = vmatprep.subr.bf16.mxu0 %v1276
  %2070 = vmatpush1.bf16.msra.mxu0 %v1275
  %2071 = vmatprep.subr.bf16.mxu0 %v1282
  %2072 = vmatpush1.bf16.msra.mxu0 %v1281
  %2073 = vmatprep.subr.bf16.mxu0 %v1288
  %2074 = vmatpush1.bf16.msra.mxu0 %v1287
  %2075 = vmatprep.subr.bf16.mxu0 %v1294
  %2076 = vmatpush1.bf16.msra.mxu0 %v1293
  %2077 = vmatprep.subr.bf16.mxu0 %v1300
  %2078 = vmatpush1.bf16.msra.mxu0 %v1299
  %2079 = vmatprep.subr.bf16.mxu0 %v1306
  %2080 = vmatpush1.bf16.msra.mxu0 %v1305
  %2081 = vmatprep.subr.bf16.mxu0 %v1312
  %2082 = vmatpush1.bf16.msra.mxu0 %v1311
  %2083 = vmatprep.subr.bf16.mxu0 %v1318
  %2084 = vmatpush1.bf16.msra.mxu0 %v1317
  %2085 = vmatprep.subr.bf16.mxu0 %v1324
  %2086 = vmatpush1.bf16.msra.mxu0 %v1323
  %2087 = vmatprep.subr.bf16.mxu0 %v1330
  %2088 = vmatpush1.bf16.msra.mxu0 %v1329
  %2089 = vmatprep.mubr.bf16.mxu0 %v360
  %2090 = vmatmul.mubr.bf16.gmra.mrb[0].mxu0 %v359
  %v2091 = vpop.f32.mrb[0].mxu0
  %v2092 = vadd.f32 %v339, %v2091
  %v2093 = vpop.f32.mrb[0].mxu0
  %v2094 = vadd.f32 %v343, %v2093
  %v2095 = vpop.f32.mrb[0].mxu0
  %v2096 = vpop.f32.mrb[0].mxu0
  %2097 = vdwg.mxu0
  %2098 = vmatprep.subr.bf16.mxu0 %v1336
  %2099 = vmatpush1.bf16.msra.mxu0 %v1335
  %2100 = vmatprep.subr.bf16.mxu0 %v1342
  %2101 = vmatpush1.bf16.msra.mxu0 %v1341
  %2102 = vmatprep.subr.bf16.mxu0 %v1348
  %2103 = vmatpush1.bf16.msra.mxu0 %v1347
  %2104 = vmatprep.subr.bf16.mxu0 %v1354
  %2105 = vmatpush1.bf16.msra.mxu0 %v1353
  %2106 = vmatprep.subr.bf16.mxu0 %v1360
  %2107 = vmatpush1.bf16.msra.mxu0 %v1359
  %2108 = vmatprep.subr.bf16.mxu0 %v1366
  %2109 = vmatpush1.bf16.msra.mxu0 %v1365
  %2110 = vmatprep.subr.bf16.mxu0 %v1372
  %2111 = vmatpush1.bf16.msra.mxu0 %v1371
  %2112 = vmatprep.subr.bf16.mxu0 %v1378
  %2113 = vmatpush1.bf16.msra.mxu0 %v1377
  %2114 = vmatprep.subr.bf16.mxu0 %v1384
  %2115 = vmatpush1.bf16.msra.mxu0 %v1383
  %2116 = vmatprep.subr.bf16.mxu0 %v1390
  %2117 = vmatpush1.bf16.msra.mxu0 %v1389
  %2118 = vmatprep.subr.bf16.mxu0 %v1396
  %2119 = vmatpush1.bf16.msra.mxu0 %v1395
  %2120 = vmatprep.subr.bf16.mxu0 %v1402
  %2121 = vmatpush1.bf16.msra.mxu0 %v1401
  %2122 = vmatprep.subr.bf16.mxu0 %v1408
  %2123 = vmatpush1.bf16.msra.mxu0 %v1407
  %2124 = vmatprep.subr.bf16.mxu0 %v1414
  %2125 = vmatpush1.bf16.msra.mxu0 %v1413
  %2126 = vmatprep.subr.bf16.mxu0 %v1420
  %2127 = vmatpush1.bf16.msra.mxu0 %v1419
  %2128 = vmatprep.subr.bf16.mxu0 %v1426
  %2129 = vmatpush1.bf16.msra.mxu0 %v1425
  %2130 = vmatprep.mubr.bf16.mxu0 %v362
  %2131 = vmatmul.mubr.bf16.gmra.mrb[0].mxu0 %v361
  %v2132 = vpop.f32.mrb[0].mxu0
  %v2133 = vadd.f32 %v2092, %v2132
  %v2134 = vpop.f32.mrb[0].mxu0
  %v2135 = vadd.f32 %v2094, %v2134
  %v2136 = vpop.f32.mrb[0].mxu0
  %v2137 = vpop.f32.mrb[0].mxu0
  %2138 = vdwg.mxu0
  %2139 = vmatprep.subr.bf16.mxu0 %v1432
  %2140 = vmatpush1.bf16.msra.mxu0 %v1431
  %2141 = vmatprep.subr.bf16.mxu0 %v1438
  %2142 = vmatpush1.bf16.msra.mxu0 %v1437
  %2143 = vmatprep.subr.bf16.mxu0 %v1444
  %2144 = vmatpush1.bf16.msra.mxu0 %v1443
  %2145 = vmatprep.subr.bf16.mxu0 %v1450
  %2146 = vmatpush1.bf16.msra.mxu0 %v1449
  %2147 = vmatprep.subr.bf16.mxu0 %v1456
  %2148 = vmatpush1.bf16.msra.mxu0 %v1455
  %2149 = vmatprep.subr.bf16.mxu0 %v1462
  %2150 = vmatpush1.bf16.msra.mxu0 %v1461
  %2151 = vmatprep.subr.bf16.mxu0 %v1468
  %2152 = vmatpush1.bf16.msra.mxu0 %v1467
  %2153 = vmatprep.subr.bf16.mxu0 %v1474
  %2154 = vmatpush1.bf16.msra.mxu0 %v1473
  %2155 = vmatprep.subr.bf16.mxu0 %v1480
  %2156 = vmatpush1.bf16.msra.mxu0 %v1479
  %2157 = vmatprep.subr.bf16.mxu0 %v1486
  %2158 = vmatpush1.bf16.msra.mxu0 %v1485
  %2159 = vmatprep.subr.bf16.mxu0 %v1492
  %2160 = vmatpush1.bf16.msra.mxu0 %v1491
  %2161 = vmatprep.subr.bf16.mxu0 %v1498
  %2162 = vmatpush1.bf16.msra.mxu0 %v1497
  %2163 = vmatprep.subr.bf16.mxu0 %v1504
  %2164 = vmatpush1.bf16.msra.mxu0 %v1503
  %2165 = vmatprep.subr.bf16.mxu0 %v1510
  %2166 = vmatpush1.bf16.msra.mxu0 %v1509
  %2167 = vmatprep.subr.bf16.mxu0 %v1516
  %2168 = vmatpush1.bf16.msra.mxu0 %v1515
  %2169 = vmatprep.subr.bf16.mxu0 %v1522
  %2170 = vmatpush1.bf16.msra.mxu0 %v1521
  %2171 = vmatprep.mubr.bf16.mxu0 %v364
  %2172 = vmatmul.mubr.bf16.gmra.mrb[0].mxu0 %v363
  %v2173 = vpop.f32.mrb[0].mxu0
  %v2174 = vadd.f32 %v2133, %v2173
  %v2175 = vpop.f32.mrb[0].mxu0
  %v2176 = vadd.f32 %v2135, %v2175
  %v2177 = vpop.f32.mrb[0].mxu0
  %v2178 = vpop.f32.mrb[0].mxu0
  %2179 = vdwg.mxu0
  %v2180 = vmax.f32 %v1928, 0.0
  %v2181 = vmax.f32 %v1930, 0.0
  %v2182 = vmax.f32 %v2051, 0.0
  %v2183 = vmax.f32 %v2053, 0.0
  %v2184 = vmax.f32 %v2174, 0.0
  %v2185 = vmax.f32 %v2176, 0.0
  %v2186 = vpack.c.bf16 %v2180, %v2180
  %v2187 = vpack.c.bf16 %v2181, %v2181
  %v2188 = vpack.c.bf16 %v2182, %v2182
  %v2189 = vpack.c.bf16 %v2183, %v2183
  %v2190 = vpack.c.bf16 %v2184, %v2184
  %v2191 = vpack.c.bf16 %v2185, %v2185
  %v2192 = vld [vmem:[%s3] sm:$0xff]
  %v2193 = vld [vmem:[%s3 + $0x8] sm:$0xff]
  %v2194 = vld [vmem:[%s3 + $0x10] sm:$0xff]
  %v2195 = vld [vmem:[%s3 + $0x18] sm:$0xff]
  %v2196 = vld [vmem:[%s3 + $0x20] sm:$0xff]
  %v2197 = vld [vmem:[%s3 + $0x28] sm:$0xff]
  %v2198 = vld [vmem:[%s3 + $0x30] sm:$0xff]
  %v2199 = vld [vmem:[%s3 + $0x38] sm:$0xff]
  %v2200 = vld [vmem:[%s3 + $0x40] sm:$0xff]
  %v2201 = vld [vmem:[%s3 + $0x48] sm:$0xff]
  %v2202 = vld [vmem:[%s3 + $0x50] sm:$0xff]
  %v2203 = vld [vmem:[%s3 + $0x58] sm:$0xff]
  %v2204 = vld [vmem:[%s3 + $0x60] sm:$0xff]
  %v2205 = vld [vmem:[%s3 + $0x68] sm:$0xff]
  %v2206 = vld [vmem:[%s3 + $0x70] sm:$0xff]
  %v2207 = vld [vmem:[%s3 + $0x78] sm:$0xff]
  %v2208 = vld [vmem:[%s3 + $0x80] sm:$0xff]
  %v2209 = vld [vmem:[%s3 + $0x88] sm:$0xff]
  %v2210 = vld [vmem:[%s3 + $0x90] sm:$0xff]
  %v2211 = vld [vmem:[%s3 + $0x98] sm:$0xff]
  %v2212 = vld [vmem:[%s3 + $0xa0] sm:$0xff]
  %v2213 = vld [vmem:[%s3 + $0xa8] sm:$0xff]
  %v2214 = vld [vmem:[%s3 + $0xb0] sm:$0xff]
  %v2215 = vld [vmem:[%s3 + $0xb8] sm:$0xff]
  %v2216 = vld [vmem:[%s3 + $0xc0] sm:$0xff]
  %v2217 = vld [vmem:[%s3 + $0xc8] sm:$0xff]
  %v2218 = vld [vmem:[%s3 + $0xd0] sm:$0xff]
  %v2219 = vld [vmem:[%s3 + $0xd8] sm:$0xff]
  %v2220 = vld [vmem:[%s3 + $0xe0] sm:$0xff]
  %v2221 = vld [vmem:[%s3 + $0xe8] sm:$0xff]
  %v2222 = vld [vmem:[%s3 + $0xf0] sm:$0xff]
  %v2223 = vld [vmem:[%s3 + $0xf8] sm:$0xff]
  %v2224 = vld [vmem:[%s3 + $0x100] sm:$0xff]
  %v2225 = vld [vmem:[%s3 + $0x108] sm:$0xff]
  %v2226 = vld [vmem:[%s3 + $0x110] sm:$0xff]
  %v2227 = vld [vmem:[%s3 + $0x118] sm:$0xff]
  %v2228 = vld [vmem:[%s3 + $0x120] sm:$0xff]
  %v2229 = vld [vmem:[%s3 + $0x128] sm:$0xff]
  %v2230 = vld [vmem:[%s3 + $0x130] sm:$0xff]
  %v2231 = vld [vmem:[%s3 + $0x138] sm:$0xff]
  %v2232 = vld [vmem:[%s3 + $0x140] sm:$0xff]
  %v2233 = vld [vmem:[%s3 + $0x148] sm:$0xff]
  %v2234 = vld [vmem:[%s3 + $0x150] sm:$0xff]
  %v2235 = vld [vmem:[%s3 + $0x158] sm:$0xff]
  %v2236 = vld [vmem:[%s3 + $0x160] sm:$0xff]
  %v2237 = vld [vmem:[%s3 + $0x168] sm:$0xff]
  %v2238 = vld [vmem:[%s3 + $0x170] sm:$0xff]
  %v2239 = vld [vmem:[%s3 + $0x178] sm:$0xff]
  %v2240 = vld [vmem:[%s3 + $0x180] sm:$0xff]
  %v2241 = vld [vmem:[%s3 + $0x188] sm:$0xff]
  %v2242 = vld [vmem:[%s3 + $0x190] sm:$0xff]
  %v2243 = vld [vmem:[%s3 + $0x198] sm:$0xff]
  %v2244 = vld [vmem:[%s3 + $0x1a0] sm:$0xff]
  %v2245 = vld [vmem:[%s3 + $0x1a8] sm:$0xff]
  %v2246 = vld [vmem:[%s3 + $0x1b0] sm:$0xff]
  %v2247 = vld [vmem:[%s3 + $0x1b8] sm:$0xff]
  %v2248 = vld [vmem:[%s3 + $0x1c0] sm:$0xff]
  %v2249 = vld [vmem:[%s3 + $0x1c8] sm:$0xff]
  %v2250 = vld [vmem:[%s3 + $0x1d0] sm:$0xff]
  %v2251 = vld [vmem:[%s3 + $0x1d8] sm:$0xff]
  %v2252 = vld [vmem:[%s3 + $0x1e0] sm:$0xff]
  %v2253 = vld [vmem:[%s3 + $0x1e8] sm:$0xff]
  %v2254 = vld [vmem:[%s3 + $0x1f0] sm:$0xff]
  %v2255 = vld [vmem:[%s3 + $0x1f8] sm:$0xff]
  %v2256 = vld [vmem:[%s3 + $0x200] sm:$0xff]
  %v2257 = vld [vmem:[%s3 + $0x208] sm:$0xff]
  %v2258 = vld [vmem:[%s3 + $0x210] sm:$0xff]
  %v2259 = vld [vmem:[%s3 + $0x218] sm:$0xff]
  %v2260 = vld [vmem:[%s3 + $0x220] sm:$0xff]
  %v2261 = vld [vmem:[%s3 + $0x228] sm:$0xff]
  %v2262 = vld [vmem:[%s3 + $0x230] sm:$0xff]
  %v2263 = vld [vmem:[%s3 + $0x238] sm:$0xff]
  %v2264 = vld [vmem:[%s3 + $0x240] sm:$0xff]
  %v2265 = vld [vmem:[%s3 + $0x248] sm:$0xff]
  %v2266 = vld [vmem:[%s3 + $0x250] sm:$0xff]
  %v2267 = vld [vmem:[%s3 + $0x258] sm:$0xff]
  %v2268 = vld [vmem:[%s3 + $0x260] sm:$0xff]
  %v2269 = vld [vmem:[%s3 + $0x268] sm:$0xff]
  %v2270 = vld [vmem:[%s3 + $0x270] sm:$0xff]
  %v2271 = vld [vmem:[%s3 + $0x278] sm:$0xff]
  %v2272 = vld [vmem:[%s3 + $0x280] sm:$0xff]
  %v2273 = vld [vmem:[%s3 + $0x288] sm:$0xff]
  %v2274 = vld [vmem:[%s3 + $0x290] sm:$0xff]
  %v2275 = vld [vmem:[%s3 + $0x298] sm:$0xff]
  %v2276 = vld [vmem:[%s3 + $0x2a0] sm:$0xff]
  %v2277 = vld [vmem:[%s3 + $0x2a8] sm:$0xff]
  %v2278 = vld [vmem:[%s3 + $0x2b0] sm:$0xff]
  %v2279 = vld [vmem:[%s3 + $0x2b8] sm:$0xff]
  %v2280 = vld [vmem:[%s3 + $0x2c0] sm:$0xff]
  %v2281 = vld [vmem:[%s3 + $0x2c8] sm:$0xff]
  %v2282 = vld [vmem:[%s3 + $0x2d0] sm:$0xff]
  %v2283 = vld [vmem:[%s3 + $0x2d8] sm:$0xff]
  %v2284 = vld [vmem:[%s3 + $0x2e0] sm:$0xff]
  %v2285 = vld [vmem:[%s3 + $0x2e8] sm:$0xff]
  %v2286 = vld [vmem:[%s3 + $0x2f0] sm:$0xff]
  %v2287 = vld [vmem:[%s3 + $0x2f8] sm:$0xff]
  %v2288 = vld [vmem:[%s3 + $0x300] sm:$0xff]
  %v2289 = vld [vmem:[%s3 + $0x308] sm:$0xff]
  %v2290 = vld [vmem:[%s3 + $0x310] sm:$0xff]
  %v2291 = vld [vmem:[%s3 + $0x318] sm:$0xff]
  %v2292 = vld [vmem:[%s3 + $0x320] sm:$0xff]
  %v2293 = vld [vmem:[%s3 + $0x328] sm:$0xff]
  %v2294 = vld [vmem:[%s3 + $0x330] sm:$0xff]
  %v2295 = vld [vmem:[%s3 + $0x338] sm:$0xff]
  %v2296 = vld [vmem:[%s3 + $0x340] sm:$0xff]
  %v2297 = vld [vmem:[%s3 + $0x348] sm:$0xff]
  %v2298 = vld [vmem:[%s3 + $0x350] sm:$0xff]
  %v2299 = vld [vmem:[%s3 + $0x358] sm:$0xff]
  %v2300 = vld [vmem:[%s3 + $0x360] sm:$0xff]
  %v2301 = vld [vmem:[%s3 + $0x368] sm:$0xff]
  %v2302 = vld [vmem:[%s3 + $0x370] sm:$0xff]
  %v2303 = vld [vmem:[%s3 + $0x378] sm:$0xff]
  %v2304 = vld [vmem:[%s3 + $0x380] sm:$0xff]
  %v2305 = vld [vmem:[%s3 + $0x388] sm:$0xff]
  %v2306 = vld [vmem:[%s3 + $0x390] sm:$0xff]
  %v2307 = vld [vmem:[%s3 + $0x398] sm:$0xff]
  %v2308 = vld [vmem:[%s3 + $0x3a0] sm:$0xff]
  %v2309 = vld [vmem:[%s3 + $0x3a8] sm:$0xff]
  %v2310 = vld [vmem:[%s3 + $0x3b0] sm:$0xff]
  %v2311 = vld [vmem:[%s3 + $0x3b8] sm:$0xff]
  %v2312 = vld [vmem:[%s3 + $0x3c0] sm:$0xff]
  %v2313 = vld [vmem:[%s3 + $0x3c8] sm:$0xff]
  %v2314 = vld [vmem:[%s3 + $0x3d0] sm:$0xff]
  %v2315 = vld [vmem:[%s3 + $0x3d8] sm:$0xff]
  %v2316 = vld [vmem:[%s3 + $0x3e0] sm:$0xff]
  %v2317 = vld [vmem:[%s3 + $0x3e8] sm:$0xff]
  %v2318 = vld [vmem:[%s3 + $0x3f0] sm:$0xff]
  %v2319 = vld [vmem:[%s3 + $0x3f8] sm:$0xff]
  %v2320 = vld [vmem:[%s3 + $0x400] sm:$0xff]
  %v2321 = vld [vmem:[%s3 + $0x408] sm:$0xff]
  %v2322 = vld [vmem:[%s3 + $0x410] sm:$0xff]
  %v2323 = vld [vmem:[%s3 + $0x418] sm:$0xff]
  %v2324 = vld [vmem:[%s3 + $0x420] sm:$0xff]
  %v2325 = vld [vmem:[%s3 + $0x428] sm:$0xff]
  %v2326 = vld [vmem:[%s3 + $0x430] sm:$0xff]
  %v2327 = vld [vmem:[%s3 + $0x438] sm:$0xff]
  %v2328 = vld [vmem:[%s3 + $0x440] sm:$0xff]
  %v2329 = vld [vmem:[%s3 + $0x448] sm:$0xff]
  %v2330 = vld [vmem:[%s3 + $0x450] sm:$0xff]
  %v2331 = vld [vmem:[%s3 + $0x458] sm:$0xff]
  %v2332 = vld [vmem:[%s3 + $0x460] sm:$0xff]
  %v2333 = vld [vmem:[%s3 + $0x468] sm:$0xff]
  %v2334 = vld [vmem:[%s3 + $0x470] sm:$0xff]
  %v2335 = vld [vmem:[%s3 + $0x478] sm:$0xff]
  %v2336 = vld [vmem:[%s3 + $0x480] sm:$0xff]
  %v2337 = vld [vmem:[%s3 + $0x488] sm:$0xff]
  %v2338 = vld [vmem:[%s3 + $0x490] sm:$0xff]
  %v2339 = vld [vmem:[%s3 + $0x498] sm:$0xff]
  %v2340 = vld [vmem:[%s3 + $0x4a0] sm:$0xff]
  %v2341 = vld [vmem:[%s3 + $0x4a8] sm:$0xff]
  %v2342 = vld [vmem:[%s3 + $0x4b0] sm:$0xff]
  %v2343 = vld [vmem:[%s3 + $0x4b8] sm:$0xff]
  %v2344 = vld [vmem:[%s3 + $0x4c0] sm:$0xff]
  %v2345 = vld [vmem:[%s3 + $0x4c8] sm:$0xff]
  %v2346 = vld [vmem:[%s3 + $0x4d0] sm:$0xff]
  %v2347 = vld [vmem:[%s3 + $0x4d8] sm:$0xff]
  %v2348 = vld [vmem:[%s3 + $0x4e0] sm:$0xff]
  %v2349 = vld [vmem:[%s3 + $0x4e8] sm:$0xff]
  %v2350 = vld [vmem:[%s3 + $0x4f0] sm:$0xff]
  %v2351 = vld [vmem:[%s3 + $0x4f8] sm:$0xff]
  %v2352 = vld [vmem:[%s3 + $0x500] sm:$0xff]
  %v2353 = vld [vmem:[%s3 + $0x508] sm:$0xff]
  %v2354 = vld [vmem:[%s3 + $0x510] sm:$0xff]
  %v2355 = vld [vmem:[%s3 + $0x518] sm:$0xff]
  %v2356 = vld [vmem:[%s3 + $0x520] sm:$0xff]
  %v2357 = vld [vmem:[%s3 + $0x528] sm:$0xff]
  %v2358 = vld [vmem:[%s3 + $0x530] sm:$0xff]
  %v2359 = vld [vmem:[%s3 + $0x538] sm:$0xff]
  %v2360 = vld [vmem:[%s3 + $0x540] sm:$0xff]
  %v2361 = vld [vmem:[%s3 + $0x548] sm:$0xff]
  %v2362 = vld [vmem:[%s3 + $0x550] sm:$0xff]
  %v2363 = vld [vmem:[%s3 + $0x558] sm:$0xff]
  %v2364 = vld [vmem:[%s3 + $0x560] sm:$0xff]
  %v2365 = vld [vmem:[%s3 + $0x568] sm:$0xff]
  %v2366 = vld [vmem:[%s3 + $0x570] sm:$0xff]
  %v2367 = vld [vmem:[%s3 + $0x578] sm:$0xff]
  %v2368 = vld [vmem:[%s3 + $0x580] sm:$0xff]
  %v2369 = vld [vmem:[%s3 + $0x588] sm:$0xff]
  %v2370 = vld [vmem:[%s3 + $0x590] sm:$0xff]
  %v2371 = vld [vmem:[%s3 + $0x598] sm:$0xff]
  %v2372 = vld [vmem:[%s3 + $0x5a0] sm:$0xff]
  %v2373 = vld [vmem:[%s3 + $0x5a8] sm:$0xff]
  %v2374 = vld [vmem:[%s3 + $0x5b0] sm:$0xff]
  %v2375 = vld [vmem:[%s3 + $0x5b8] sm:$0xff]
  %v2376 = vld [vmem:[%s3 + $0x5c0] sm:$0xff]
  %v2377 = vld [vmem:[%s3 + $0x5c8] sm:$0xff]
  %v2378 = vld [vmem:[%s3 + $0x5d0] sm:$0xff]
  %v2379 = vld [vmem:[%s3 + $0x5d8] sm:$0xff]
  %v2380 = vld [vmem:[%s3 + $0x5e0] sm:$0xff]
  %v2381 = vld [vmem:[%s3 + $0x5e8] sm:$0xff]
  %v2382 = vld [vmem:[%s3 + $0x5f0] sm:$0xff]
  %v2383 = vld [vmem:[%s3 + $0x5f8] sm:$0xff]
  %v2384 = vld [vmem:[%s3 + $0x600] sm:$0xff]
  %v2385 = vld [vmem:[%s3 + $0x608] sm:$0xff]
  %v2386 = vld [vmem:[%s3 + $0x610] sm:$0xff]
  %v2387 = vld [vmem:[%s3 + $0x618] sm:$0xff]
  %v2388 = vld [vmem:[%s3 + $0x620] sm:$0xff]
  %v2389 = vld [vmem:[%s3 + $0x628] sm:$0xff]
  %v2390 = vld [vmem:[%s3 + $0x630] sm:$0xff]
  %v2391 = vld [vmem:[%s3 + $0x638] sm:$0xff]
  %v2392 = vld [vmem:[%s3 + $0x640] sm:$0xff]
  %v2393 = vld [vmem:[%s3 + $0x648] sm:$0xff]
  %v2394 = vld [vmem:[%s3 + $0x650] sm:$0xff]
  %v2395 = vld [vmem:[%s3 + $0x658] sm:$0xff]
  %v2396 = vld [vmem:[%s3 + $0x660] sm:$0xff]
  %v2397 = vld [vmem:[%s3 + $0x668] sm:$0xff]
  %v2398 = vld [vmem:[%s3 + $0x670] sm:$0xff]
  %v2399 = vld [vmem:[%s3 + $0x678] sm:$0xff]
  %v2400 = vld [vmem:[%s3 + $0x680] sm:$0xff]
  %v2401 = vld [vmem:[%s3 + $0x688] sm:$0xff]
  %v2402 = vld [vmem:[%s3 + $0x690] sm:$0xff]
  %v2403 = vld [vmem:[%s3 + $0x698] sm:$0xff]
  %v2404 = vld [vmem:[%s3 + $0x6a0] sm:$0xff]
  %v2405 = vld [vmem:[%s3 + $0x6a8] sm:$0xff]
  %v2406 = vld [vmem:[%s3 + $0x6b0] sm:$0xff]
  %v2407 = vld [vmem:[%s3 + $0x6b8] sm:$0xff]
  %v2408 = vld [vmem:[%s3 + $0x6c0] sm:$0xff]
  %v2409 = vld [vmem:[%s3 + $0x6c8] sm:$0xff]
  %v2410 = vld [vmem:[%s3 + $0x6d0] sm:$0xff]
  %v2411 = vld [vmem:[%s3 + $0x6d8] sm:$0xff]
  %v2412 = vld [vmem:[%s3 + $0x6e0] sm:$0xff]
  %v2413 = vld [vmem:[%s3 + $0x6e8] sm:$0xff]
  %v2414 = vld [vmem:[%s3 + $0x6f0] sm:$0xff]
  %v2415 = vld [vmem:[%s3 + $0x6f8] sm:$0xff]
  %v2416 = vld [vmem:[%s3 + $0x700] sm:$0xff]
  %v2417 = vld [vmem:[%s3 + $0x708] sm:$0xff]
  %v2418 = vld [vmem:[%s3 + $0x710] sm:$0xff]
  %v2419 = vld [vmem:[%s3 + $0x718] sm:$0xff]
  %v2420 = vld [vmem:[%s3 + $0x720] sm:$0xff]
  %v2421 = vld [vmem:[%s3 + $0x728] sm:$0xff]
  %v2422 = vld [vmem:[%s3 + $0x730] sm:$0xff]
  %v2423 = vld [vmem:[%s3 + $0x738] sm:$0xff]
  %v2424 = vld [vmem:[%s3 + $0x740] sm:$0xff]
  %v2425 = vld [vmem:[%s3 + $0x748] sm:$0xff]
  %v2426 = vld [vmem:[%s3 + $0x750] sm:$0xff]
  %v2427 = vld [vmem:[%s3 + $0x758] sm:$0xff]
  %v2428 = vld [vmem:[%s3 + $0x760] sm:$0xff]
  %v2429 = vld [vmem:[%s3 + $0x768] sm:$0xff]
  %v2430 = vld [vmem:[%s3 + $0x770] sm:$0xff]
  %v2431 = vld [vmem:[%s3 + $0x778] sm:$0xff]
  %v2432 = vld [vmem:[%s3 + $0x780] sm:$0xff]
  %v2433 = vld [vmem:[%s3 + $0x788] sm:$0xff]
  %v2434 = vld [vmem:[%s3 + $0x790] sm:$0xff]
  %v2435 = vld [vmem:[%s3 + $0x798] sm:$0xff]
  %v2436 = vld [vmem:[%s3 + $0x7a0] sm:$0xff]
  %v2437 = vld [vmem:[%s3 + $0x7a8] sm:$0xff]
  %v2438 = vld [vmem:[%s3 + $0x7b0] sm:$0xff]
  %v2439 = vld [vmem:[%s3 + $0x7b8] sm:$0xff]
  %v2440 = vld [vmem:[%s3 + $0x7c0] sm:$0xff]
  %v2441 = vld [vmem:[%s3 + $0x7c8] sm:$0xff]
  %v2442 = vld [vmem:[%s3 + $0x7d0] sm:$0xff]
  %v2443 = vld [vmem:[%s3 + $0x7d8] sm:$0xff]
  %v2444 = vld [vmem:[%s3 + $0x7e0] sm:$0xff]
  %v2445 = vld [vmem:[%s3 + $0x7e8] sm:$0xff]
  %v2446 = vld [vmem:[%s3 + $0x7f0] sm:$0xff]
  %v2447 = vld [vmem:[%s3 + $0x7f8] sm:$0xff]
  %v2448 = vld [vmem:[%s3 + $0x800] sm:$0xff]
  %v2449 = vld [vmem:[%s3 + $0x808] sm:$0xff]
  %v2450 = vld [vmem:[%s3 + $0x810] sm:$0xff]
  %v2451 = vld [vmem:[%s3 + $0x818] sm:$0xff]
  %v2452 = vld [vmem:[%s3 + $0x820] sm:$0xff]
  %v2453 = vld [vmem:[%s3 + $0x828] sm:$0xff]
  %v2454 = vld [vmem:[%s3 + $0x830] sm:$0xff]
  %v2455 = vld [vmem:[%s3 + $0x838] sm:$0xff]
  %v2456 = vld [vmem:[%s3 + $0x840] sm:$0xff]
  %v2457 = vld [vmem:[%s3 + $0x848] sm:$0xff]
  %v2458 = vld [vmem:[%s3 + $0x850] sm:$0xff]
  %v2459 = vld [vmem:[%s3 + $0x858] sm:$0xff]
  %v2460 = vld [vmem:[%s3 + $0x860] sm:$0xff]
  %v2461 = vld [vmem:[%s3 + $0x868] sm:$0xff]
  %v2462 = vld [vmem:[%s3 + $0x870] sm:$0xff]
  %v2463 = vld [vmem:[%s3 + $0x878] sm:$0xff]
  %v2464 = vld [vmem:[%s3 + $0x880] sm:$0xff]
  %v2465 = vld [vmem:[%s3 + $0x888] sm:$0xff]
  %v2466 = vld [vmem:[%s3 + $0x890] sm:$0xff]
  %v2467 = vld [vmem:[%s3 + $0x898] sm:$0xff]
  %v2468 = vld [vmem:[%s3 + $0x8a0] sm:$0xff]
  %v2469 = vld [vmem:[%s3 + $0x8a8] sm:$0xff]
  %v2470 = vld [vmem:[%s3 + $0x8b0] sm:$0xff]
  %v2471 = vld [vmem:[%s3 + $0x8b8] sm:$0xff]
  %v2472 = vld [vmem:[%s3 + $0x8c0] sm:$0xff]
  %v2473 = vld [vmem:[%s3 + $0x8c8] sm:$0xff]
  %v2474 = vld [vmem:[%s3 + $0x8d0] sm:$0xff]
  %v2475 = vld [vmem:[%s3 + $0x8d8] sm:$0xff]
  %v2476 = vld [vmem:[%s3 + $0x8e0] sm:$0xff]
  %v2477 = vld [vmem:[%s3 + $0x8e8] sm:$0xff]
  %v2478 = vld [vmem:[%s3 + $0x8f0] sm:$0xff]
  %v2479 = vld [vmem:[%s3 + $0x8f8] sm:$0xff]
  %v2480 = vld [vmem:[%s4] sm:$0x3f]
  %v2482 = vlaneseq
  %v2483 = vshrl.u32 %v2482, 7
  %v2484 = vsub.s32 0, %v2483
  %v2485 = vrot.slane %v2480, %v2484
  %v2486 = vlaneseq
  %v2487 = vshrl.u32 %v2486, 7
  %v2488 = vsub.s32 1, %v2487
  %v2489 = vrot.slane %v2480, %v2488
  %v2490 = vlaneseq
  %v2491 = vshrl.u32 %v2490, 7
  %v2492 = vsub.s32 2, %v2491
  %v2493 = vrot.slane %v2480, %v2492
  %v2494 = vlaneseq
  %v2495 = vshrl.u32 %v2494, 7
  %v2496 = vsub.s32 3, %v2495
  %v2497 = vrot.slane %v2480, %v2496
  %v2498 = vlaneseq
  %v2499 = vshrl.u32 %v2498, 7
  %v2500 = vsub.s32 4, %v2499
  %v2501 = vrot.slane %v2480, %v2500
  %v2502 = vlaneseq
  %v2503 = vshrl.u32 %v2502, 7
  %v2504 = vsub.s32 5, %v2503
  %v2505 = vrot.slane %v2480, %v2504
  %v2800 = vunpack.c.l.b16 %v2192
  %v2801 = vunpack.c.h.b16 %v2192
  %v2802 = vunpack.c.l.b16 %v2193
  %v2803 = vunpack.c.h.b16 %v2193
  %v2804 = vunpack.c.l.b16 %v2194
  %v2805 = vunpack.c.h.b16 %v2194
  %v2806 = vunpack.c.l.b16 %v2195
  %v2807 = vunpack.c.h.b16 %v2195
  %v2808 = vunpack.c.l.b16 %v2196
  %v2809 = vunpack.c.h.b16 %v2196
  %v2810 = vunpack.c.l.b16 %v2197
  %v2811 = vunpack.c.h.b16 %v2197
  %v2812 = vunpack.c.l.b16 %v2198
  %v2813 = vunpack.c.h.b16 %v2198
  %v2814 = vunpack.c.l.b16 %v2199
  %v2815 = vunpack.c.h.b16 %v2199
  %v2816 = vunpack.c.l.b16 %v2200
  %v2817 = vunpack.c.h.b16 %v2200
  %v2818 = vunpack.c.l.b16 %v2201
  %v2819 = vunpack.c.h.b16 %v2201
  %v2820 = vunpack.c.l.b16 %v2202
  %v2821 = vunpack.c.h.b16 %v2202
  %v2822 = vunpack.c.l.b16 %v2203
  %v2823 = vunpack.c.h.b16 %v2203
  %v2824 = vunpack.c.l.b16 %v2204
  %v2825 = vunpack.c.h.b16 %v2204
  %v2826 = vunpack.c.l.b16 %v2205
  %v2827 = vunpack.c.h.b16 %v2205
  %v2828 = vunpack.c.l.b16 %v2206
  %v2829 = vunpack.c.h.b16 %v2206
  %v2830 = vunpack.c.l.b16 %v2207
  %v2831 = vunpack.c.h.b16 %v2207
  %v2832 = vunpack.c.l.b16 %v2208
  %v2833 = vunpack.c.h.b16 %v2208
  %v2834 = vunpack.c.l.b16 %v2209
  %v2835 = vunpack.c.h.b16 %v2209
  %v2836 = vunpack.c.l.b16 %v2210
  %v2837 = vunpack.c.h.b16 %v2210
  %v2838 = vunpack.c.l.b16 %v2211
  %v2839 = vunpack.c.h.b16 %v2211
  %v2840 = vunpack.c.l.b16 %v2212
  %v2841 = vunpack.c.h.b16 %v2212
  %v2842 = vunpack.c.l.b16 %v2213
  %v2843 = vunpack.c.h.b16 %v2213
  %v2844 = vunpack.c.l.b16 %v2214
  %v2845 = vunpack.c.h.b16 %v2214
  %v2846 = vunpack.c.l.b16 %v2215
  %v2847 = vunpack.c.h.b16 %v2215
  %v2848 = vunpack.c.l.b16 %v2216
  %v2849 = vunpack.c.h.b16 %v2216
  %v2850 = vunpack.c.l.b16 %v2217
  %v2851 = vunpack.c.h.b16 %v2217
  %v2852 = vunpack.c.l.b16 %v2218
  %v2853 = vunpack.c.h.b16 %v2218
  %v2854 = vunpack.c.l.b16 %v2219
  %v2855 = vunpack.c.h.b16 %v2219
  %v2856 = vunpack.c.l.b16 %v2220
  %v2857 = vunpack.c.h.b16 %v2220
  %v2858 = vunpack.c.l.b16 %v2221
  %v2859 = vunpack.c.h.b16 %v2221
  %v2860 = vunpack.c.l.b16 %v2222
  %v2861 = vunpack.c.h.b16 %v2222
  %v2862 = vunpack.c.l.b16 %v2223
  %v2863 = vunpack.c.h.b16 %v2223
  %v2864 = vunpack.c.l.b16 %v2224
  %v2865 = vunpack.c.h.b16 %v2224
  %v2866 = vunpack.c.l.b16 %v2225
  %v2867 = vunpack.c.h.b16 %v2225
  %v2868 = vunpack.c.l.b16 %v2226
  %v2869 = vunpack.c.h.b16 %v2226
  %v2870 = vunpack.c.l.b16 %v2227
  %v2871 = vunpack.c.h.b16 %v2227
  %v2872 = vunpack.c.l.b16 %v2228
  %v2873 = vunpack.c.h.b16 %v2228
  %v2874 = vunpack.c.l.b16 %v2229
  %v2875 = vunpack.c.h.b16 %v2229
  %v2876 = vunpack.c.l.b16 %v2230
  %v2877 = vunpack.c.h.b16 %v2230
  %v2878 = vunpack.c.l.b16 %v2231
  %v2879 = vunpack.c.h.b16 %v2231
  %v2880 = vunpack.c.l.b16 %v2232
  %v2881 = vunpack.c.h.b16 %v2232
  %v2882 = vunpack.c.l.b16 %v2233
  %v2883 = vunpack.c.h.b16 %v2233
  %v2884 = vunpack.c.l.b16 %v2234
  %v2885 = vunpack.c.h.b16 %v2234
  %v2886 = vunpack.c.l.b16 %v2235
  %v2887 = vunpack.c.h.b16 %v2235
  %v2888 = vunpack.c.l.b16 %v2236
  %v2889 = vunpack.c.h.b16 %v2236
  %v2890 = vunpack.c.l.b16 %v2237
  %v2891 = vunpack.c.h.b16 %v2237
  %v2892 = vunpack.c.l.b16 %v2238
  %v2893 = vunpack.c.h.b16 %v2238
  %v2894 = vunpack.c.l.b16 %v2239
  %v2895 = vunpack.c.h.b16 %v2239
  %v2896 = vunpack.c.l.b16 %v2240
  %v2897 = vunpack.c.h.b16 %v2240
  %v2898 = vunpack.c.l.b16 %v2241
  %v2899 = vunpack.c.h.b16 %v2241
  %v2900 = vunpack.c.l.b16 %v2242
  %v2901 = vunpack.c.h.b16 %v2242
  %v2902 = vunpack.c.l.b16 %v2243
  %v2903 = vunpack.c.h.b16 %v2243
  %v2904 = vunpack.c.l.b16 %v2244
  %v2905 = vunpack.c.h.b16 %v2244
  %v2906 = vunpack.c.l.b16 %v2245
  %v2907 = vunpack.c.h.b16 %v2245
  %v2908 = vunpack.c.l.b16 %v2246
  %v2909 = vunpack.c.h.b16 %v2246
  %v2910 = vunpack.c.l.b16 %v2247
  %v2911 = vunpack.c.h.b16 %v2247
  %v2912 = vunpack.c.l.b16 %v2248
  %v2913 = vunpack.c.h.b16 %v2248
  %v2914 = vunpack.c.l.b16 %v2249
  %v2915 = vunpack.c.h.b16 %v2249
  %v2916 = vunpack.c.l.b16 %v2250
  %v2917 = vunpack.c.h.b16 %v2250
  %v2918 = vunpack.c.l.b16 %v2251
  %v2919 = vunpack.c.h.b16 %v2251
  %v2920 = vunpack.c.l.b16 %v2252
  %v2921 = vunpack.c.h.b16 %v2252
  %v2922 = vunpack.c.l.b16 %v2253
  %v2923 = vunpack.c.h.b16 %v2253
  %v2924 = vunpack.c.l.b16 %v2254
  %v2925 = vunpack.c.h.b16 %v2254
  %v2926 = vunpack.c.l.b16 %v2255
  %v2927 = vunpack.c.h.b16 %v2255
  %v2928 = vunpack.c.l.b16 %v2256
  %v2929 = vunpack.c.h.b16 %v2256
  %v2930 = vunpack.c.l.b16 %v2257
  %v2931 = vunpack.c.h.b16 %v2257
  %v2932 = vunpack.c.l.b16 %v2258
  %v2933 = vunpack.c.h.b16 %v2258
  %v2934 = vunpack.c.l.b16 %v2259
  %v2935 = vunpack.c.h.b16 %v2259
  %v2936 = vunpack.c.l.b16 %v2260
  %v2937 = vunpack.c.h.b16 %v2260
  %v2938 = vunpack.c.l.b16 %v2261
  %v2939 = vunpack.c.h.b16 %v2261
  %v2940 = vunpack.c.l.b16 %v2262
  %v2941 = vunpack.c.h.b16 %v2262
  %v2942 = vunpack.c.l.b16 %v2263
  %v2943 = vunpack.c.h.b16 %v2263
  %v2944 = vunpack.c.l.b16 %v2264
  %v2945 = vunpack.c.h.b16 %v2264
  %v2946 = vunpack.c.l.b16 %v2265
  %v2947 = vunpack.c.h.b16 %v2265
  %v2948 = vunpack.c.l.b16 %v2266
  %v2949 = vunpack.c.h.b16 %v2266
  %v2950 = vunpack.c.l.b16 %v2267
  %v2951 = vunpack.c.h.b16 %v2267
  %v2952 = vunpack.c.l.b16 %v2268
  %v2953 = vunpack.c.h.b16 %v2268
  %v2954 = vunpack.c.l.b16 %v2269
  %v2955 = vunpack.c.h.b16 %v2269
  %v2956 = vunpack.c.l.b16 %v2270
  %v2957 = vunpack.c.h.b16 %v2270
  %v2958 = vunpack.c.l.b16 %v2271
  %v2959 = vunpack.c.h.b16 %v2271
  %v2960 = vunpack.c.l.b16 %v2272
  %v2961 = vunpack.c.h.b16 %v2272
  %v2962 = vunpack.c.l.b16 %v2273
  %v2963 = vunpack.c.h.b16 %v2273
  %v2964 = vunpack.c.l.b16 %v2274
  %v2965 = vunpack.c.h.b16 %v2274
  %v2966 = vunpack.c.l.b16 %v2275
  %v2967 = vunpack.c.h.b16 %v2275
  %v2968 = vunpack.c.l.b16 %v2276
  %v2969 = vunpack.c.h.b16 %v2276
  %v2970 = vunpack.c.l.b16 %v2277
  %v2971 = vunpack.c.h.b16 %v2277
  %v2972 = vunpack.c.l.b16 %v2278
  %v2973 = vunpack.c.h.b16 %v2278
  %v2974 = vunpack.c.l.b16 %v2279
  %v2975 = vunpack.c.h.b16 %v2279
  %v2976 = vunpack.c.l.b16 %v2280
  %v2977 = vunpack.c.h.b16 %v2280
  %v2978 = vunpack.c.l.b16 %v2281
  %v2979 = vunpack.c.h.b16 %v2281
  %v2980 = vunpack.c.l.b16 %v2282
  %v2981 = vunpack.c.h.b16 %v2282
  %v2982 = vunpack.c.l.b16 %v2283
  %v2983 = vunpack.c.h.b16 %v2283
  %v2984 = vunpack.c.l.b16 %v2284
  %v2985 = vunpack.c.h.b16 %v2284
  %v2986 = vunpack.c.l.b16 %v2285
  %v2987 = vunpack.c.h.b16 %v2285
  %v2988 = vunpack.c.l.b16 %v2286
  %v2989 = vunpack.c.h.b16 %v2286
  %v2990 = vunpack.c.l.b16 %v2287
  %v2991 = vunpack.c.h.b16 %v2287
  %v2992 = vunpack.c.l.b16 %v2288
  %v2993 = vunpack.c.h.b16 %v2288
  %v2994 = vunpack.c.l.b16 %v2289
  %v2995 = vunpack.c.h.b16 %v2289
  %v2996 = vunpack.c.l.b16 %v2290
  %v2997 = vunpack.c.h.b16 %v2290
  %v2998 = vunpack.c.l.b16 %v2291
  %v2999 = vunpack.c.h.b16 %v2291
  %v3000 = vunpack.c.l.b16 %v2292
  %v3001 = vunpack.c.h.b16 %v2292
  %v3002 = vunpack.c.l.b16 %v2293
  %v3003 = vunpack.c.h.b16 %v2293
  %v3004 = vunpack.c.l.b16 %v2294
  %v3005 = vunpack.c.h.b16 %v2294
  %v3006 = vunpack.c.l.b16 %v2295
  %v3007 = vunpack.c.h.b16 %v2295
  %v3008 = vunpack.c.l.b16 %v2296
  %v3009 = vunpack.c.h.b16 %v2296
  %v3010 = vunpack.c.l.b16 %v2297
  %v3011 = vunpack.c.h.b16 %v2297
  %v3012 = vunpack.c.l.b16 %v2298
  %v3013 = vunpack.c.h.b16 %v2298
  %v3014 = vunpack.c.l.b16 %v2299
  %v3015 = vunpack.c.h.b16 %v2299
  %v3016 = vunpack.c.l.b16 %v2300
  %v3017 = vunpack.c.h.b16 %v2300
  %v3018 = vunpack.c.l.b16 %v2301
  %v3019 = vunpack.c.h.b16 %v2301
  %v3020 = vunpack.c.l.b16 %v2302
  %v3021 = vunpack.c.h.b16 %v2302
  %v3022 = vunpack.c.l.b16 %v2303
  %v3023 = vunpack.c.h.b16 %v2303
  %v3024 = vunpack.c.l.b16 %v2304
  %v3025 = vunpack.c.h.b16 %v2304
  %v3026 = vunpack.c.l.b16 %v2305
  %v3027 = vunpack.c.h.b16 %v2305
  %v3028 = vunpack.c.l.b16 %v2306
  %v3029 = vunpack.c.h.b16 %v2306
  %v3030 = vunpack.c.l.b16 %v2307
  %v3031 = vunpack.c.h.b16 %v2307
  %v3032 = vunpack.c.l.b16 %v2308
  %v3033 = vunpack.c.h.b16 %v2308
  %v3034 = vunpack.c.l.b16 %v2309
  %v3035 = vunpack.c.h.b16 %v2309
  %v3036 = vunpack.c.l.b16 %v2310
  %v3037 = vunpack.c.h.b16 %v2310
  %v3038 = vunpack.c.l.b16 %v2311
  %v3039 = vunpack.c.h.b16 %v2311
  %v3040 = vunpack.c.l.b16 %v2312
  %v3041 = vunpack.c.h.b16 %v2312
  %v3042 = vunpack.c.l.b16 %v2313
  %v3043 = vunpack.c.h.b16 %v2313
  %v3044 = vunpack.c.l.b16 %v2314
  %v3045 = vunpack.c.h.b16 %v2314
  %v3046 = vunpack.c.l.b16 %v2315
  %v3047 = vunpack.c.h.b16 %v2315
  %v3048 = vunpack.c.l.b16 %v2316
  %v3049 = vunpack.c.h.b16 %v2316
  %v3050 = vunpack.c.l.b16 %v2317
  %v3051 = vunpack.c.h.b16 %v2317
  %v3052 = vunpack.c.l.b16 %v2318
  %v3053 = vunpack.c.h.b16 %v2318
  %v3054 = vunpack.c.l.b16 %v2319
  %v3055 = vunpack.c.h.b16 %v2319
  %v3056 = vunpack.c.l.b16 %v2320
  %v3057 = vunpack.c.h.b16 %v2320
  %v3058 = vunpack.c.l.b16 %v2321
  %v3059 = vunpack.c.h.b16 %v2321
  %v3060 = vunpack.c.l.b16 %v2322
  %v3061 = vunpack.c.h.b16 %v2322
  %v3062 = vunpack.c.l.b16 %v2323
  %v3063 = vunpack.c.h.b16 %v2323
  %v3064 = vunpack.c.l.b16 %v2324
  %v3065 = vunpack.c.h.b16 %v2324
  %v3066 = vunpack.c.l.b16 %v2325
  %v3067 = vunpack.c.h.b16 %v2325
  %v3068 = vunpack.c.l.b16 %v2326
  %v3069 = vunpack.c.h.b16 %v2326
  %v3070 = vunpack.c.l.b16 %v2327
  %v3071 = vunpack.c.h.b16 %v2327
  %v3072 = vunpack.c.l.b16 %v2328
  %v3073 = vunpack.c.h.b16 %v2328
  %v3074 = vunpack.c.l.b16 %v2329
  %v3075 = vunpack.c.h.b16 %v2329
  %v3076 = vunpack.c.l.b16 %v2330
  %v3077 = vunpack.c.h.b16 %v2330
  %v3078 = vunpack.c.l.b16 %v2331
  %v3079 = vunpack.c.h.b16 %v2331
  %v3080 = vunpack.c.l.b16 %v2332
  %v3081 = vunpack.c.h.b16 %v2332
  %v3082 = vunpack.c.l.b16 %v2333
  %v3083 = vunpack.c.h.b16 %v2333
  %v3084 = vunpack.c.l.b16 %v2334
  %v3085 = vunpack.c.h.b16 %v2334
  %v3086 = vunpack.c.l.b16 %v2335
  %v3087 = vunpack.c.h.b16 %v2335
  %v3088 = vunpack.c.l.b16 %v2336
  %v3089 = vunpack.c.h.b16 %v2336
  %v3090 = vunpack.c.l.b16 %v2337
  %v3091 = vunpack.c.h.b16 %v2337
  %v3092 = vunpack.c.l.b16 %v2338
  %v3093 = vunpack.c.h.b16 %v2338
  %v3094 = vunpack.c.l.b16 %v2339
  %v3095 = vunpack.c.h.b16 %v2339
  %v3096 = vunpack.c.l.b16 %v2340
  %v3097 = vunpack.c.h.b16 %v2340
  %v3098 = vunpack.c.l.b16 %v2341
  %v3099 = vunpack.c.h.b16 %v2341
  %v3100 = vunpack.c.l.b16 %v2342
  %v3101 = vunpack.c.h.b16 %v2342
  %v3102 = vunpack.c.l.b16 %v2343
  %v3103 = vunpack.c.h.b16 %v2343
  %v3104 = vunpack.c.l.b16 %v2344
  %v3105 = vunpack.c.h.b16 %v2344
  %v3106 = vunpack.c.l.b16 %v2345
  %v3107 = vunpack.c.h.b16 %v2345
  %v3108 = vunpack.c.l.b16 %v2346
  %v3109 = vunpack.c.h.b16 %v2346
  %v3110 = vunpack.c.l.b16 %v2347
  %v3111 = vunpack.c.h.b16 %v2347
  %v3112 = vunpack.c.l.b16 %v2348
  %v3113 = vunpack.c.h.b16 %v2348
  %v3114 = vunpack.c.l.b16 %v2349
  %v3115 = vunpack.c.h.b16 %v2349
  %v3116 = vunpack.c.l.b16 %v2350
  %v3117 = vunpack.c.h.b16 %v2350
  %v3118 = vunpack.c.l.b16 %v2351
  %v3119 = vunpack.c.h.b16 %v2351
  %v3120 = vunpack.c.l.b16 %v2352
  %v3121 = vunpack.c.h.b16 %v2352
  %v3122 = vunpack.c.l.b16 %v2353
  %v3123 = vunpack.c.h.b16 %v2353
  %v3124 = vunpack.c.l.b16 %v2354
  %v3125 = vunpack.c.h.b16 %v2354
  %v3126 = vunpack.c.l.b16 %v2355
  %v3127 = vunpack.c.h.b16 %v2355
  %v3128 = vunpack.c.l.b16 %v2356
  %v3129 = vunpack.c.h.b16 %v2356
  %v3130 = vunpack.c.l.b16 %v2357
  %v3131 = vunpack.c.h.b16 %v2357
  %v3132 = vunpack.c.l.b16 %v2358
  %v3133 = vunpack.c.h.b16 %v2358
  %v3134 = vunpack.c.l.b16 %v2359
  %v3135 = vunpack.c.h.b16 %v2359
  %v3136 = vunpack.c.l.b16 %v2360
  %v3137 = vunpack.c.h.b16 %v2360
  %v3138 = vunpack.c.l.b16 %v2361
  %v3139 = vunpack.c.h.b16 %v2361
  %v3140 = vunpack.c.l.b16 %v2362
  %v3141 = vunpack.c.h.b16 %v2362
  %v3142 = vunpack.c.l.b16 %v2363
  %v3143 = vunpack.c.h.b16 %v2363
  %v3144 = vunpack.c.l.b16 %v2364
  %v3145 = vunpack.c.h.b16 %v2364
  %v3146 = vunpack.c.l.b16 %v2365
  %v3147 = vunpack.c.h.b16 %v2365
  %v3148 = vunpack.c.l.b16 %v2366
  %v3149 = vunpack.c.h.b16 %v2366
  %v3150 = vunpack.c.l.b16 %v2367
  %v3151 = vunpack.c.h.b16 %v2367
  %v3152 = vunpack.c.l.b16 %v2368
  %v3153 = vunpack.c.h.b16 %v2368
  %v3154 = vunpack.c.l.b16 %v2369
  %v3155 = vunpack.c.h.b16 %v2369
  %v3156 = vunpack.c.l.b16 %v2370
  %v3157 = vunpack.c.h.b16 %v2370
  %v3158 = vunpack.c.l.b16 %v2371
  %v3159 = vunpack.c.h.b16 %v2371
  %v3160 = vunpack.c.l.b16 %v2372
  %v3161 = vunpack.c.h.b16 %v2372
  %v3162 = vunpack.c.l.b16 %v2373
  %v3163 = vunpack.c.h.b16 %v2373
  %v3164 = vunpack.c.l.b16 %v2374
  %v3165 = vunpack.c.h.b16 %v2374
  %v3166 = vunpack.c.l.b16 %v2375
  %v3167 = vunpack.c.h.b16 %v2375
  %v3168 = vunpack.c.l.b16 %v2376
  %v3169 = vunpack.c.h.b16 %v2376
  %v3170 = vunpack.c.l.b16 %v2377
  %v3171 = vunpack.c.h.b16 %v2377
  %v3172 = vunpack.c.l.b16 %v2378
  %v3173 = vunpack.c.h.b16 %v2378
  %v3174 = vunpack.c.l.b16 %v2379
  %v3175 = vunpack.c.h.b16 %v2379
  %v3176 = vunpack.c.l.b16 %v2380
  %v3177 = vunpack.c.h.b16 %v2380
  %v3178 = vunpack.c.l.b16 %v2381
  %v3179 = vunpack.c.h.b16 %v2381
  %v3180 = vunpack.c.l.b16 %v2382
  %v3181 = vunpack.c.h.b16 %v2382
  %v3182 = vunpack.c.l.b16 %v2383
  %v3183 = vunpack.c.h.b16 %v2383
  %v3184 = vunpack.c.l.b16 %v2384
  %v3185 = vunpack.c.h.b16 %v2384
  %v3186 = vunpack.c.l.b16 %v2385
  %v3187 = vunpack.c.h.b16 %v2385
  %v3188 = vunpack.c.l.b16 %v2386
  %v3189 = vunpack.c.h.b16 %v2386
  %v3190 = vunpack.c.l.b16 %v2387
  %v3191 = vunpack.c.h.b16 %v2387
  %v3192 = vunpack.c.l.b16 %v2388
  %v3193 = vunpack.c.h.b16 %v2388
  %v3194 = vunpack.c.l.b16 %v2389
  %v3195 = vunpack.c.h.b16 %v2389
  %v3196 = vunpack.c.l.b16 %v2390
  %v3197 = vunpack.c.h.b16 %v2390
  %v3198 = vunpack.c.l.b16 %v2391
  %v3199 = vunpack.c.h.b16 %v2391
  %v3200 = vunpack.c.l.b16 %v2392
  %v3201 = vunpack.c.h.b16 %v2392
  %v3202 = vunpack.c.l.b16 %v2393
  %v3203 = vunpack.c.h.b16 %v2393
  %v3204 = vunpack.c.l.b16 %v2394
  %v3205 = vunpack.c.h.b16 %v2394
  %v3206 = vunpack.c.l.b16 %v2395
  %v3207 = vunpack.c.h.b16 %v2395
  %v3208 = vunpack.c.l.b16 %v2396
  %v3209 = vunpack.c.h.b16 %v2396
  %v3210 = vunpack.c.l.b16 %v2397
  %v3211 = vunpack.c.h.b16 %v2397
  %v3212 = vunpack.c.l.b16 %v2398
  %v3213 = vunpack.c.h.b16 %v2398
  %v3214 = vunpack.c.l.b16 %v2399
  %v3215 = vunpack.c.h.b16 %v2399
  %v3216 = vunpack.c.l.b16 %v2400
  %v3217 = vunpack.c.h.b16 %v2400
  %v3218 = vunpack.c.l.b16 %v2401
  %v3219 = vunpack.c.h.b16 %v2401
  %v3220 = vunpack.c.l.b16 %v2402
  %v3221 = vunpack.c.h.b16 %v2402
  %v3222 = vunpack.c.l.b16 %v2403
  %v3223 = vunpack.c.h.b16 %v2403
  %v3224 = vunpack.c.l.b16 %v2404
  %v3225 = vunpack.c.h.b16 %v2404
  %v3226 = vunpack.c.l.b16 %v2405
  %v3227 = vunpack.c.h.b16 %v2405
  %v3228 = vunpack.c.l.b16 %v2406
  %v3229 = vunpack.c.h.b16 %v2406
  %v3230 = vunpack.c.l.b16 %v2407
  %v3231 = vunpack.c.h.b16 %v2407
  %v3232 = vunpack.c.l.b16 %v2408
  %v3233 = vunpack.c.h.b16 %v2408
  %v3234 = vunpack.c.l.b16 %v2409
  %v3235 = vunpack.c.h.b16 %v2409
  %v3236 = vunpack.c.l.b16 %v2410
  %v3237 = vunpack.c.h.b16 %v2410
  %v3238 = vunpack.c.l.b16 %v2411
  %v3239 = vunpack.c.h.b16 %v2411
  %v3240 = vunpack.c.l.b16 %v2412
  %v3241 = vunpack.c.h.b16 %v2412
  %v3242 = vunpack.c.l.b16 %v2413
  %v3243 = vunpack.c.h.b16 %v2413
  %v3244 = vunpack.c.l.b16 %v2414
  %v3245 = vunpack.c.h.b16 %v2414
  %v3246 = vunpack.c.l.b16 %v2415
  %v3247 = vunpack.c.h.b16 %v2415
  %v3248 = vunpack.c.l.b16 %v2416
  %v3249 = vunpack.c.h.b16 %v2416
  %v3250 = vunpack.c.l.b16 %v2417
  %v3251 = vunpack.c.h.b16 %v2417
  %v3252 = vunpack.c.l.b16 %v2418
  %v3253 = vunpack.c.h.b16 %v2418
  %v3254 = vunpack.c.l.b16 %v2419
  %v3255 = vunpack.c.h.b16 %v2419
  %v3256 = vunpack.c.l.b16 %v2420
  %v3257 = vunpack.c.h.b16 %v2420
  %v3258 = vunpack.c.l.b16 %v2421
  %v3259 = vunpack.c.h.b16 %v2421
  %v3260 = vunpack.c.l.b16 %v2422
  %v3261 = vunpack.c.h.b16 %v2422
  %v3262 = vunpack.c.l.b16 %v2423
  %v3263 = vunpack.c.h.b16 %v2423
  %v3264 = vunpack.c.l.b16 %v2424
  %v3265 = vunpack.c.h.b16 %v2424
  %v3266 = vunpack.c.l.b16 %v2425
  %v3267 = vunpack.c.h.b16 %v2425
  %v3268 = vunpack.c.l.b16 %v2426
  %v3269 = vunpack.c.h.b16 %v2426
  %v3270 = vunpack.c.l.b16 %v2427
  %v3271 = vunpack.c.h.b16 %v2427
  %v3272 = vunpack.c.l.b16 %v2428
  %v3273 = vunpack.c.h.b16 %v2428
  %v3274 = vunpack.c.l.b16 %v2429
  %v3275 = vunpack.c.h.b16 %v2429
  %v3276 = vunpack.c.l.b16 %v2430
  %v3277 = vunpack.c.h.b16 %v2430
  %v3278 = vunpack.c.l.b16 %v2431
  %v3279 = vunpack.c.h.b16 %v2431
  %v3280 = vunpack.c.l.b16 %v2432
  %v3281 = vunpack.c.h.b16 %v2432
  %v3282 = vunpack.c.l.b16 %v2433
  %v3283 = vunpack.c.h.b16 %v2433
  %v3284 = vunpack.c.l.b16 %v2434
  %v3285 = vunpack.c.h.b16 %v2434
  %v3286 = vunpack.c.l.b16 %v2435
  %v3287 = vunpack.c.h.b16 %v2435
  %v3288 = vunpack.c.l.b16 %v2436
  %v3289 = vunpack.c.h.b16 %v2436
  %v3290 = vunpack.c.l.b16 %v2437
  %v3291 = vunpack.c.h.b16 %v2437
  %v3292 = vunpack.c.l.b16 %v2438
  %v3293 = vunpack.c.h.b16 %v2438
  %v3294 = vunpack.c.l.b16 %v2439
  %v3295 = vunpack.c.h.b16 %v2439
  %v3296 = vunpack.c.l.b16 %v2440
  %v3297 = vunpack.c.h.b16 %v2440
  %v3298 = vunpack.c.l.b16 %v2441
  %v3299 = vunpack.c.h.b16 %v2441
  %v3300 = vunpack.c.l.b16 %v2442
  %v3301 = vunpack.c.h.b16 %v2442
  %v3302 = vunpack.c.l.b16 %v2443
  %v3303 = vunpack.c.h.b16 %v2443
  %v3304 = vunpack.c.l.b16 %v2444
  %v3305 = vunpack.c.h.b16 %v2444
  %v3306 = vunpack.c.l.b16 %v2445
  %v3307 = vunpack.c.h.b16 %v2445
  %v3308 = vunpack.c.l.b16 %v2446
  %v3309 = vunpack.c.h.b16 %v2446
  %v3310 = vunpack.c.l.b16 %v2447
  %v3311 = vunpack.c.h.b16 %v2447
  %v3312 = vunpack.c.l.b16 %v2448
  %v3313 = vunpack.c.h.b16 %v2448
  %v3314 = vunpack.c.l.b16 %v2449
  %v3315 = vunpack.c.h.b16 %v2449
  %v3316 = vunpack.c.l.b16 %v2450
  %v3317 = vunpack.c.h.b16 %v2450
  %v3318 = vunpack.c.l.b16 %v2451
  %v3319 = vunpack.c.h.b16 %v2451
  %v3320 = vunpack.c.l.b16 %v2452
  %v3321 = vunpack.c.h.b16 %v2452
  %v3322 = vunpack.c.l.b16 %v2453
  %v3323 = vunpack.c.h.b16 %v2453
  %v3324 = vunpack.c.l.b16 %v2454
  %v3325 = vunpack.c.h.b16 %v2454
  %v3326 = vunpack.c.l.b16 %v2455
  %v3327 = vunpack.c.h.b16 %v2455
  %v3328 = vunpack.c.l.b16 %v2456
  %v3329 = vunpack.c.h.b16 %v2456
  %v3330 = vunpack.c.l.b16 %v2457
  %v3331 = vunpack.c.h.b16 %v2457
  %v3332 = vunpack.c.l.b16 %v2458
  %v3333 = vunpack.c.h.b16 %v2458
  %v3334 = vunpack.c.l.b16 %v2459
  %v3335 = vunpack.c.h.b16 %v2459
  %v3336 = vunpack.c.l.b16 %v2460
  %v3337 = vunpack.c.h.b16 %v2460
  %v3338 = vunpack.c.l.b16 %v2461
  %v3339 = vunpack.c.h.b16 %v2461
  %v3340 = vunpack.c.l.b16 %v2462
  %v3341 = vunpack.c.h.b16 %v2462
  %v3342 = vunpack.c.l.b16 %v2463
  %v3343 = vunpack.c.h.b16 %v2463
  %v3344 = vunpack.c.l.b16 %v2464
  %v3345 = vunpack.c.h.b16 %v2464
  %v3346 = vunpack.c.l.b16 %v2465
  %v3347 = vunpack.c.h.b16 %v2465
  %v3348 = vunpack.c.l.b16 %v2466
  %v3349 = vunpack.c.h.b16 %v2466
  %v3350 = vunpack.c.l.b16 %v2467
  %v3351 = vunpack.c.h.b16 %v2467
  %v3352 = vunpack.c.l.b16 %v2468
  %v3353 = vunpack.c.h.b16 %v2468
  %v3354 = vunpack.c.l.b16 %v2469
  %v3355 = vunpack.c.h.b16 %v2469
  %v3356 = vunpack.c.l.b16 %v2470
  %v3357 = vunpack.c.h.b16 %v2470
  %v3358 = vunpack.c.l.b16 %v2471
  %v3359 = vunpack.c.h.b16 %v2471
  %v3360 = vunpack.c.l.b16 %v2472
  %v3361 = vunpack.c.h.b16 %v2472
  %v3362 = vunpack.c.l.b16 %v2473
  %v3363 = vunpack.c.h.b16 %v2473
  %v3364 = vunpack.c.l.b16 %v2474
  %v3365 = vunpack.c.h.b16 %v2474
  %v3366 = vunpack.c.l.b16 %v2475
  %v3367 = vunpack.c.h.b16 %v2475
  %v3368 = vunpack.c.l.b16 %v2476
  %v3369 = vunpack.c.h.b16 %v2476
  %v3370 = vunpack.c.l.b16 %v2477
  %v3371 = vunpack.c.h.b16 %v2477
  %v3372 = vunpack.c.l.b16 %v2478
  %v3373 = vunpack.c.h.b16 %v2478
  %v3374 = vunpack.c.l.b16 %v2479
  %v3375 = vunpack.c.h.b16 %v2479
  %v3376 = vpack.c.b16 %v2806, %v2800
  %v3377 = vpack.c.b16 %v2807, %v2801
  %v3378 = vpack.c.b16 %v2808, %v2802
  %v3379 = vpack.c.b16 %v2809, %v2803
  %v3380 = vpack.c.b16 %v2810, %v2804
  %v3381 = vpack.c.b16 %v2811, %v2805
  %v3382 = vpack.c.b16 %v2818, %v2812
  %v3383 = vpack.c.b16 %v2819, %v2813
  %v3384 = vpack.c.b16 %v2820, %v2814
  %v3385 = vpack.c.b16 %v2821, %v2815
  %v3386 = vpack.c.b16 %v2822, %v2816
  %v3387 = vpack.c.b16 %v2823, %v2817
  %v3388 = vpack.c.b16 %v2830, %v2824
  %v3389 = vpack.c.b16 %v2831, %v2825
  %v3390 = vpack.c.b16 %v2832, %v2826
  %v3391 = vpack.c.b16 %v2833, %v2827
  %v3392 = vpack.c.b16 %v2834, %v2828
  %v3393 = vpack.c.b16 %v2835, %v2829
  %v3394 = vpack.c.b16 %v2842, %v2836
  %v3395 = vpack.c.b16 %v2843, %v2837
  %v3396 = vpack.c.b16 %v2844, %v2838
  %v3397 = vpack.c.b16 %v2845, %v2839
  %v3398 = vpack.c.b16 %v2846, %v2840
  %v3399 = vpack.c.b16 %v2847, %v2841
  %v3400 = vpack.c.b16 %v2854, %v2848
  %v3401 = vpack.c.b16 %v2855, %v2849
  %v3402 = vpack.c.b16 %v2856, %v2850
  %v3403 = vpack.c.b16 %v2857, %v2851
  %v3404 = vpack.c.b16 %v2858, %v2852
  %v3405 = vpack.c.b16 %v2859, %v2853
  %v3406 = vpack.c.b16 %v2866, %v2860
  %v3407 = vpack.c.b16 %v2867, %v2861
  %v3408 = vpack.c.b16 %v2868, %v2862
  %v3409 = vpack.c.b16 %v2869, %v2863
  %v3410 = vpack.c.b16 %v2870, %v2864
  %v3411 = vpack.c.b16 %v2871, %v2865
  %v3412 = vpack.c.b16 %v2878, %v2872
  %v3413 = vpack.c.b16 %v2879, %v2873
  %v3414 = vpack.c.b16 %v2880, %v2874
  %v3415 = vpack.c.b16 %v2881, %v2875
  %v3416 = vpack.c.b16 %v2882, %v2876
  %v3417 = vpack.c.b16 %v2883, %v2877
  %v3418 = vpack.c.b16 %v2890, %v2884
  %v3419 = vpack.c.b16 %v2891, %v2885
  %v3420 = vpack.c.b16 %v2892, %v2886
  %v3421 = vpack.c.b16 %v2893, %v2887
  %v3422 = vpack.c.b16 %v2894, %v2888
  %v3423 = vpack.c.b16 %v2895, %v2889
  %v3424 = vpack.c.b16 %v2902, %v2896
  %v3425 = vpack.c.b16 %v2903, %v2897
  %v3426 = vpack.c.b16 %v2904, %v2898
  %v3427 = vpack.c.b16 %v2905, %v2899
  %v3428 = vpack.c.b16 %v2906, %v2900
  %v3429 = vpack.c.b16 %v2907, %v2901
  %v3430 = vpack.c.b16 %v2914, %v2908
  %v3431 = vpack.c.b16 %v2915, %v2909
  %v3432 = vpack.c.b16 %v2916, %v2910
  %v3433 = vpack.c.b16 %v2917, %v2911
  %v3434 = vpack.c.b16 %v2918, %v2912
  %v3435 = vpack.c.b16 %v2919, %v2913
  %v3436 = vpack.c.b16 %v2926, %v2920
  %v3437 = vpack.c.b16 %v2927, %v2921
  %v3438 = vpack.c.b16 %v2928, %v2922
  %v3439 = vpack.c.b16 %v2929, %v2923
  %v3440 = vpack.c.b16 %v2930, %v2924
  %v3441 = vpack.c.b16 %v2931, %v2925
  %v3442 = vpack.c.b16 %v2938, %v2932
  %v3443 = vpack.c.b16 %v2939, %v2933
  %v3444 = vpack.c.b16 %v2940, %v2934
  %v3445 = vpack.c.b16 %v2941, %v2935
  %v3446 = vpack.c.b16 %v2942, %v2936
  %v3447 = vpack.c.b16 %v2943, %v2937
  %v3448 = vpack.c.b16 %v2950, %v2944
  %v3449 = vpack.c.b16 %v2951, %v2945
  %v3450 = vpack.c.b16 %v2952, %v2946
  %v3451 = vpack.c.b16 %v2953, %v2947
  %v3452 = vpack.c.b16 %v2954, %v2948
  %v3453 = vpack.c.b16 %v2955, %v2949
  %v3454 = vpack.c.b16 %v2962, %v2956
  %v3455 = vpack.c.b16 %v2963, %v2957
  %v3456 = vpack.c.b16 %v2964, %v2958
  %v3457 = vpack.c.b16 %v2965, %v2959
  %v3458 = vpack.c.b16 %v2966, %v2960
  %v3459 = vpack.c.b16 %v2967, %v2961
  %v3460 = vpack.c.b16 %v2974, %v2968
  %v3461 = vpack.c.b16 %v2975, %v2969
  %v3462 = vpack.c.b16 %v2976, %v2970
  %v3463 = vpack.c.b16 %v2977, %v2971
  %v3464 = vpack.c.b16 %v2978, %v2972
  %v3465 = vpack.c.b16 %v2979, %v2973
  %v3466 = vpack.c.b16 %v2986, %v2980
  %v3467 = vpack.c.b16 %v2987, %v2981
  %v3468 = vpack.c.b16 %v2988, %v2982
  %v3469 = vpack.c.b16 %v2989, %v2983
  %v3470 = vpack.c.b16 %v2990, %v2984
  %v3471 = vpack.c.b16 %v2991, %v2985
  %v3472 = vpack.c.b16 %v2998, %v2992
  %v3473 = vpack.c.b16 %v2999, %v2993
  %v3474 = vpack.c.b16 %v3000, %v2994
  %v3475 = vpack.c.b16 %v3001, %v2995
  %v3476 = vpack.c.b16 %v3002, %v2996
  %v3477 = vpack.c.b16 %v3003, %v2997
  %v3478 = vpack.c.b16 %v3010, %v3004
  %v3479 = vpack.c.b16 %v3011, %v3005
  %v3480 = vpack.c.b16 %v3012, %v3006
  %v3481 = vpack.c.b16 %v3013, %v3007
  %v3482 = vpack.c.b16 %v3014, %v3008
  %v3483 = vpack.c.b16 %v3015, %v3009
  %v3484 = vpack.c.b16 %v3022, %v3016
  %v3485 = vpack.c.b16 %v3023, %v3017
  %v3486 = vpack.c.b16 %v3024, %v3018
  %v3487 = vpack.c.b16 %v3025, %v3019
  %v3488 = vpack.c.b16 %v3026, %v3020
  %v3489 = vpack.c.b16 %v3027, %v3021
  %v3490 = vpack.c.b16 %v3034, %v3028
  %v3491 = vpack.c.b16 %v3035, %v3029
  %v3492 = vpack.c.b16 %v3036, %v3030
  %v3493 = vpack.c.b16 %v3037, %v3031
  %v3494 = vpack.c.b16 %v3038, %v3032
  %v3495 = vpack.c.b16 %v3039, %v3033
  %v3496 = vpack.c.b16 %v3046, %v3040
  %v3497 = vpack.c.b16 %v3047, %v3041
  %v3498 = vpack.c.b16 %v3048, %v3042
  %v3499 = vpack.c.b16 %v3049, %v3043
  %v3500 = vpack.c.b16 %v3050, %v3044
  %v3501 = vpack.c.b16 %v3051, %v3045
  %v3502 = vpack.c.b16 %v3058, %v3052
  %v3503 = vpack.c.b16 %v3059, %v3053
  %v3504 = vpack.c.b16 %v3060, %v3054
  %v3505 = vpack.c.b16 %v3061, %v3055
  %v3506 = vpack.c.b16 %v3062, %v3056
  %v3507 = vpack.c.b16 %v3063, %v3057
  %v3508 = vpack.c.b16 %v3070, %v3064
  %v3509 = vpack.c.b16 %v3071, %v3065
  %v3510 = vpack.c.b16 %v3072, %v3066
  %v3511 = vpack.c.b16 %v3073, %v3067
  %v3512 = vpack.c.b16 %v3074, %v3068
  %v3513 = vpack.c.b16 %v3075, %v3069
  %v3514 = vpack.c.b16 %v3082, %v3076
  %v3515 = vpack.c.b16 %v3083, %v3077
  %v3516 = vpack.c.b16 %v3084, %v3078
  %v3517 = vpack.c.b16 %v3085, %v3079
  %v3518 = vpack.c.b16 %v3086, %v3080
  %v3519 = vpack.c.b16 %v3087, %v3081
  %v3520 = vpack.c.b16 %v3094, %v3088
  %v3521 = vpack.c.b16 %v3095, %v3089
  %v3522 = vpack.c.b16 %v3096, %v3090
  %v3523 = vpack.c.b16 %v3097, %v3091
  %v3524 = vpack.c.b16 %v3098, %v3092
  %v3525 = vpack.c.b16 %v3099, %v3093
  %v3526 = vpack.c.b16 %v3106, %v3100
  %v3527 = vpack.c.b16 %v3107, %v3101
  %v3528 = vpack.c.b16 %v3108, %v3102
  %v3529 = vpack.c.b16 %v3109, %v3103
  %v3530 = vpack.c.b16 %v3110, %v3104
  %v3531 = vpack.c.b16 %v3111, %v3105
  %v3532 = vpack.c.b16 %v3118, %v3112
  %v3533 = vpack.c.b16 %v3119, %v3113
  %v3534 = vpack.c.b16 %v3120, %v3114
  %v3535 = vpack.c.b16 %v3121, %v3115
  %v3536 = vpack.c.b16 %v3122, %v3116
  %v3537 = vpack.c.b16 %v3123, %v3117
  %v3538 = vpack.c.b16 %v3130, %v3124
  %v3539 = vpack.c.b16 %v3131, %v3125
  %v3540 = vpack.c.b16 %v3132, %v3126
  %v3541 = vpack.c.b16 %v3133, %v3127
  %v3542 = vpack.c.b16 %v3134, %v3128
  %v3543 = vpack.c.b16 %v3135, %v3129
  %v3544 = vpack.c.b16 %v3142, %v3136
  %v3545 = vpack.c.b16 %v3143, %v3137
  %v3546 = vpack.c.b16 %v3144, %v3138
  %v3547 = vpack.c.b16 %v3145, %v3139
  %v3548 = vpack.c.b16 %v3146, %v3140
  %v3549 = vpack.c.b16 %v3147, %v3141
  %v3550 = vpack.c.b16 %v3154, %v3148
  %v3551 = vpack.c.b16 %v3155, %v3149
  %v3552 = vpack.c.b16 %v3156, %v3150
  %v3553 = vpack.c.b16 %v3157, %v3151
  %v3554 = vpack.c.b16 %v3158, %v3152
  %v3555 = vpack.c.b16 %v3159, %v3153
  %v3556 = vpack.c.b16 %v3166, %v3160
  %v3557 = vpack.c.b16 %v3167, %v3161
  %v3558 = vpack.c.b16 %v3168, %v3162
  %v3559 = vpack.c.b16 %v3169, %v3163
  %v3560 = vpack.c.b16 %v3170, %v3164
  %v3561 = vpack.c.b16 %v3171, %v3165
  %v3562 = vpack.c.b16 %v3178, %v3172
  %v3563 = vpack.c.b16 %v3179, %v3173
  %v3564 = vpack.c.b16 %v3180, %v3174
  %v3565 = vpack.c.b16 %v3181, %v3175
  %v3566 = vpack.c.b16 %v3182, %v3176
  %v3567 = vpack.c.b16 %v3183, %v3177
  %v3568 = vpack.c.b16 %v3190, %v3184
  %v3569 = vpack.c.b16 %v3191, %v3185
  %v3570 = vpack.c.b16 %v3192, %v3186
  %v3571 = vpack.c.b16 %v3193, %v3187
  %v3572 = vpack.c.b16 %v3194, %v3188
  %v3573 = vpack.c.b16 %v3195, %v3189
  %v3574 = vpack.c.b16 %v3202, %v3196
  %v3575 = vpack.c.b16 %v3203, %v3197
  %v3576 = vpack.c.b16 %v3204, %v3198
  %v3577 = vpack.c.b16 %v3205, %v3199
  %v3578 = vpack.c.b16 %v3206, %v3200
  %v3579 = vpack.c.b16 %v3207, %v3201
  %v3580 = vpack.c.b16 %v3214, %v3208
  %v3581 = vpack.c.b16 %v3215, %v3209
  %v3582 = vpack.c.b16 %v3216, %v3210
  %v3583 = vpack.c.b16 %v3217, %v3211
  %v3584 = vpack.c.b16 %v3218, %v3212
  %v3585 = vpack.c.b16 %v3219, %v3213
  %v3586 = vpack.c.b16 %v3226, %v3220
  %v3587 = vpack.c.b16 %v3227, %v3221
  %v3588 = vpack.c.b16 %v3228, %v3222
  %v3589 = vpack.c.b16 %v3229, %v3223
  %v3590 = vpack.c.b16 %v3230, %v3224
  %v3591 = vpack.c.b16 %v3231, %v3225
  %v3592 = vpack.c.b16 %v3238, %v3232
  %v3593 = vpack.c.b16 %v3239, %v3233
  %v3594 = vpack.c.b16 %v3240, %v3234
  %v3595 = vpack.c.b16 %v3241, %v3235
  %v3596 = vpack.c.b16 %v3242, %v3236
  %v3597 = vpack.c.b16 %v3243, %v3237
  %v3598 = vpack.c.b16 %v3250, %v3244
  %v3599 = vpack.c.b16 %v3251, %v3245
  %v3600 = vpack.c.b16 %v3252, %v3246
  %v3601 = vpack.c.b16 %v3253, %v3247
  %v3602 = vpack.c.b16 %v3254, %v3248
  %v3603 = vpack.c.b16 %v3255, %v3249
  %v3604 = vpack.c.b16 %v3262, %v3256
  %v3605 = vpack.c.b16 %v3263, %v3257
  %v3606 = vpack.c.b16 %v3264, %v3258
  %v3607 = vpack.c.b16 %v3265, %v3259
  %v3608 = vpack.c.b16 %v3266, %v3260
  %v3609 = vpack.c.b16 %v3267, %v3261
  %v3610 = vpack.c.b16 %v3274, %v3268
  %v3611 = vpack.c.b16 %v3275, %v3269
  %v3612 = vpack.c.b16 %v3276, %v3270
  %v3613 = vpack.c.b16 %v3277, %v3271
  %v3614 = vpack.c.b16 %v3278, %v3272
  %v3615 = vpack.c.b16 %v3279, %v3273
  %v3616 = vpack.c.b16 %v3286, %v3280
  %v3617 = vpack.c.b16 %v3287, %v3281
  %v3618 = vpack.c.b16 %v3288, %v3282
  %v3619 = vpack.c.b16 %v3289, %v3283
  %v3620 = vpack.c.b16 %v3290, %v3284
  %v3621 = vpack.c.b16 %v3291, %v3285
  %v3622 = vpack.c.b16 %v3298, %v3292
  %v3623 = vpack.c.b16 %v3299, %v3293
  %v3624 = vpack.c.b16 %v3300, %v3294
  %v3625 = vpack.c.b16 %v3301, %v3295
  %v3626 = vpack.c.b16 %v3302, %v3296
  %v3627 = vpack.c.b16 %v3303, %v3297
  %v3628 = vpack.c.b16 %v3310, %v3304
  %v3629 = vpack.c.b16 %v3311, %v3305
  %v3630 = vpack.c.b16 %v3312, %v3306
  %v3631 = vpack.c.b16 %v3313, %v3307
  %v3632 = vpack.c.b16 %v3314, %v3308
  %v3633 = vpack.c.b16 %v3315, %v3309
  %v3634 = vpack.c.b16 %v3322, %v3316
  %v3635 = vpack.c.b16 %v3323, %v3317
  %v3636 = vpack.c.b16 %v3324, %v3318
  %v3637 = vpack.c.b16 %v3325, %v3319
  %v3638 = vpack.c.b16 %v3326, %v3320
  %v3639 = vpack.c.b16 %v3327, %v3321
  %v3640 = vpack.c.b16 %v3334, %v3328
  %v3641 = vpack.c.b16 %v3335, %v3329
  %v3642 = vpack.c.b16 %v3336, %v3330
  %v3643 = vpack.c.b16 %v3337, %v3331
  %v3644 = vpack.c.b16 %v3338, %v3332
  %v3645 = vpack.c.b16 %v3339, %v3333
  %v3646 = vpack.c.b16 %v3346, %v3340
  %v3647 = vpack.c.b16 %v3347, %v3341
  %v3648 = vpack.c.b16 %v3348, %v3342
  %v3649 = vpack.c.b16 %v3349, %v3343
  %v3650 = vpack.c.b16 %v3350, %v3344
  %v3651 = vpack.c.b16 %v3351, %v3345
  %v3652 = vpack.c.b16 %v3358, %v3352
  %v3653 = vpack.c.b16 %v3359, %v3353
  %v3654 = vpack.c.b16 %v3360, %v3354
  %v3655 = vpack.c.b16 %v3361, %v3355
  %v3656 = vpack.c.b16 %v3362, %v3356
  %v3657 = vpack.c.b16 %v3363, %v3357
  %v3658 = vpack.c.b16 %v3370, %v3364
  %v3659 = vpack.c.b16 %v3371, %v3365
  %v3660 = vpack.c.b16 %v3372, %v3366
  %v3661 = vpack.c.b16 %v3373, %v3367
  %v3662 = vpack.c.b16 %v3374, %v3368
  %v3663 = vpack.c.b16 %v3375, %v3369
  %3952 = vmatprep.subr.bf16.mxu0 %v3377
  %3953 = vmatpush1.bf16.msra.mxu0 %v3376
  %3954 = vmatprep.subr.bf16.mxu0 %v3383
  %3955 = vmatpush1.bf16.msra.mxu0 %v3382
  %3956 = vmatprep.subr.bf16.mxu0 %v3389
  %3957 = vmatpush1.bf16.msra.mxu0 %v3388
  %3958 = vmatprep.subr.bf16.mxu0 %v3395
  %3959 = vmatpush1.bf16.msra.mxu0 %v3394
  %3960 = vmatprep.subr.bf16.mxu0 %v3401
  %3961 = vmatpush1.bf16.msra.mxu0 %v3400
  %3962 = vmatprep.subr.bf16.mxu0 %v3407
  %3963 = vmatpush1.bf16.msra.mxu0 %v3406
  %3964 = vmatprep.subr.bf16.mxu0 %v3413
  %3965 = vmatpush1.bf16.msra.mxu0 %v3412
  %3966 = vmatprep.subr.bf16.mxu0 %v3419
  %3967 = vmatpush1.bf16.msra.mxu0 %v3418
  %3968 = vmatprep.subr.bf16.mxu0 %v3425
  %3969 = vmatpush1.bf16.msra.mxu0 %v3424
  %3970 = vmatprep.subr.bf16.mxu0 %v3431
  %3971 = vmatpush1.bf16.msra.mxu0 %v3430
  %3972 = vmatprep.subr.bf16.mxu0 %v3437
  %3973 = vmatpush1.bf16.msra.mxu0 %v3436
  %3974 = vmatprep.subr.bf16.mxu0 %v3443
  %3975 = vmatpush1.bf16.msra.mxu0 %v3442
  %3976 = vmatprep.subr.bf16.mxu0 %v3449
  %3977 = vmatpush1.bf16.msra.mxu0 %v3448
  %3978 = vmatprep.subr.bf16.mxu0 %v3455
  %3979 = vmatpush1.bf16.msra.mxu0 %v3454
  %3980 = vmatprep.subr.bf16.mxu0 %v3461
  %3981 = vmatpush1.bf16.msra.mxu0 %v3460
  %3982 = vmatprep.subr.bf16.mxu0 %v3467
  %3983 = vmatpush1.bf16.msra.mxu0 %v3466
  %3984 = vmatprep.mubr.bf16.mxu0 %v2187
  %3985 = vmatmul.mubr.bf16.gmra.mrb[0].mxu0 %v2186
  %v3986 = vpop.f32.mrb[0].mxu0
  %v3987 = vadd.f32 %v2485, %v3986
  %v3988 = vpop.f32.mrb[0].mxu0
  %v3989 = vadd.f32 %v2489, %v3988
  %v3990 = vpop.f32.mrb[0].mxu0
  %v3991 = vpop.f32.mrb[0].mxu0
  %3992 = vdwg.mxu0
  %3993 = vmatprep.subr.bf16.mxu0 %v3473
  %3994 = vmatpush1.bf16.msra.mxu0 %v3472
  %3995 = vmatprep.subr.bf16.mxu0 %v3479
  %3996 = vmatpush1.bf16.msra.mxu0 %v3478
  %3997 = vmatprep.subr.bf16.mxu0 %v3485
  %3998 = vmatpush1.bf16.msra.mxu0 %v3484
  %3999 = vmatprep.subr.bf16.mxu0 %v3491
  %4000 = vmatpush1.bf16.msra.mxu0 %v3490
  %4001 = vmatprep.subr.bf16.mxu0 %v3497
  %4002 = vmatpush1.bf16.msra.mxu0 %v3496
  %4003 = vmatprep.subr.bf16.mxu0 %v3503
  %4004 = vmatpush1.bf16.msra.mxu0 %v3502
  %4005 = vmatprep.subr.bf16.mxu0 %v3509
  %4006 = vmatpush1.bf16.msra.mxu0 %v3508
  %4007 = vmatprep.subr.bf16.mxu0 %v3515
  %4008 = vmatpush1.bf16.msra.mxu0 %v3514
  %4009 = vmatprep.subr.bf16.mxu0 %v3521
  %4010 = vmatpush1.bf16.msra.mxu0 %v3520
  %4011 = vmatprep.subr.bf16.mxu0 %v3527
  %4012 = vmatpush1.bf16.msra.mxu0 %v3526
  %4013 = vmatprep.subr.bf16.mxu0 %v3533
  %4014 = vmatpush1.bf16.msra.mxu0 %v3532
  %4015 = vmatprep.subr.bf16.mxu0 %v3539
  %4016 = vmatpush1.bf16.msra.mxu0 %v3538
  %4017 = vmatprep.subr.bf16.mxu0 %v3545
  %4018 = vmatpush1.bf16.msra.mxu0 %v3544
  %4019 = vmatprep.subr.bf16.mxu0 %v3551
  %4020 = vmatpush1.bf16.msra.mxu0 %v3550
  %4021 = vmatprep.subr.bf16.mxu0 %v3557
  %4022 = vmatpush1.bf16.msra.mxu0 %v3556
  %4023 = vmatprep.subr.bf16.mxu0 %v3563
  %4024 = vmatpush1.bf16.msra.mxu0 %v3562
  %4025 = vmatprep.mubr.bf16.mxu0 %v2189
  %4026 = vmatmul.mubr.bf16.gmra.mrb[0].mxu0 %v2188
  %v4027 = vpop.f32.mrb[0].mxu0
  %v4028 = vadd.f32 %v3987, %v4027
  %v4029 = vpop.f32.mrb[0].mxu0
  %v4030 = vadd.f32 %v3989, %v4029
  %v4031 = vpop.f32.mrb[0].mxu0
  %v4032 = vpop.f32.mrb[0].mxu0
  %4033 = vdwg.mxu0
  %4034 = vmatprep.subr.bf16.mxu0 %v3569
  %4035 = vmatpush1.bf16.msra.mxu0 %v3568
  %4036 = vmatprep.subr.bf16.mxu0 %v3575
  %4037 = vmatpush1.bf16.msra.mxu0 %v3574
  %4038 = vmatprep.subr.bf16.mxu0 %v3581
  %4039 = vmatpush1.bf16.msra.mxu0 %v3580
  %4040 = vmatprep.subr.bf16.mxu0 %v3587
  %4041 = vmatpush1.bf16.msra.mxu0 %v3586
  %4042 = vmatprep.subr.bf16.mxu0 %v3593
  %4043 = vmatpush1.bf16.msra.mxu0 %v3592
  %4044 = vmatprep.subr.bf16.mxu0 %v3599
  %4045 = vmatpush1.bf16.msra.mxu0 %v3598
  %4046 = vmatprep.subr.bf16.mxu0 %v3605
  %4047 = vmatpush1.bf16.msra.mxu0 %v3604
  %4048 = vmatprep.subr.bf16.mxu0 %v3611
  %4049 = vmatpush1.bf16.msra.mxu0 %v3610
  %4050 = vmatprep.subr.bf16.mxu0 %v3617
  %4051 = vmatpush1.bf16.msra.mxu0 %v3616
  %4052 = vmatprep.subr.bf16.mxu0 %v3623
  %4053 = vmatpush1.bf16.msra.mxu0 %v3622
  %4054 = vmatprep.subr.bf16.mxu0 %v3629
  %4055 = vmatpush1.bf16.msra.mxu0 %v3628
  %4056 = vmatprep.subr.bf16.mxu0 %v3635
  %4057 = vmatpush1.bf16.msra.mxu0 %v3634
  %4058 = vmatprep.subr.bf16.mxu0 %v3641
  %4059 = vmatpush1.bf16.msra.mxu0 %v3640
  %4060 = vmatprep.subr.bf16.mxu0 %v3647
  %4061 = vmatpush1.bf16.msra.mxu0 %v3646
  %4062 = vmatprep.subr.bf16.mxu0 %v3653
  %4063 = vmatpush1.bf16.msra.mxu0 %v3652
  %4064 = vmatprep.subr.bf16.mxu0 %v3659
  %4065 = vmatpush1.bf16.msra.mxu0 %v3658
  %4066 = vmatprep.mubr.bf16.mxu0 %v2191
  %4067 = vmatmul.mubr.bf16.gmra.mrb[0].mxu0 %v2190
  %v4068 = vpop.f32.mrb[0].mxu0
  %v4069 = vadd.f32 %v4028, %v4068
  %v4070 = vpop.f32.mrb[0].mxu0
  %v4071 = vadd.f32 %v4030, %v4070
  %v4072 = vpop.f32.mrb[0].mxu0
  %v4073 = vpop.f32.mrb[0].mxu0
  %4074 = vdwg.mxu0
  %4075 = vmatprep.subr.bf16.mxu0 %v3379
  %4076 = vmatpush1.bf16.msra.mxu0 %v3378
  %4077 = vmatprep.subr.bf16.mxu0 %v3385
  %4078 = vmatpush1.bf16.msra.mxu0 %v3384
  %4079 = vmatprep.subr.bf16.mxu0 %v3391
  %4080 = vmatpush1.bf16.msra.mxu0 %v3390
  %4081 = vmatprep.subr.bf16.mxu0 %v3397
  %4082 = vmatpush1.bf16.msra.mxu0 %v3396
  %4083 = vmatprep.subr.bf16.mxu0 %v3403
  %4084 = vmatpush1.bf16.msra.mxu0 %v3402
  %4085 = vmatprep.subr.bf16.mxu0 %v3409
  %4086 = vmatpush1.bf16.msra.mxu0 %v3408
  %4087 = vmatprep.subr.bf16.mxu0 %v3415
  %4088 = vmatpush1.bf16.msra.mxu0 %v3414
  %4089 = vmatprep.subr.bf16.mxu0 %v3421
  %4090 = vmatpush1.bf16.msra.mxu0 %v3420
  %4091 = vmatprep.subr.bf16.mxu0 %v3427
  %4092 = vmatpush1.bf16.msra.mxu0 %v3426
  %4093 = vmatprep.subr.bf16.mxu0 %v3433
  %4094 = vmatpush1.bf16.msra.mxu0 %v3432
  %4095 = vmatprep.subr.bf16.mxu0 %v3439
  %4096 = vmatpush1.bf16.msra.mxu0 %v3438
  %4097 = vmatprep.subr.bf16.mxu0 %v3445
  %4098 = vmatpush1.bf16.msra.mxu0 %v3444
  %4099 = vmatprep.subr.bf16.mxu0 %v3451
  %4100 = vmatpush1.bf16.msra.mxu0 %v3450
  %4101 = vmatprep.subr.bf16.mxu0 %v3457
  %4102 = vmatpush1.bf16.msra.mxu0 %v3456
  %4103 = vmatprep.subr.bf16.mxu0 %v3463
  %4104 = vmatpush1.bf16.msra.mxu0 %v3462
  %4105 = vmatprep.subr.bf16.mxu0 %v3469
  %4106 = vmatpush1.bf16.msra.mxu0 %v3468
  %4107 = vmatprep.mubr.bf16.mxu0 %v2187
  %4108 = vmatmul.mubr.bf16.gmra.mrb[0].mxu0 %v2186
  %v4109 = vpop.f32.mrb[0].mxu0
  %v4110 = vadd.f32 %v2493, %v4109
  %v4111 = vpop.f32.mrb[0].mxu0
  %v4112 = vadd.f32 %v2497, %v4111
  %v4113 = vpop.f32.mrb[0].mxu0
  %v4114 = vpop.f32.mrb[0].mxu0
  %4115 = vdwg.mxu0
  %4116 = vmatprep.subr.bf16.mxu0 %v3475
  %4117 = vmatpush1.bf16.msra.mxu0 %v3474
  %4118 = vmatprep.subr.bf16.mxu0 %v3481
  %4119 = vmatpush1.bf16.msra.mxu0 %v3480
  %4120 = vmatprep.subr.bf16.mxu0 %v3487
  %4121 = vmatpush1.bf16.msra.mxu0 %v3486
  %4122 = vmatprep.subr.bf16.mxu0 %v3493
  %4123 = vmatpush1.bf16.msra.mxu0 %v3492
  %4124 = vmatprep.subr.bf16.mxu0 %v3499
  %4125 = vmatpush1.bf16.msra.mxu0 %v3498
  %4126 = vmatprep.subr.bf16.mxu0 %v3505
  %4127 = vmatpush1.bf16.msra.mxu0 %v3504
  %4128 = vmatprep.subr.bf16.mxu0 %v3511
  %4129 = vmatpush1.bf16.msra.mxu0 %v3510
  %4130 = vmatprep.subr.bf16.mxu0 %v3517
  %4131 = vmatpush1.bf16.msra.mxu0 %v3516
  %4132 = vmatprep.subr.bf16.mxu0 %v3523
  %4133 = vmatpush1.bf16.msra.mxu0 %v3522
  %4134 = vmatprep.subr.bf16.mxu0 %v3529
  %4135 = vmatpush1.bf16.msra.mxu0 %v3528
  %4136 = vmatprep.subr.bf16.mxu0 %v3535
  %4137 = vmatpush1.bf16.msra.mxu0 %v3534
  %4138 = vmatprep.subr.bf16.mxu0 %v3541
  %4139 = vmatpush1.bf16.msra.mxu0 %v3540
  %4140 = vmatprep.subr.bf16.mxu0 %v3547
  %4141 = vmatpush1.bf16.msra.mxu0 %v3546
  %4142 = vmatprep.subr.bf16.mxu0 %v3553
  %4143 = vmatpush1.bf16.msra.mxu0 %v3552
  %4144 = vmatprep.subr.bf16.mxu0 %v3559
  %4145 = vmatpush1.bf16.msra.mxu0 %v3558
  %4146 = vmatprep.subr.bf16.mxu0 %v3565
  %4147 = vmatpush1.bf16.msra.mxu0 %v3564
  %4148 = vmatprep.mubr.bf16.mxu0 %v2189
  %4149 = vmatmul.mubr.bf16.gmra.mrb[0].mxu0 %v2188
  %v4150 = vpop.f32.mrb[0].mxu0
  %v4151 = vadd.f32 %v4110, %v4150
  %v4152 = vpop.f32.mrb[0].mxu0
  %v4153 = vadd.f32 %v4112, %v4152
  %v4154 = vpop.f32.mrb[0].mxu0
  %v4155 = vpop.f32.mrb[0].mxu0
  %4156 = vdwg.mxu0
  %4157 = vmatprep.subr.bf16.mxu0 %v3571
  %4158 = vmatpush1.bf16.msra.mxu0 %v3570
  %4159 = vmatprep.subr.bf16.mxu0 %v3577
  %4160 = vmatpush1.bf16.msra.mxu0 %v3576
  %4161 = vmatprep.subr.bf16.mxu0 %v3583
  %4162 = vmatpush1.bf16.msra.mxu0 %v3582
  %4163 = vmatprep.subr.bf16.mxu0 %v3589
  %4164 = vmatpush1.bf16.msra.mxu0 %v3588
  %4165 = vmatprep.subr.bf16.mxu0 %v3595
  %4166 = vmatpush1.bf16.msra.mxu0 %v3594
  %4167 = vmatprep.subr.bf16.mxu0 %v3601
  %4168 = vmatpush1.bf16.msra.mxu0 %v3600
  %4169 = vmatprep.subr.bf16.mxu0 %v3607
  %4170 = vmatpush1.bf16.msra.mxu0 %v3606
  %4171 = vmatprep.subr.bf16.mxu0 %v3613
  %4172 = vmatpush1.bf16.msra.mxu0 %v3612
  %4173 = vmatprep.subr.bf16.mxu0 %v3619
  %4174 = vmatpush1.bf16.msra.mxu0 %v3618
  %4175 = vmatprep.subr.bf16.mxu0 %v3625
  %4176 = vmatpush1.bf16.msra.mxu0 %v3624
  %4177 = vmatprep.subr.bf16.mxu0 %v3631
  %4178 = vmatpush1.bf16.msra.mxu0 %v3630
  %4179 = vmatprep.subr.bf16.mxu0 %v3637
  %4180 = vmatpush1.bf16.msra.mxu0 %v3636
  %4181 = vmatprep.subr.bf16.mxu0 %v3643
  %4182 = vmatpush1.bf16.msra.mxu0 %v3642
  %4183 = vmatprep.subr.bf16.mxu0 %v3649
  %4184 = vmatpush1.bf16.msra.mxu0 %v3648
  %4185 = vmatprep.subr.bf16.mxu0 %v3655
  %4186 = vmatpush1.bf16.msra.mxu0 %v3654
  %4187 = vmatprep.subr.bf16.mxu0 %v3661
  %4188 = vmatpush1.bf16.msra.mxu0 %v3660
  %4189 = vmatprep.mubr.bf16.mxu0 %v2191
  %4190 = vmatmul.mubr.bf16.gmra.mrb[0].mxu0 %v2190
  %v4191 = vpop.f32.mrb[0].mxu0
  %v4192 = vadd.f32 %v4151, %v4191
  %v4193 = vpop.f32.mrb[0].mxu0
  %v4194 = vadd.f32 %v4153, %v4193
  %v4195 = vpop.f32.mrb[0].mxu0
  %v4196 = vpop.f32.mrb[0].mxu0
  %4197 = vdwg.mxu0
  %4198 = vmatprep.subr.bf16.mxu0 %v3381
  %4199 = vmatpush1.bf16.msra.mxu0 %v3380
  %4200 = vmatprep.subr.bf16.mxu0 %v3387
  %4201 = vmatpush1.bf16.msra.mxu0 %v3386
  %4202 = vmatprep.subr.bf16.mxu0 %v3393
  %4203 = vmatpush1.bf16.msra.mxu0 %v3392
  %4204 = vmatprep.subr.bf16.mxu0 %v3399
  %4205 = vmatpush1.bf16.msra.mxu0 %v3398
  %4206 = vmatprep.subr.bf16.mxu0 %v3405
  %4207 = vmatpush1.bf16.msra.mxu0 %v3404
  %4208 = vmatprep.subr.bf16.mxu0 %v3411
  %4209 = vmatpush1.bf16.msra.mxu0 %v3410
  %4210 = vmatprep.subr.bf16.mxu0 %v3417
  %4211 = vmatpush1.bf16.msra.mxu0 %v3416
  %4212 = vmatprep.subr.bf16.mxu0 %v3423
  %4213 = vmatpush1.bf16.msra.mxu0 %v3422
  %4214 = vmatprep.subr.bf16.mxu0 %v3429
  %4215 = vmatpush1.bf16.msra.mxu0 %v3428
  %4216 = vmatprep.subr.bf16.mxu0 %v3435
  %4217 = vmatpush1.bf16.msra.mxu0 %v3434
  %4218 = vmatprep.subr.bf16.mxu0 %v3441
  %4219 = vmatpush1.bf16.msra.mxu0 %v3440
  %4220 = vmatprep.subr.bf16.mxu0 %v3447
  %4221 = vmatpush1.bf16.msra.mxu0 %v3446
  %4222 = vmatprep.subr.bf16.mxu0 %v3453
  %4223 = vmatpush1.bf16.msra.mxu0 %v3452
  %4224 = vmatprep.subr.bf16.mxu0 %v3459
  %4225 = vmatpush1.bf16.msra.mxu0 %v3458
  %4226 = vmatprep.subr.bf16.mxu0 %v3465
  %4227 = vmatpush1.bf16.msra.mxu0 %v3464
  %4228 = vmatprep.subr.bf16.mxu0 %v3471
  %4229 = vmatpush1.bf16.msra.mxu0 %v3470
  %4230 = vmatprep.mubr.bf16.mxu0 %v2187
  %4231 = vmatmul.mubr.bf16.gmra.mrb[0].mxu0 %v2186
  %v4232 = vpop.f32.mrb[0].mxu0
  %v4233 = vadd.f32 %v2501, %v4232
  %v4234 = vpop.f32.mrb[0].mxu0
  %v4235 = vadd.f32 %v2505, %v4234
  %v4236 = vpop.f32.mrb[0].mxu0
  %v4237 = vpop.f32.mrb[0].mxu0
  %4238 = vdwg.mxu0
  %4239 = vmatprep.subr.bf16.mxu0 %v3477
  %4240 = vmatpush1.bf16.msra.mxu0 %v3476
  %4241 = vmatprep.subr.bf16.mxu0 %v3483
  %4242 = vmatpush1.bf16.msra.mxu0 %v3482
  %4243 = vmatprep.subr.bf16.mxu0 %v3489
  %4244 = vmatpush1.bf16.msra.mxu0 %v3488
  %4245 = vmatprep.subr.bf16.mxu0 %v3495
  %4246 = vmatpush1.bf16.msra.mxu0 %v3494
  %4247 = vmatprep.subr.bf16.mxu0 %v3501
  %4248 = vmatpush1.bf16.msra.mxu0 %v3500
  %4249 = vmatprep.subr.bf16.mxu0 %v3507
  %4250 = vmatpush1.bf16.msra.mxu0 %v3506
  %4251 = vmatprep.subr.bf16.mxu0 %v3513
  %4252 = vmatpush1.bf16.msra.mxu0 %v3512
  %4253 = vmatprep.subr.bf16.mxu0 %v3519
  %4254 = vmatpush1.bf16.msra.mxu0 %v3518
  %4255 = vmatprep.subr.bf16.mxu0 %v3525
  %4256 = vmatpush1.bf16.msra.mxu0 %v3524
  %4257 = vmatprep.subr.bf16.mxu0 %v3531
  %4258 = vmatpush1.bf16.msra.mxu0 %v3530
  %4259 = vmatprep.subr.bf16.mxu0 %v3537
  %4260 = vmatpush1.bf16.msra.mxu0 %v3536
  %4261 = vmatprep.subr.bf16.mxu0 %v3543
  %4262 = vmatpush1.bf16.msra.mxu0 %v3542
  %4263 = vmatprep.subr.bf16.mxu0 %v3549
  %4264 = vmatpush1.bf16.msra.mxu0 %v3548
  %4265 = vmatprep.subr.bf16.mxu0 %v3555
  %4266 = vmatpush1.bf16.msra.mxu0 %v3554
  %4267 = vmatprep.subr.bf16.mxu0 %v3561
  %4268 = vmatpush1.bf16.msra.mxu0 %v3560
  %4269 = vmatprep.subr.bf16.mxu0 %v3567
  %4270 = vmatpush1.bf16.msra.mxu0 %v3566
  %4271 = vmatprep.mubr.bf16.mxu0 %v2189
  %4272 = vmatmul.mubr.bf16.gmra.mrb[0].mxu0 %v2188
  %v4273 = vpop.f32.mrb[0].mxu0
  %v4274 = vadd.f32 %v4233, %v4273
  %v4275 = vpop.f32.mrb[0].mxu0
  %v4276 = vadd.f32 %v4235, %v4275
  %v4277 = vpop.f32.mrb[0].mxu0
  %v4278 = vpop.f32.mrb[0].mxu0
  %4279 = vdwg.mxu0
  %4280 = vmatprep.subr.bf16.mxu0 %v3573
  %4281 = vmatpush1.bf16.msra.mxu0 %v3572
  %4282 = vmatprep.subr.bf16.mxu0 %v3579
  %4283 = vmatpush1.bf16.msra.mxu0 %v3578
  %4284 = vmatprep.subr.bf16.mxu0 %v3585
  %4285 = vmatpush1.bf16.msra.mxu0 %v3584
  %4286 = vmatprep.subr.bf16.mxu0 %v3591
  %4287 = vmatpush1.bf16.msra.mxu0 %v3590
  %4288 = vmatprep.subr.bf16.mxu0 %v3597
  %4289 = vmatpush1.bf16.msra.mxu0 %v3596
  %4290 = vmatprep.subr.bf16.mxu0 %v3603
  %4291 = vmatpush1.bf16.msra.mxu0 %v3602
  %4292 = vmatprep.subr.bf16.mxu0 %v3609
  %4293 = vmatpush1.bf16.msra.mxu0 %v3608
  %4294 = vmatprep.subr.bf16.mxu0 %v3615
  %4295 = vmatpush1.bf16.msra.mxu0 %v3614
  %4296 = vmatprep.subr.bf16.mxu0 %v3621
  %4297 = vmatpush1.bf16.msra.mxu0 %v3620
  %4298 = vmatprep.subr.bf16.mxu0 %v3627
  %4299 = vmatpush1.bf16.msra.mxu0 %v3626
  %4300 = vmatprep.subr.bf16.mxu0 %v3633
  %4301 = vmatpush1.bf16.msra.mxu0 %v3632
  %4302 = vmatprep.subr.bf16.mxu0 %v3639
  %4303 = vmatpush1.bf16.msra.mxu0 %v3638
  %4304 = vmatprep.subr.bf16.mxu0 %v3645
  %4305 = vmatpush1.bf16.msra.mxu0 %v3644
  %4306 = vmatprep.subr.bf16.mxu0 %v3651
  %4307 = vmatpush1.bf16.msra.mxu0 %v3650
  %4308 = vmatprep.subr.bf16.mxu0 %v3657
  %4309 = vmatpush1.bf16.msra.mxu0 %v3656
  %4310 = vmatprep.subr.bf16.mxu0 %v3663
  %4311 = vmatpush1.bf16.msra.mxu0 %v3662
  %4312 = vmatprep.mubr.bf16.mxu0 %v2191
  %4313 = vmatmul.mubr.bf16.gmra.mrb[0].mxu0 %v2190
  %v4314 = vpop.f32.mrb[0].mxu0
  %v4315 = vadd.f32 %v4274, %v4314
  %v4316 = vpop.f32.mrb[0].mxu0
  %v4317 = vadd.f32 %v4276, %v4316
  %v4318 = vpop.f32.mrb[0].mxu0
  %v4319 = vpop.f32.mrb[0].mxu0
  %4320 = vdwg.mxu0
  %v4321 = vmax.f32 %v4069, 0.0
  %v4322 = vmax.f32 %v4071, 0.0
  %v4323 = vmax.f32 %v4192, 0.0
  %v4324 = vmax.f32 %v4194, 0.0
  %v4325 = vmax.f32 %v4315, 0.0
  %v4326 = vmax.f32 %v4317, 0.0
  %v4327 = vpack.c.bf16 %v4321, %v4321
  %v4328 = vpack.c.bf16 %v4322, %v4322
  %v4329 = vpack.c.bf16 %v4323, %v4323
  %v4330 = vpack.c.bf16 %v4324, %v4324
  %v4331 = vpack.c.bf16 %v4325, %v4325
  %v4332 = vpack.c.bf16 %v4326, %v4326
  %v4333 = vld [vmem:[%s5] sm:$0xf]
  %v4334 = vld [vmem:[%s5 + $0x4] sm:$0xf]
  %v4335 = vld [vmem:[%s5 + $0x8] sm:$0xf]
  %v4336 = vld [vmem:[%s5 + $0xc] sm:$0xf]
  %v4337 = vld [vmem:[%s5 + $0x10] sm:$0xf]
  %v4338 = vld [vmem:[%s5 + $0x14] sm:$0xf]
  %v4339 = vld [vmem:[%s5 + $0x18] sm:$0xf]
  %v4340 = vld [vmem:[%s5 + $0x1c] sm:$0xf]
  %v4341 = vld [vmem:[%s5 + $0x20] sm:$0xf]
  %v4342 = vld [vmem:[%s5 + $0x24] sm:$0xf]
  %v4343 = vld [vmem:[%s5 + $0x28] sm:$0xf]
  %v4344 = vld [vmem:[%s5 + $0x2c] sm:$0xf]
  %v4345 = vld [vmem:[%s5 + $0x30] sm:$0xf]
  %v4346 = vld [vmem:[%s5 + $0x34] sm:$0xf]
  %v4347 = vld [vmem:[%s5 + $0x38] sm:$0xf]
  %v4348 = vld [vmem:[%s5 + $0x3c] sm:$0xf]
  %v4349 = vld [vmem:[%s5 + $0x40] sm:$0xf]
  %v4350 = vld [vmem:[%s5 + $0x44] sm:$0xf]
  %v4351 = vld [vmem:[%s5 + $0x48] sm:$0xf]
  %v4352 = vld [vmem:[%s5 + $0x4c] sm:$0xf]
  %v4353 = vld [vmem:[%s5 + $0x50] sm:$0xf]
  %v4354 = vld [vmem:[%s5 + $0x54] sm:$0xf]
  %v4355 = vld [vmem:[%s5 + $0x58] sm:$0xf]
  %v4356 = vld [vmem:[%s5 + $0x5c] sm:$0xf]
  %v4357 = vld [vmem:[%s5 + $0x60] sm:$0xf]
  %v4358 = vld [vmem:[%s5 + $0x64] sm:$0xf]
  %v4359 = vld [vmem:[%s5 + $0x68] sm:$0xf]
  %v4360 = vld [vmem:[%s5 + $0x6c] sm:$0xf]
  %v4361 = vld [vmem:[%s5 + $0x70] sm:$0xf]
  %v4362 = vld [vmem:[%s5 + $0x74] sm:$0xf]
  %v4363 = vld [vmem:[%s5 + $0x78] sm:$0xf]
  %v4364 = vld [vmem:[%s5 + $0x7c] sm:$0xf]
  %v4365 = vld [vmem:[%s5 + $0x80] sm:$0xf]
  %v4366 = vld [vmem:[%s5 + $0x84] sm:$0xf]
  %v4367 = vld [vmem:[%s5 + $0x88] sm:$0xf]
  %v4368 = vld [vmem:[%s5 + $0x8c] sm:$0xf]
  %v4369 = vld [vmem:[%s5 + $0x90] sm:$0xf]
  %v4370 = vld [vmem:[%s5 + $0x94] sm:$0xf]
  %v4371 = vld [vmem:[%s5 + $0x98] sm:$0xf]
  %v4372 = vld [vmem:[%s5 + $0x9c] sm:$0xf]
  %v4373 = vld [vmem:[%s5 + $0xa0] sm:$0xf]
  %v4374 = vld [vmem:[%s5 + $0xa4] sm:$0xf]
  %v4375 = vld [vmem:[%s5 + $0xa8] sm:$0xf]
  %v4376 = vld [vmem:[%s5 + $0xac] sm:$0xf]
  %v4377 = vld [vmem:[%s5 + $0xb0] sm:$0xf]
  %v4378 = vld [vmem:[%s5 + $0xb4] sm:$0xf]
  %v4379 = vld [vmem:[%s5 + $0xb8] sm:$0xf]
  %v4380 = vld [vmem:[%s5 + $0xbc] sm:$0xf]
  %v4381 = vld [vmem:[%s5 + $0xc0] sm:$0xf]
  %v4382 = vld [vmem:[%s5 + $0xc4] sm:$0xf]
  %v4383 = vld [vmem:[%s5 + $0xc8] sm:$0xf]
  %v4384 = vld [vmem:[%s5 + $0xcc] sm:$0xf]
  %v4385 = vld [vmem:[%s5 + $0xd0] sm:$0xf]
  %v4386 = vld [vmem:[%s5 + $0xd4] sm:$0xf]
  %v4387 = vld [vmem:[%s5 + $0xd8] sm:$0xf]
  %v4388 = vld [vmem:[%s5 + $0xdc] sm:$0xf]
  %v4389 = vld [vmem:[%s5 + $0xe0] sm:$0xf]
  %v4390 = vld [vmem:[%s5 + $0xe4] sm:$0xf]
  %v4391 = vld [vmem:[%s5 + $0xe8] sm:$0xf]
  %v4392 = vld [vmem:[%s5 + $0xec] sm:$0xf]
  %v4393 = vld [vmem:[%s5 + $0xf0] sm:$0xf]
  %v4394 = vld [vmem:[%s5 + $0xf4] sm:$0xf]
  %v4395 = vld [vmem:[%s5 + $0xf8] sm:$0xf]
  %v4396 = vld [vmem:[%s5 + $0xfc] sm:$0xf]
  %v4397 = vld [vmem:[%s5 + $0x100] sm:$0xf]
  %v4398 = vld [vmem:[%s5 + $0x104] sm:$0xf]
  %v4399 = vld [vmem:[%s5 + $0x108] sm:$0xf]
  %v4400 = vld [vmem:[%s5 + $0x10c] sm:$0xf]
  %v4401 = vld [vmem:[%s5 + $0x110] sm:$0xf]
  %v4402 = vld [vmem:[%s5 + $0x114] sm:$0xf]
  %v4403 = vld [vmem:[%s5 + $0x118] sm:$0xf]
  %v4404 = vld [vmem:[%s5 + $0x11c] sm:$0xf]
  %v4405 = vld [vmem:[%s5 + $0x120] sm:$0xf]
  %v4406 = vld [vmem:[%s5 + $0x124] sm:$0xf]
  %v4407 = vld [vmem:[%s5 + $0x128] sm:$0xf]
  %v4408 = vld [vmem:[%s5 + $0x12c] sm:$0xf]
  %v4409 = vld [vmem:[%s5 + $0x130] sm:$0xf]
  %v4410 = vld [vmem:[%s5 + $0x134] sm:$0xf]
  %v4411 = vld [vmem:[%s5 + $0x138] sm:$0xf]
  %v4412 = vld [vmem:[%s5 + $0x13c] sm:$0xf]
  %v4413 = vld [vmem:[%s5 + $0x140] sm:$0xf]
  %v4414 = vld [vmem:[%s5 + $0x144] sm:$0xf]
  %v4415 = vld [vmem:[%s5 + $0x148] sm:$0xf]
  %v4416 = vld [vmem:[%s5 + $0x14c] sm:$0xf]
  %v4417 = vld [vmem:[%s5 + $0x150] sm:$0xf]
  %v4418 = vld [vmem:[%s5 + $0x154] sm:$0xf]
  %v4419 = vld [vmem:[%s5 + $0x158] sm:$0xf]
  %v4420 = vld [vmem:[%s5 + $0x15c] sm:$0xf]
  %v4421 = vld [vmem:[%s5 + $0x160] sm:$0xf]
  %v4422 = vld [vmem:[%s5 + $0x164] sm:$0xf]
  %v4423 = vld [vmem:[%s5 + $0x168] sm:$0xf]
  %v4424 = vld [vmem:[%s5 + $0x16c] sm:$0xf]
  %v4425 = vld [vmem:[%s5 + $0x170] sm:$0xf]
  %v4426 = vld [vmem:[%s5 + $0x174] sm:$0xf]
  %v4427 = vld [vmem:[%s5 + $0x178] sm:$0xf]
  %v4428 = vld [vmem:[%s5 + $0x17c] sm:$0xf]
  %v4429 = vld [vmem:[%s6] sm:$0x1]
  %v4431 = vlaneseq
  %v4432 = vshrl.u32 %v4431, 7
  %v4433 = vsub.s32 0, %v4432
  %v4434 = vrot.slane %v4429, %v4433
  %v4532 = vunpack.c.l.b16 %v4333
  %v4533 = vunpack.c.l.b16 %v4334
  %v4534 = vunpack.c.l.b16 %v4335
  %v4535 = vunpack.c.l.b16 %v4336
  %v4536 = vunpack.c.l.b16 %v4337
  %v4537 = vunpack.c.l.b16 %v4338
  %v4538 = vunpack.c.l.b16 %v4339
  %v4539 = vunpack.c.l.b16 %v4340
  %v4540 = vunpack.c.l.b16 %v4341
  %v4541 = vunpack.c.l.b16 %v4342
  %v4542 = vunpack.c.l.b16 %v4343
  %v4543 = vunpack.c.l.b16 %v4344
  %v4544 = vunpack.c.l.b16 %v4345
  %v4545 = vunpack.c.l.b16 %v4346
  %v4546 = vunpack.c.l.b16 %v4347
  %v4547 = vunpack.c.l.b16 %v4348
  %v4548 = vunpack.c.l.b16 %v4349
  %v4549 = vunpack.c.l.b16 %v4350
  %v4550 = vunpack.c.l.b16 %v4351
  %v4551 = vunpack.c.l.b16 %v4352
  %v4552 = vunpack.c.l.b16 %v4353
  %v4553 = vunpack.c.l.b16 %v4354
  %v4554 = vunpack.c.l.b16 %v4355
  %v4555 = vunpack.c.l.b16 %v4356
  %v4556 = vunpack.c.l.b16 %v4357
  %v4557 = vunpack.c.l.b16 %v4358
  %v4558 = vunpack.c.l.b16 %v4359
  %v4559 = vunpack.c.l.b16 %v4360
  %v4560 = vunpack.c.l.b16 %v4361
  %v4561 = vunpack.c.l.b16 %v4362
  %v4562 = vunpack.c.l.b16 %v4363
  %v4563 = vunpack.c.l.b16 %v4364
  %v4564 = vunpack.c.l.b16 %v4365
  %v4565 = vunpack.c.l.b16 %v4366
  %v4566 = vunpack.c.l.b16 %v4367
  %v4567 = vunpack.c.l.b16 %v4368
  %v4568 = vunpack.c.l.b16 %v4369
  %v4569 = vunpack.c.l.b16 %v4370
  %v4570 = vunpack.c.l.b16 %v4371
  %v4571 = vunpack.c.l.b16 %v4372
  %v4572 = vunpack.c.l.b16 %v4373
  %v4573 = vunpack.c.l.b16 %v4374
  %v4574 = vunpack.c.l.b16 %v4375
  %v4575 = vunpack.c.l.b16 %v4376
  %v4576 = vunpack.c.l.b16 %v4377
  %v4577 = vunpack.c.l.b16 %v4378
  %v4578 = vunpack.c.l.b16 %v4379
  %v4579 = vunpack.c.l.b16 %v4380
  %v4580 = vunpack.c.l.b16 %v4381
  %v4581 = vunpack.c.l.b16 %v4382
  %v4582 = vunpack.c.l.b16 %v4383
  %v4583 = vunpack.c.l.b16 %v4384
  %v4584 = vunpack.c.l.b16 %v4385
  %v4585 = vunpack.c.l.b16 %v4386
  %v4586 = vunpack.c.l.b16 %v4387
  %v4587 = vunpack.c.l.b16 %v4388
  %v4588 = vunpack.c.l.b16 %v4389
  %v4589 = vunpack.c.l.b16 %v4390
  %v4590 = vunpack.c.l.b16 %v4391
  %v4591 = vunpack.c.l.b16 %v4392
  %v4592 = vunpack.c.l.b16 %v4393
  %v4593 = vunpack.c.l.b16 %v4394
  %v4594 = vunpack.c.l.b16 %v4395
  %v4595 = vunpack.c.l.b16 %v4396
  %v4596 = vunpack.c.l.b16 %v4397
  %v4597 = vunpack.c.l.b16 %v4398
  %v4598 = vunpack.c.l.b16 %v4399
  %v4599 = vunpack.c.l.b16 %v4400
  %v4600 = vunpack.c.l.b16 %v4401
  %v4601 = vunpack.c.l.b16 %v4402
  %v4602 = vunpack.c.l.b16 %v4403
  %v4603 = vunpack.c.l.b16 %v4404
  %v4604 = vunpack.c.l.b16 %v4405
  %v4605 = vunpack.c.l.b16 %v4406
  %v4606 = vunpack.c.l.b16 %v4407
  %v4607 = vunpack.c.l.b16 %v4408
  %v4608 = vunpack.c.l.b16 %v4409
  %v4609 = vunpack.c.l.b16 %v4410
  %v4610 = vunpack.c.l.b16 %v4411
  %v4611 = vunpack.c.l.b16 %v4412
  %v4612 = vunpack.c.l.b16 %v4413
  %v4613 = vunpack.c.l.b16 %v4414
  %v4614 = vunpack.c.l.b16 %v4415
  %v4615 = vunpack.c.l.b16 %v4416
  %v4616 = vunpack.c.l.b16 %v4417
  %v4617 = vunpack.c.l.b16 %v4418
  %v4618 = vunpack.c.l.b16 %v4419
  %v4619 = vunpack.c.l.b16 %v4420
  %v4620 = vunpack.c.l.b16 %v4421
  %v4621 = vunpack.c.l.b16 %v4422
  %v4622 = vunpack.c.l.b16 %v4423
  %v4623 = vunpack.c.l.b16 %v4424
  %v4624 = vunpack.c.l.b16 %v4425
  %v4625 = vunpack.c.l.b16 %v4426
  %v4626 = vunpack.c.l.b16 %v4427
  %v4627 = vunpack.c.l.b16 %v4428
  %v4628 = vpack.c.b16 %v4533, %v4532
  %v4629 = vpack.c.b16 %v4535, %v4534
  %v4630 = vpack.c.b16 %v4537, %v4536
  %v4631 = vpack.c.b16 %v4539, %v4538
  %v4632 = vpack.c.b16 %v4541, %v4540
  %v4633 = vpack.c.b16 %v4543, %v4542
  %v4634 = vpack.c.b16 %v4545, %v4544
  %v4635 = vpack.c.b16 %v4547, %v4546
  %v4636 = vpack.c.b16 %v4549, %v4548
  %v4637 = vpack.c.b16 %v4551, %v4550
  %v4638 = vpack.c.b16 %v4553, %v4552
  %v4639 = vpack.c.b16 %v4555, %v4554
  %v4640 = vpack.c.b16 %v4557, %v4556
  %v4641 = vpack.c.b16 %v4559, %v4558
  %v4642 = vpack.c.b16 %v4561, %v4560
  %v4643 = vpack.c.b16 %v4563, %v4562
  %v4644 = vpack.c.b16 %v4565, %v4564
  %v4645 = vpack.c.b16 %v4567, %v4566
  %v4646 = vpack.c.b16 %v4569, %v4568
  %v4647 = vpack.c.b16 %v4571, %v4570
  %v4648 = vpack.c.b16 %v4573, %v4572
  %v4649 = vpack.c.b16 %v4575, %v4574
  %v4650 = vpack.c.b16 %v4577, %v4576
  %v4651 = vpack.c.b16 %v4579, %v4578
  %v4652 = vpack.c.b16 %v4581, %v4580
  %v4653 = vpack.c.b16 %v4583, %v4582
  %v4654 = vpack.c.b16 %v4585, %v4584
  %v4655 = vpack.c.b16 %v4587, %v4586
  %v4656 = vpack.c.b16 %v4589, %v4588
  %v4657 = vpack.c.b16 %v4591, %v4590
  %v4658 = vpack.c.b16 %v4593, %v4592
  %v4659 = vpack.c.b16 %v4595, %v4594
  %v4660 = vpack.c.b16 %v4597, %v4596
  %v4661 = vpack.c.b16 %v4599, %v4598
  %v4662 = vpack.c.b16 %v4601, %v4600
  %v4663 = vpack.c.b16 %v4603, %v4602
  %v4664 = vpack.c.b16 %v4605, %v4604
  %v4665 = vpack.c.b16 %v4607, %v4606
  %v4666 = vpack.c.b16 %v4609, %v4608
  %v4667 = vpack.c.b16 %v4611, %v4610
  %v4668 = vpack.c.b16 %v4613, %v4612
  %v4669 = vpack.c.b16 %v4615, %v4614
  %v4670 = vpack.c.b16 %v4617, %v4616
  %v4671 = vpack.c.b16 %v4619, %v4618
  %v4672 = vpack.c.b16 %v4621, %v4620
  %v4673 = vpack.c.b16 %v4623, %v4622
  %v4674 = vpack.c.b16 %v4625, %v4624
  %v4675 = vpack.c.b16 %v4627, %v4626
  %4724 = vmatprep.subr.bf16.mxu0 0
  %4725 = vmatpush1.bf16.msra.mxu0 %v4628
  %4726 = vmatprep.subr.bf16.mxu0 0
  %4727 = vmatpush1.bf16.msra.mxu0 %v4629
  %4728 = vmatprep.subr.bf16.mxu0 0
  %4729 = vmatpush1.bf16.msra.mxu0 %v4630
  %4730 = vmatprep.subr.bf16.mxu0 0
  %4731 = vmatpush1.bf16.msra.mxu0 %v4631
  %4732 = vmatprep.subr.bf16.mxu0 0
  %4733 = vmatpush1.bf16.msra.mxu0 %v4632
  %4734 = vmatprep.subr.bf16.mxu0 0
  %4735 = vmatpush1.bf16.msra.mxu0 %v4633
  %4736 = vmatprep.subr.bf16.mxu0 0
  %4737 = vmatpush1.bf16.msra.mxu0 %v4634
  %4738 = vmatprep.subr.bf16.mxu0 0
  %4739 = vmatpush1.bf16.msra.mxu0 %v4635
  %4740 = vmatprep.subr.bf16.mxu0 0
  %4741 = vmatpush1.bf16.msra.mxu0 %v4636
  %4742 = vmatprep.subr.bf16.mxu0 0
  %4743 = vmatpush1.bf16.msra.mxu0 %v4637
  %4744 = vmatprep.subr.bf16.mxu0 0
  %4745 = vmatpush1.bf16.msra.mxu0 %v4638
  %4746 = vmatprep.subr.bf16.mxu0 0
  %4747 = vmatpush1.bf16.msra.mxu0 %v4639
  %4748 = vmatprep.subr.bf16.mxu0 0
  %4749 = vmatpush1.bf16.msra.mxu0 %v4640
  %4750 = vmatprep.subr.bf16.mxu0 0
  %4751 = vmatpush1.bf16.msra.mxu0 %v4641
  %4752 = vmatprep.subr.bf16.mxu0 0
  %4753 = vmatpush1.bf16.msra.mxu0 %v4642
  %4754 = vmatprep.subr.bf16.mxu0 0
  %4755 = vmatpush1.bf16.msra.mxu0 %v4643
  %4756 = vmatprep.mubr.bf16.mxu0 %v4328
  %4757 = vmatmul.mubr.bf16.gmra.mrb[0].mxu0 %v4327
  %v4758 = vpop.f32.mrb[0].mxu0
  %v4759 = vadd.f32 %v4434, %v4758
  %v4760 = vpop.f32.mrb[0].mxu0
  %v4761 = vpop.f32.mrb[0].mxu0
  %v4762 = vpop.f32.mrb[0].mxu0
  %4763 = vdwg.mxu0
  %4764 = vmatprep.subr.bf16.mxu0 0
  %4765 = vmatpush1.bf16.msra.mxu0 %v4644
  %4766 = vmatprep.subr.bf16.mxu0 0
  %4767 = vmatpush1.bf16.msra.mxu0 %v4645
  %4768 = vmatprep.subr.bf16.mxu0 0
  %4769 = vmatpush1.bf16.msra.mxu0 %v4646
  %4770 = vmatprep.subr.bf16.mxu0 0
  %4771 = vmatpush1.bf16.msra.mxu0 %v4647
  %4772 = vmatprep.subr.bf16.mxu0 0
  %4773 = vmatpush1.bf16.msra.mxu0 %v4648
  %4774 = vmatprep.subr.bf16.mxu0 0
  %4775 = vmatpush1.bf16.msra.mxu0 %v4649
  %4776 = vmatprep.subr.bf16.mxu0 0
  %4777 = vmatpush1.bf16.msra.mxu0 %v4650
  %4778 = vmatprep.subr.bf16.mxu0 0
  %4779 = vmatpush1.bf16.msra.mxu0 %v4651
  %4780 = vmatprep.subr.bf16.mxu0 0
  %4781 = vmatpush1.bf16.msra.mxu0 %v4652
  %4782 = vmatprep.subr.bf16.mxu0 0
  %4783 = vmatpush1.bf16.msra.mxu0 %v4653
  %4784 = vmatprep.subr.bf16.mxu0 0
  %4785 = vmatpush1.bf16.msra.mxu0 %v4654
  %4786 = vmatprep.subr.bf16.mxu0 0
  %4787 = vmatpush1.bf16.msra.mxu0 %v4655
  %4788 = vmatprep.subr.bf16.mxu0 0
  %4789 = vmatpush1.bf16.msra.mxu0 %v4656
  %4790 = vmatprep.subr.bf16.mxu0 0
  %4791 = vmatpush1.bf16.msra.mxu0 %v4657
  %4792 = vmatprep.subr.bf16.mxu0 0
  %4793 = vmatpush1.bf16.msra.mxu0 %v4658
  %4794 = vmatprep.subr.bf16.mxu0 0
  %4795 = vmatpush1.bf16.msra.mxu0 %v4659
  %4796 = vmatprep.mubr.bf16.mxu0 %v4330
  %4797 = vmatmul.mubr.bf16.gmra.mrb[0].mxu0 %v4329
  %v4798 = vpop.f32.mrb[0].mxu0
  %v4799 = vadd.f32 %v4759, %v4798
  %v4800 = vpop.f32.mrb[0].mxu0
  %v4801 = vpop.f32.mrb[0].mxu0
  %v4802 = vpop.f32.mrb[0].mxu0
  %4803 = vdwg.mxu0
  %4804 = vmatprep.subr.bf16.mxu0 0
  %4805 = vmatpush1.bf16.msra.mxu0 %v4660
  %4806 = vmatprep.subr.bf16.mxu0 0
  %4807 = vmatpush1.bf16.msra.mxu0 %v4661
  %4808 = vmatprep.subr.bf16.mxu0 0
  %4809 = vmatpush1.bf16.msra.mxu0 %v4662
  %4810 = vmatprep.subr.bf16.mxu0 0
  %4811 = vmatpush1.bf16.msra.mxu0 %v4663
  %4812 = vmatprep.subr.bf16.mxu0 0
  %4813 = vmatpush1.bf16.msra.mxu0 %v4664
  %4814 = vmatprep.subr.bf16.mxu0 0
  %4815 = vmatpush1.bf16.msra.mxu0 %v4665
  %4816 = vmatprep.subr.bf16.mxu0 0
  %4817 = vmatpush1.bf16.msra.mxu0 %v4666
  %4818 = vmatprep.subr.bf16.mxu0 0
  %4819 = vmatpush1.bf16.msra.mxu0 %v4667
  %4820 = vmatprep.subr.bf16.mxu0 0
  %4821 = vmatpush1.bf16.msra.mxu0 %v4668
  %4822 = vmatprep.subr.bf16.mxu0 0
  %4823 = vmatpush1.bf16.msra.mxu0 %v4669
  %4824 = vmatprep.subr.bf16.mxu0 0
  %4825 = vmatpush1.bf16.msra.mxu0 %v4670
  %4826 = vmatprep.subr.bf16.mxu0 0
  %4827 = vmatpush1.bf16.msra.mxu0 %v4671
  %4828 = vmatprep.subr.bf16.mxu0 0
  %4829 = vmatpush1.bf16.msra.mxu0 %v4672
  %4830 = vmatprep.subr.bf16.mxu0 0
  %4831 = vmatpush1.bf16.msra.mxu0 %v4673
  %4832 = vmatprep.subr.bf16.mxu0 0
  %4833 = vmatpush1.bf16.msra.mxu0 %v4674
  %4834 = vmatprep.subr.bf16.mxu0 0
  %4835 = vmatpush1.bf16.msra.mxu0 %v4675
  %4836 = vmatprep.mubr.bf16.mxu0 %v4332
  %4837 = vmatmul.mubr.bf16.gmra.mrb[0].mxu0 %v4331
  %v4838 = vpop.f32.mrb[0].mxu0
  %v4839 = vadd.f32 %v4799, %v4838
  %v4840 = vpop.f32.mrb[0].mxu0
  %v4841 = vpop.f32.mrb[0].mxu0
  %v4842 = vpop.f32.mrb[0].mxu0
  %4843 = vdwg.mxu0
  %4844 = vst [vmem:[%s7] sm:$0xff] %v4839
  // Predicated region
  $region30: #{discriminator_forward.1} parent=0 // pred_check
    _
  $region31: #{discriminator_forward.1} parent=0 // pred_check_branch
    %4846 = sbr.rel (0) target = $region33
  $region32: #{discriminator_forward.1} parent=0 // pred_region
    _
  $region33: #{discriminator_forward.1} parent=0 // pred_fallthru
    _
  // Predicated region
  $region34: #{discriminator_forward.1} parent=0 // pred_check
    _
  $region35: #{discriminator_forward.1} parent=0 // pred_check_branch
    %4848 = sbr.rel (0) target = $region37
  $region36: #{discriminator_forward.1} parent=0 // pred_region
    _
  $region37: #{discriminator_forward.1} parent=0 // pred_fallthru
    _

</llo_original>
